<compile_context>
chip_gen: v6e
topology: v6e:2x2x1
jax: 0.10.0
libtpu: 0.0.40
codegen_flags: <defaults>
</compile_context>

<pallas_src>
import jax
import jax.numpy as jnp
from jax.experimental import pallas as pl
from jax.experimental.pallas import tpu as pltpu

C_IN = 1024
C_MID = 512
C_OUT = 32
KSIZE = 3
NEG_SLOPE = 0.01     # nn.LeakyReLU() default
NORM_EPS = 1e-12     # F.normalize default


def embedding_kernel(x_ref, w1_ref, b1_ref, w2_ref, b2_ref, out_ref):
    """One grid step = B_TILE whole batch elements (length axis untiled).

    x_ref  : (B, L, C_IN)       bf16  channels-last input rows
    w1_ref : (3, C_IN, C_MID)   bf16  conv1 weights, tap-major, (in, out) per tap
    b1_ref : (1, C_MID)         f32
    w2_ref : (3, C_MID, C_OUT)  bf16  conv2 weights, tap-major
    b2_ref : (1, C_OUT)         f32
    out_ref: (B, C_OUT, L)      f32   NCW output (same layout as the PyTorch module)
    """
    B, L, _ = x_ref.shape
    M = B * L
    f32 = jnp.float32

    # Flatten (batch, position) into the matmul M dimension.
    x = x_ref[...].reshape(M, C_IN)                      # bf16 rows

    # Local position of each flattened row inside its batch element, hoisted ONCE and reused by
    # all four shifts (JAX does not CSE broadcast_in_dim).  Correct because each block holds
    # whole batch elements and L is untiled.
    pos = jax.lax.broadcasted_iota(jnp.int32, (M, 1), 0) % L
    mask_first = pos == 0
    mask_last = pos == (L - 1)

    def shift_prev(a):   # out[l] = a[l-1]; zero at l == 0 (conv zero-padding row)
        return jnp.where(mask_first, 0.0, pltpu.roll(a, 1, axis=0))

    def shift_next(a):   # out[l] = a[l+1]; zero at l == L-1 (conv zero-padding row)
        return jnp.where(mask_last, 0.0, pltpu.roll(a, M - 1, axis=0))

    # ---- conv1 (k=3, padding=1): shift the per-tap matmul results, not the wide input ----
    h = jnp.dot(x, w1_ref[1], preferred_element_type=f32)
    h = h + shift_prev(jnp.dot(x, w1_ref[0], preferred_element_type=f32))
    h = h + shift_next(jnp.dot(x, w1_ref[2], preferred_element_type=f32))
    h = h + b1_ref[...]

    # ---- LeakyReLU (single VPU op instead of compare+select) ----
    h = jnp.maximum(h, NEG_SLOPE * h)

    # ---- conv2 (k=3, padding=1): same shift-after-matmul trick, shifts are only 32 wide ----
    hb = h.astype(jnp.bfloat16)
    y = jnp.dot(hb, w2_ref[1], preferred_element_type=f32)
    y = y + shift_prev(jnp.dot(hb, w2_ref[0], preferred_element_type=f32))
    y = y + shift_next(jnp.dot(hb, w2_ref[2], preferred_element_type=f32))
    y = y + b2_ref[...]

    # ---- F.normalize(p=2, dim=channels): y / max(||y||, eps) == y * rsqrt(max(||y||^2, eps^2))
    sumsq = jnp.sum(y * y, axis=-1, keepdims=True)
    y = y * jax.lax.rsqrt(jnp.maximum(sumsq, NORM_EPS * NORM_EPS))

    # ---- single fused (B, L, C_OUT) -> (B, C_OUT, L) transpose + one full-block NCW store ----
    # TODO(synk): for production L < 128 the (C_OUT, L) stores are masked vst.msk; pad L to a
    # multiple of 128 if that store path ever shows up in profiles.
    out_ref[...] = jnp.transpose(y.reshape(B, L, C_OUT), (0, 2, 1)).astype(out_ref.dtype)


def _pick_b_tile(n, l):
    """Largest divisor of n such that:
       * the bf16 input block (b, l, C_IN) stays <= ~4 MiB (double-buffered comfortably),
       * the grid keeps >= 2 steps (v7x has 2 TensorCores; a 1-step grid idles one),
       * growth stops once b*l >= ~1024 rows (enough M to amortize per-step overhead)."""
    target_rows = 1024
    max_block_bytes = 4 << 20
    cap = n // 2 if n >= 2 else 1
    best = 1
    for b in range(1, cap + 1):
        if n % b != 0:
            continue
        if b * l * C_IN * 2 > max_block_bytes:
            break
        best = b
        if b * l >= target_rows:
            break
    return best


def embedding_module(x_ncl, w1_oik, b1, w2_oik, b2):
    """x_ncl: (N, 1024, L) f32  ->  (N, 32, L) f32 (same NCW layout as the PyTorch module)."""
    N, cin, L = x_ncl.shape
    assert cin == C_IN

    # Channels-last rows for the tap matmuls; the bf16 cast is fused into this single pass so
    # the kernel's input DMA bytes are halved.  Conv padding is handled in-kernel (rolls+masks).
    x_nlc = jnp.transpose(x_ncl, (0, 2, 1)).astype(jnp.bfloat16)              # (N, L, C_IN)

    # torch Conv1d weights (O, I, K) -> tap-major (K, I, O), bf16 (MXU-native rate).
    w1_kio = jnp.transpose(w1_oik, (2, 1, 0)).astype(jnp.bfloat16)            # (3, C_IN, C_MID)
    w2_kio = jnp.transpose(w2_oik, (2, 1, 0)).astype(jnp.bfloat16)            # (3, C_MID, C_OUT)
    b1_2d = b1.reshape(1, C_MID).astype(jnp.float32)
    b2_2d = b2.reshape(1, C_OUT).astype(jnp.float32)

    B_TILE = _pick_b_tile(N, L)

    inv = pl.Buffered(1)   # grid-invariant operands: single-buffered (no pointless double buffer)

    out = pl.pallas_call(
        embedding_kernel,
        out_shape=jax.ShapeDtypeStruct((N, C_OUT, L), jnp.float32),
        grid_spec=pltpu.PrefetchScalarGridSpec(
            num_scalar_prefetch=0,
            grid=(N // B_TILE,),
            in_specs=[
                pl.BlockSpec((B_TILE, L, C_IN), lambda n: (n, 0, 0)),
                pl.BlockSpec((KSIZE, C_IN, C_MID), lambda n: (0, 0, 0), pipeline_mode=inv),
                pl.BlockSpec((1, C_MID), lambda n: (0, 0), pipeline_mode=inv),
                pl.BlockSpec((KSIZE, C_MID, C_OUT), lambda n: (0, 0, 0), pipeline_mode=inv),
                pl.BlockSpec((1, C_OUT), lambda n: (0, 0), pipeline_mode=inv),
            ],
            out_specs=pl.BlockSpec((B_TILE, C_OUT, L), lambda n: (n, 0, 0)),
        ),
        compiler_params=pltpu.CompilerParams(
            dimension_semantics=("parallel",),
            vmem_limit_bytes=48 * 1024 * 1024,   # stays within v7x's 64 MiB physical VMEM
        ),
    )(x_nlc, w1_kio, b1_2d, w2_kio, b2_2d)

    return out


def reference_forward(x_ncl, w1_oik, b1, w2_oik, b2):
    """Pure-JAX f32 reference using lax.conv (NCW / OIW), mirroring PyTorch semantics."""
    dn = ("NCH", "OIH", "NCH")
    h = jax.lax.conv_general_dilated(x_ncl, w1_oik, window_strides=(1,),
                                     padding=((1, 1),), dimension_numbers=dn)
    h = h + b1[None, :, None]
    h = jnp.where(h >= 0, h, NEG_SLOPE * h)
    y = jax.lax.conv_general_dilated(h, w2_oik, window_strides=(1,),
                                     padding=((1, 1),), dimension_numbers=dn)
    y = y + b2[None, :, None]
    norm = jnp.sqrt(jnp.sum(y * y, axis=1, keepdims=True))
    return y / jnp.maximum(norm, NORM_EPS)


if __name__ == "__main__":
    key = jax.random.PRNGKey(0)
    k_x, k_w1, k_b1, k_w2, k_b2 = jax.random.split(key, 5)

    N, L = 2, 16
    x = jax.random.normal(k_x, (N, C_IN, L), dtype=jnp.float32)

    # PyTorch Conv1d weight layout: (out_channels, in_channels, kernel_size).
    w1 = jax.random.normal(k_w1, (C_MID, C_IN, KSIZE), dtype=jnp.float32) * 0.02
    b1 = jax.random.normal(k_b1, (C_MID,), dtype=jnp.float32) * 0.02
    w2 = jax.random.normal(k_w2, (C_OUT, C_MID, KSIZE), dtype=jnp.float32) * 0.02
    b2 = jax.random.normal(k_b2, (C_OUT,), dtype=jnp.float32) * 0.02

    out = jax.block_until_ready(embedding_module(x, w1, b1, w2, b2))
    ref = reference_forward(x, w1, b1, w2, b2)

    assert out.shape == (N, C_OUT, L), out.shape
    err = float(jnp.max(jnp.abs(out - ref)))
    # bf16 MXU operands with f32 accumulation: expect ~1e-3..1e-2 max-abs on unit-norm outputs.
    assert err < 3e-2, err

    print("KERNEL_OK")
</pallas_src>

<mosaic_0001>
module attributes {stable_mosaic.version = 11 : i64} {
  func.func @embedding_kernel(%arg0: i32, %arg1: memref<1x16x1024xbf16, #tpu.memory_space<vmem>>, %arg2: memref<3x1024x512xbf16, #tpu.memory_space<vmem>>, %arg3: memref<1x512xf32, #tpu.memory_space<vmem>>, %arg4: memref<3x512x32xbf16, #tpu.memory_space<vmem>>, %arg5: memref<1x32xf32, #tpu.memory_space<vmem>>, %arg6: memref<1x32x16xf32, #tpu.memory_space<vmem>>) attributes {dimension_semantics = [#tpu.dimension_semantics<parallel>], iteration_bounds = array<i64: 2>, scalar_prefetch = 0 : i64, scratch_operands = 0 : i64, tpu.core_type = #tpu.core_type<tc>, window_params = [{transform_indices = @transform_0, window_bounds = array<i64: 1, 16, 1024>}, {pipeline_mode = #tpu.pipeline_mode<synchronous>, transform_indices = @transform_1, window_bounds = array<i64: 3, 1024, 512>}, {pipeline_mode = #tpu.pipeline_mode<synchronous>, transform_indices = @transform_2, window_bounds = array<i64: 1, 512>}, {pipeline_mode = #tpu.pipeline_mode<synchronous>, transform_indices = @transform_3, window_bounds = array<i64: 3, 512, 32>}, {pipeline_mode = #tpu.pipeline_mode<synchronous>, transform_indices = @transform_4, window_bounds = array<i64: 1, 32>}, {transform_indices = @transform_5, window_bounds = array<i64: 1, 32, 16>}]} {
    %c0 = arith.constant 0 : index
    %c0_0 = arith.constant 0 : index
    %c0_1 = arith.constant 0 : index
    %0 = vector.load %arg1[%c0, %c0_0, %c0_1] : memref<1x16x1024xbf16, #tpu.memory_space<vmem>>, vector<1x16x1024xbf16>
    %1 = vector.shape_cast %0 : vector<1x16x1024xbf16> to vector<16x1024xbf16>
    %2 = tpu.iota {dimensions = array<i32: 0>} : vector<16x1xi32>
    %c16_i32 = arith.constant 16 : i32
    %c0_i32 = arith.constant 0 : i32
    %3 = arith.cmpi eq, %c16_i32, %c0_i32 : i32
    %c1_i32 = arith.constant 1 : i32
    %4 = arith.select %3, %c1_i32, %c16_i32 : i32
    %5 = vector.broadcast %4 : i32 to vector<16x1xi32>
    %6 = arith.remsi %2, %5 : vector<16x1xi32>
    %c0_i32_2 = arith.constant 0 : i32
    %7 = vector.broadcast %c0_i32_2 : i32 to vector<16x1xi32>
    %8 = arith.cmpi ne, %6, %7 : vector<16x1xi32>
    %c0_i32_3 = arith.constant 0 : i32
    %9 = vector.broadcast %c0_i32_3 : i32 to vector<16x1xi32>
    %10 = arith.cmpi slt, %6, %9 : vector<16x1xi32>
    %c0_i32_4 = arith.constant 0 : i32
    %11 = arith.cmpi slt, %4, %c0_i32_4 : i32
    %12 = vector.broadcast %11 : i1 to vector<16x1xi1>
    %13 = vector.broadcast %12 : vector<16x1xi1> to vector<16x1xi1>
    %14 = arith.xori %10, %13 : vector<16x1xi1>
    %15 = arith.andi %14, %8 : vector<16x1xi1>
    %16 = vector.broadcast %4 : i32 to vector<16x1xi32>
    %17 = arith.addi %6, %16 : vector<16x1xi32>
    %18 = arith.select %15, %17, %6 : vector<16x1xi1>, vector<16x1xi32>
    %c0_i32_5 = arith.constant 0 : i32
    %19 = vector.broadcast %c0_i32_5 : i32 to vector<16x1xi32>
    %20 = arith.cmpi eq, %18, %19 : vector<16x1xi32>
    %c15_i32 = arith.constant 15 : i32
    %21 = vector.broadcast %c15_i32 : i32 to vector<16x1xi32>
    %22 = arith.cmpi eq, %18, %21 : vector<16x1xi32>
    %c1 = arith.constant 1 : index
    %c0_6 = arith.constant 0 : index
    %c0_7 = arith.constant 0 : index
    %23 = vector.load %arg2[%c1, %c0_6, %c0_7] : memref<3x1024x512xbf16, #tpu.memory_space<vmem>>, vector<1x1024x512xbf16>
    %24 = vector.shape_cast %23 : vector<1x1024x512xbf16> to vector<1024x512xbf16>
    %cst = arith.constant dense<0.000000e+00> : vector<16x512xf32>
    %25 = tpu.matmul %1, %24, %cst {dimension_numbers = #tpu.dot_dimension_numbers<[1], [0], [0], [1], [0, 0, 1, 1], [], []>} : vector<16x1024xbf16>, vector<1024x512xbf16>, vector<16x512xf32> -> vector<16x512xf32>
    %c0_8 = arith.constant 0 : index
    %c0_9 = arith.constant 0 : index
    %c0_10 = arith.constant 0 : index
    %26 = vector.load %arg2[%c0_8, %c0_9, %c0_10] : memref<3x1024x512xbf16, #tpu.memory_space<vmem>>, vector<1x1024x512xbf16>
    %27 = vector.shape_cast %26 : vector<1x1024x512xbf16> to vector<1024x512xbf16>
    %cst_11 = arith.constant dense<0.000000e+00> : vector<16x512xf32>
    %28 = tpu.matmul %1, %27, %cst_11 {dimension_numbers = #tpu.dot_dimension_numbers<[1], [0], [0], [1], [0, 0, 1, 1], [], []>} : vector<16x1024xbf16>, vector<1024x512xbf16>, vector<16x512xf32> -> vector<16x512xf32>
    %c1_i32_12 = arith.constant 1 : i32
    %29 = tpu.dynamic_rotate %28 by %c1_i32_12 dim 0 : vector<16x512xf32>, i32 -> vector<16x512xf32>
    %cst_13 = arith.constant 0.000000e+00 : f32
    %30 = vector.shape_cast %20 : vector<16x1xi1> to vector<16x1xi1>
    %31 = vector.broadcast %30 : vector<16x1xi1> to vector<16x512xi1>
    %32 = vector.broadcast %cst_13 : f32 to vector<16x512xf32>
    %33 = arith.select %31, %32, %29 : vector<16x512xi1>, vector<16x512xf32>
    %34 = arith.addf %25, %33 : vector<16x512xf32>
    %c2 = arith.constant 2 : index
    %c0_14 = arith.constant 0 : index
    %c0_15 = arith.constant 0 : index
    %35 = vector.load %arg2[%c2, %c0_14, %c0_15] : memref<3x1024x512xbf16, #tpu.memory_space<vmem>>, vector<1x1024x512xbf16>
    %36 = vector.shape_cast %35 : vector<1x1024x512xbf16> to vector<1024x512xbf16>
    %cst_16 = arith.constant dense<0.000000e+00> : vector<16x512xf32>
    %37 = tpu.matmul %1, %36, %cst_16 {dimension_numbers = #tpu.dot_dimension_numbers<[1], [0], [0], [1], [0, 0, 1, 1], [], []>} : vector<16x1024xbf16>, vector<1024x512xbf16>, vector<16x512xf32> -> vector<16x512xf32>
    %c15_i32_17 = arith.constant 15 : i32
    %38 = tpu.dynamic_rotate %37 by %c15_i32_17 dim 0 : vector<16x512xf32>, i32 -> vector<16x512xf32>
    %cst_18 = arith.constant 0.000000e+00 : f32
    %39 = vector.shape_cast %22 : vector<16x1xi1> to vector<16x1xi1>
    %40 = vector.broadcast %39 : vector<16x1xi1> to vector<16x512xi1>
    %41 = vector.broadcast %cst_18 : f32 to vector<16x512xf32>
    %42 = arith.select %40, %41, %38 : vector<16x512xi1>, vector<16x512xf32>
    %43 = arith.addf %34, %42 : vector<16x512xf32>
    %c0_19 = arith.constant 0 : index
    %c0_20 = arith.constant 0 : index
    %44 = vector.load %arg3[%c0_19, %c0_20] : memref<1x512xf32, #tpu.memory_space<vmem>>, vector<1x512xf32>
    %45 = vector.broadcast %44 : vector<1x512xf32> to vector<16x512xf32>
    %46 = arith.addf %43, %45 : vector<16x512xf32>
    %cst_21 = arith.constant 0.00999999977 : f32
    %47 = vector.broadcast %cst_21 : f32 to vector<16x512xf32>
    %48 = arith.mulf %47, %46 : vector<16x512xf32>
    %49 = arith.maximumf %46, %48 : vector<16x512xf32>
    %50 = arith.truncf %49 : vector<16x512xf32> to vector<16x512xbf16>
    %c1_22 = arith.constant 1 : index
    %c0_23 = arith.constant 0 : index
    %c0_24 = arith.constant 0 : index
    %51 = vector.load %arg4[%c1_22, %c0_23, %c0_24] : memref<3x512x32xbf16, #tpu.memory_space<vmem>>, vector<1x512x32xbf16>
    %52 = vector.shape_cast %51 : vector<1x512x32xbf16> to vector<512x32xbf16>
    %cst_25 = arith.constant dense<0.000000e+00> : vector<16x32xf32>
    %53 = tpu.matmul %50, %52, %cst_25 {dimension_numbers = #tpu.dot_dimension_numbers<[1], [0], [0], [1], [0, 0, 1, 1], [], []>} : vector<16x512xbf16>, vector<512x32xbf16>, vector<16x32xf32> -> vector<16x32xf32>
    %c0_26 = arith.constant 0 : index
    %c0_27 = arith.constant 0 : index
    %c0_28 = arith.constant 0 : index
    %54 = vector.load %arg4[%c0_26, %c0_27, %c0_28] : memref<3x512x32xbf16, #tpu.memory_space<vmem>>, vector<1x512x32xbf16>
    %55 = vector.shape_cast %54 : vector<1x512x32xbf16> to vector<512x32xbf16>
    %cst_29 = arith.constant dense<0.000000e+00> : vector<16x32xf32>
    %56 = tpu.matmul %50, %55, %cst_29 {dimension_numbers = #tpu.dot_dimension_numbers<[1], [0], [0], [1], [0, 0, 1, 1], [], []>} : vector<16x512xbf16>, vector<512x32xbf16>, vector<16x32xf32> -> vector<16x32xf32>
    %c1_i32_30 = arith.constant 1 : i32
    %57 = tpu.dynamic_rotate %56 by %c1_i32_30 dim 0 : vector<16x32xf32>, i32 -> vector<16x32xf32>
    %cst_31 = arith.constant 0.000000e+00 : f32
    %58 = vector.shape_cast %20 : vector<16x1xi1> to vector<16x1xi1>
    %59 = vector.broadcast %58 : vector<16x1xi1> to vector<16x32xi1>
    %60 = vector.broadcast %cst_31 : f32 to vector<16x32xf32>
    %61 = arith.select %59, %60, %57 : vector<16x32xi1>, vector<16x32xf32>
    %62 = arith.addf %53, %61 : vector<16x32xf32>
    %c2_32 = arith.constant 2 : index
    %c0_33 = arith.constant 0 : index
    %c0_34 = arith.constant 0 : index
    %63 = vector.load %arg4[%c2_32, %c0_33, %c0_34] : memref<3x512x32xbf16, #tpu.memory_space<vmem>>, vector<1x512x32xbf16>
    %64 = vector.shape_cast %63 : vector<1x512x32xbf16> to vector<512x32xbf16>
    %cst_35 = arith.constant dense<0.000000e+00> : vector<16x32xf32>
    %65 = tpu.matmul %50, %64, %cst_35 {dimension_numbers = #tpu.dot_dimension_numbers<[1], [0], [0], [1], [0, 0, 1, 1], [], []>} : vector<16x512xbf16>, vector<512x32xbf16>, vector<16x32xf32> -> vector<16x32xf32>
    %c15_i32_36 = arith.constant 15 : i32
    %66 = tpu.dynamic_rotate %65 by %c15_i32_36 dim 0 : vector<16x32xf32>, i32 -> vector<16x32xf32>
    %cst_37 = arith.constant 0.000000e+00 : f32
    %67 = vector.shape_cast %22 : vector<16x1xi1> to vector<16x1xi1>
    %68 = vector.broadcast %67 : vector<16x1xi1> to vector<16x32xi1>
    %69 = vector.broadcast %cst_37 : f32 to vector<16x32xf32>
    %70 = arith.select %68, %69, %66 : vector<16x32xi1>, vector<16x32xf32>
    %71 = arith.addf %62, %70 : vector<16x32xf32>
    %c0_38 = arith.constant 0 : index
    %c0_39 = arith.constant 0 : index
    %72 = vector.load %arg5[%c0_38, %c0_39] : memref<1x32xf32, #tpu.memory_space<vmem>>, vector<1x32xf32>
    %73 = vector.broadcast %72 : vector<1x32xf32> to vector<16x32xf32>
    %74 = arith.addf %71, %73 : vector<16x32xf32>
    %75 = arith.mulf %74, %74 : vector<16x32xf32>
    %cst_40 = arith.constant dense<0.000000e+00> : vector<16xf32>
    %76 = vector.multi_reduction <add>, %75, %cst_40 [1] : vector<16x32xf32> to vector<16xf32>
    %77 = vector.shape_cast %76 : vector<16xf32> to vector<16x1xf32>
    %cst_41 = arith.constant 1.000000e-24 : f32
    %78 = vector.broadcast %cst_41 : f32 to vector<16x1xf32>
    %79 = arith.maximumf %77, %78 : vector<16x1xf32>
    %80 = math.rsqrt %79 : vector<16x1xf32>
    %81 = vector.broadcast %80 : vector<16x1xf32> to vector<16x32xf32>
    %82 = arith.mulf %74, %81 : vector<16x32xf32>
    %83 = vector.shape_cast %82 : vector<16x32xf32> to vector<1x16x32xf32>
    %84 = tpu.transpose %83, [0, 2, 1] : vector<1x16x32xf32> -> vector<1x32x16xf32>
    %c0_42 = arith.constant 0 : index
    %c0_43 = arith.constant 0 : index
    %c0_44 = arith.constant 0 : index
    %85 = vector.load %arg6[%c0_42, %c0_43, %c0_44] : memref<1x32x16xf32, #tpu.memory_space<vmem>>, vector<1x32x16xf32>
    tpu.vector_store %arg6[%c0_42, %c0_43, %c0_44], %84 {strides = array<i32>} : memref<1x32x16xf32, #tpu.memory_space<vmem>>, vector<1x32x16xf32>,
    return
  }
  func.func @transform_0(%arg0: i32) -> (i32, i32, i32) {
    %c0_i32 = arith.constant 0 : i32
    %c0_i32_0 = arith.constant 0 : i32
    %c0_i32_1 = arith.constant 0 : i32
    return %arg0, %c0_i32, %c0_i32_0 : i32, i32, i32
  }
  func.func @transform_1(%arg0: i32) -> (i32, i32, i32) {
    %c0_i32 = arith.constant 0 : i32
    %c0_i32_0 = arith.constant 0 : i32
    %c0_i32_1 = arith.constant 0 : i32
    %c0_i32_2 = arith.constant 0 : i32
    return %c0_i32, %c0_i32_0, %c0_i32_1 : i32, i32, i32
  }
  func.func @transform_2(%arg0: i32) -> (i32, i32) {
    %c0_i32 = arith.constant 0 : i32
    %c0_i32_0 = arith.constant 0 : i32
    %c0_i32_1 = arith.constant 0 : i32
    return %c0_i32, %c0_i32_0 : i32, i32
  }
  func.func @transform_3(%arg0: i32) -> (i32, i32, i32) {
    %c0_i32 = arith.constant 0 : i32
    %c0_i32_0 = arith.constant 0 : i32
    %c0_i32_1 = arith.constant 0 : i32
    %c0_i32_2 = arith.constant 0 : i32
    return %c0_i32, %c0_i32_0, %c0_i32_1 : i32, i32, i32
  }
  func.func @transform_4(%arg0: i32) -> (i32, i32) {
    %c0_i32 = arith.constant 0 : i32
    %c0_i32_0 = arith.constant 0 : i32
    %c0_i32_1 = arith.constant 0 : i32
    return %c0_i32, %c0_i32_0 : i32, i32
  }
  func.func @transform_5(%arg0: i32) -> (i32, i32, i32) {
    %c0_i32 = arith.constant 0 : i32
    %c0_i32_0 = arith.constant 0 : i32
    %c0_i32_1 = arith.constant 0 : i32
    return %arg0, %c0_i32, %c0_i32_0 : i32, i32, i32
  }
}

</mosaic_0001>

<llo_original>
// kernel: tpu_custom_call.1
$region0: #{tpu_custom_call.1}
  #allocation0 [shape = 'u32[]', space=smem, size = 0x4, offset = 0x4, fixed_abs, tag = 'smem constant byte address 0x4 - core index']
  #allocation1 [shape = 'u32[144,128]{1,0:T(1,128)}', space=vmem, size = 0x12000, scoped, tag = 'internal scratch']
  %s0 = inlined_call_operand.hbm [shape: bf16[2,16,1024], index: 0, kind: input, shape index: {}]
  %s1 = inlined_call_operand.hbm [shape: bf16[3,1024,512], index: 1, kind: input, shape index: {}]
  %s2 = inlined_call_operand.hbm [shape: f32[1,512], index: 2, kind: input, shape index: {}]
  %s3 = inlined_call_operand.vmem [shape: bf16[3,512,32], index: 3, kind: input, shape index: {}]
  %s4 = inlined_call_operand.hbm [shape: f32[1,32], index: 4, kind: input, shape index: {}]
  %s5 = inlined_call_operand.vmem [shape: f32[2,32,16], index: 5, kind: output, shape index: {}]
  %s6 = sld [smem:[#allocation0]]
  $region69: #{tpu_custom_call.1} parent=0
    _
  %s8 = ssub.s32 1, %s6
  %s9 = scalar_select 0, %s8, %s6
  $region1: #{tpu_custom_call.1} parent=0
    #allocation2 [shape = 'u8[65536]{0}', space=vmem, size = 0x10000, scoped, tag = 'input window, operand 0']
    #allocation3 [shape = 's32[2]{0}', space=sflag, size = 0x8, scoped, tag = 'scoped memory for tpu_custom_call.1']
    #allocation4 [shape = 'u8[3145728]{0}', space=vmem, size = 0x300000, scoped, tag = 'input window, operand 1, single buffered']
    #allocation5 [shape = 's32[1]{0}', space=sflag, size = 0x4, scoped, tag = 'scoped memory for tpu_custom_call.1']
    #allocation6 [shape = 'u8[2048]{0}', space=vmem, size = 0x800, scoped, tag = 'input window, operand 2, single buffered']
    #allocation7 [shape = 'u8[512]{0}', space=vmem, size = 0x400, scoped, tag = 'input window, operand 4, single buffered']
    #allocation8 [shape = 's32[1]{0}', space=sflag, size = 0x4, scoped, tag = 'scoped memory for tpu_custom_call.1']
    %10 = vsyncpa [#allocation3], 0
    %s11 = scalar_lea.sflag [#allocation3], 1
    %12 = vsyncpa %s11, 0
    %13 = vsyncpa [#allocation5], 0
    %14 = vsyncpa [#allocation8], 0
    loop: start=0, step=1, limit=4
    $region2: #{tpu_custom_call.1} parent=1 // loop_pre_header
      _
    $region3: #{tpu_custom_call.1} parent=1 // loop_header
      %s16 = sphi 0, %s20
      %p17 = scmp.ge.s32.totalorder %s16, 4
      %s26 = sphi 0, %s28
      %s29 = sphi 0, %s26
      %s30 = sphi 0, %s29
      %s46 = sphi 0, %s30
      %s50 = sphi 0, %s50
      %s52 = sphi 0, %s50
      %s53 = sphi 0, %s52
      %s67 = sphi 0, %s53
      %s71 = sphi 0, %s71
      %s73 = sphi 0, %s71
      %s74 = sphi 0, %s73
      %s88 = sphi 0, %s74
      %s92 = sphi 0, %s92
      %s94 = sphi 0, %s92
      %s95 = sphi 0, %s94
      %s109 = sphi 0, %s95
      %s113 = sphi 0, %s113
      %s115 = sphi 0, %s113
      %s116 = sphi 0, %s115
      %s130 = sphi 0, %s116
      %s136 = sphi 0, %s138
      %s139 = sphi 0, %s136
      %s140 = sphi 0, %s139
      %s156 = sphi 0, %s140
    $region4: #{tpu_custom_call.1} parent=1 // loop_header_branch
      %19 = sbr.rel (%p17) target = $region8
    $region5: #{tpu_custom_call.1} parent=1 // loop_body
      %s21 = ssub.s32 %s16, 1
      %s22 = ssub.s32 %s16, 2
      %s23 = sadd.s32 %s16, 1
      %s24 = ssub.s32 %s16, %s23
      %p25 = scmp.eq.s32.totalorder %s24, 0
      %s27 = sadd.s32 %s26, 1
      %s28 = scalar_select %p25, %s26, %s27
      %p31 = pneg %p25
      %p32 = scmp.eq.s32.totalorder %s16, 1
      %p33 = por %p31, %p32
      %p34 = scmp.ne.s32.totalorder %s26, %s29
      %p35 = scmp.eq.s32.totalorder %s16, 0
      %p36 = por %p34, %p35
      %p37 = scmp.ne.s32.totalorder %s26, %s29
      %p38 = scmp.eq.s32.totalorder %s21, 1
      %p39 = por %p37, %p38
      %p40 = scmp.ne.s32.totalorder %s29, %s30
      %p41 = scmp.eq.s32.totalorder %s21, 0
      %p42 = por %p40, %p41
      %p43 = scmp.ne.s32.totalorder %s29, %s30
      %p44 = scmp.eq.s32.totalorder %s22, 1
      %p45 = por %p43, %p44
      %p47 = scmp.ne.s32.totalorder %s30, %s46
      %p48 = scmp.eq.s32.totalorder %s22, 0
      %p49 = por %p47, %p48
      %s51 = sadd.s32 %s50, 1
      %p54 = scmp.eq.s32.totalorder %s16, 1
      %p55 = scmp.ne.s32.totalorder %s50, %s52
      %p56 = scmp.eq.s32.totalorder %s16, 0
      %p57 = por %p55, %p56
      %p58 = scmp.ne.s32.totalorder %s50, %s52
      %p59 = scmp.eq.s32.totalorder %s21, 1
      %p60 = por %p58, %p59
      %p61 = scmp.ne.s32.totalorder %s52, %s53
      %p62 = scmp.eq.s32.totalorder %s21, 0
      %p63 = por %p61, %p62
      %p64 = scmp.ne.s32.totalorder %s52, %s53
      %p65 = scmp.eq.s32.totalorder %s22, 1
      %p66 = por %p64, %p65
      %p68 = scmp.ne.s32.totalorder %s53, %s67
      %p69 = scmp.eq.s32.totalorder %s22, 0
      %p70 = por %p68, %p69
      %s72 = sadd.s32 %s71, 1
      %p75 = scmp.eq.s32.totalorder %s16, 1
      %p76 = scmp.ne.s32.totalorder %s71, %s73
      %p77 = scmp.eq.s32.totalorder %s16, 0
      %p78 = por %p76, %p77
      %p79 = scmp.ne.s32.totalorder %s71, %s73
      %p80 = scmp.eq.s32.totalorder %s21, 1
      %p81 = por %p79, %p80
      %p82 = scmp.ne.s32.totalorder %s73, %s74
      %p83 = scmp.eq.s32.totalorder %s21, 0
      %p84 = por %p82, %p83
      %p85 = scmp.ne.s32.totalorder %s73, %s74
      %p86 = scmp.eq.s32.totalorder %s22, 1
      %p87 = por %p85, %p86
      %p89 = scmp.ne.s32.totalorder %s74, %s88
      %p90 = scmp.eq.s32.totalorder %s22, 0
      %p91 = por %p89, %p90
      %s93 = sadd.s32 %s92, 1
      %p96 = scmp.eq.s32.totalorder %s16, 1
      %p97 = scmp.ne.s32.totalorder %s92, %s94
      %p98 = scmp.eq.s32.totalorder %s16, 0
      %p99 = por %p97, %p98
      %p100 = scmp.ne.s32.totalorder %s92, %s94
      %p101 = scmp.eq.s32.totalorder %s21, 1
      %p102 = por %p100, %p101
      %p103 = scmp.ne.s32.totalorder %s94, %s95
      %p104 = scmp.eq.s32.totalorder %s21, 0
      %p105 = por %p103, %p104
      %p106 = scmp.ne.s32.totalorder %s94, %s95
      %p107 = scmp.eq.s32.totalorder %s22, 1
      %p108 = por %p106, %p107
      %p110 = scmp.ne.s32.totalorder %s95, %s109
      %p111 = scmp.eq.s32.totalorder %s22, 0
      %p112 = por %p110, %p111
      %s114 = sadd.s32 %s113, 1
      %p117 = scmp.eq.s32.totalorder %s16, 1
      %p118 = scmp.ne.s32.totalorder %s113, %s115
      %p119 = scmp.eq.s32.totalorder %s16, 0
      %p120 = por %p118, %p119
      %p121 = scmp.ne.s32.totalorder %s113, %s115
      %p122 = scmp.eq.s32.totalorder %s21, 1
      %p123 = por %p121, %p122
      %p124 = scmp.ne.s32.totalorder %s115, %s116
      %p125 = scmp.eq.s32.totalorder %s21, 0
      %p126 = por %p124, %p125
      %p127 = scmp.ne.s32.totalorder %s115, %s116
      %p128 = scmp.eq.s32.totalorder %s22, 1
      %p129 = por %p127, %p128
      %p131 = scmp.ne.s32.totalorder %s116, %s130
      %p132 = scmp.eq.s32.totalorder %s22, 0
      %p133 = por %p131, %p132
      %s134 = ssub.s32 %s16, %s23
      %p135 = scmp.eq.s32.totalorder %s134, 0
      %s137 = sadd.s32 %s136, 1
      %s138 = scalar_select %p135, %s136, %s137
      %p141 = pneg %p135
      %p142 = scmp.eq.s32.totalorder %s16, 1
      %p143 = por %p141, %p142
      %p144 = scmp.ne.s32.totalorder %s136, %s139
      %p145 = scmp.eq.s32.totalorder %s16, 0
      %p146 = por %p144, %p145
      %p147 = scmp.ne.s32.totalorder %s136, %s139
      %p148 = scmp.eq.s32.totalorder %s21, 1
      %p149 = por %p147, %p148
      %p150 = scmp.ne.s32.totalorder %s139, %s140
      %p151 = scmp.eq.s32.totalorder %s21, 0
      %p152 = por %p150, %p151
      %p153 = scmp.ne.s32.totalorder %s139, %s140
      %p154 = scmp.eq.s32.totalorder %s22, 1
      %p155 = por %p153, %p154
      %p157 = scmp.ne.s32.totalorder %s140, %s156
      %p158 = scmp.eq.s32.totalorder %s22, 0
      %p159 = por %p157, %p158
      %p160 = scmp.le.s32.totalorder 1, %s16
      %p161 = scmp.lt.s32.totalorder %s16, 3
      %p162 = pnand %p160, %p161
      %p163 = pneg %p162
      // Predicated region
      $region9: #{tpu_custom_call.1} parent=5 // pred_check
        _
      $region10: #{tpu_custom_call.1} parent=5 // pred_check_branch
        %165 = sbr.rel (%p162) target = $region12
      $region11: #{tpu_custom_call.1} parent=5 // pred_region
        %s166 = ssub.s32 %s16, 1
        // Predicated region
        $region13: #{tpu_custom_call.1} parent=11 // pred_check
          %p167 = pneg %p63
        $region14: #{tpu_custom_call.1} parent=11 // pred_check_branch
          %169 = sbr.rel (%p167) target = $region16
        $region15: #{tpu_custom_call.1} parent=11 // pred_region
          %s171 = ssub.s32 98304, 98304
          %172 = vsyncadd [#allocation5], %s171
          %s173 = sshll.u32 [#allocation4], 4
          %s174 = int_to_ptr.vmem [resolvable:$true] %s173
          %179 = dma.hbm_to_vmem [thread:$0]  %s1, 98304, %s174, [#allocation5], 256, 256, 16
        $region16: #{tpu_custom_call.1} parent=11 // pred_fallthru
          _
        // Predicated region
        $region17: #{tpu_custom_call.1} parent=11 // pred_check
          %p180 = pneg %p84
        $region18: #{tpu_custom_call.1} parent=11 // pred_check_branch
          %182 = sbr.rel (%p180) target = $region20
        $region19: #{tpu_custom_call.1} parent=11 // pred_region
          %s184 = ssub.s32 64, 64
          %185 = vsyncadd [#allocation5], %s184
          %s187 = sshll.u32 [#allocation6], 4
          %s188 = int_to_ptr.vmem [resolvable:$true] %s187
          %190 = dma.hbm_to_vmem [thread:$0]  %s2, 64, %s188, [#allocation5]
        $region20: #{tpu_custom_call.1} parent=11 // pred_fallthru
          _
        // Predicated region
        $region21: #{tpu_custom_call.1} parent=11 // pred_check
          %p191 = pneg %p105
        $region22: #{tpu_custom_call.1} parent=11 // pred_check_branch
          %193 = sbr.rel (%p191) target = $region24
        $region23: #{tpu_custom_call.1} parent=11 // pred_region
          _
        $region24: #{tpu_custom_call.1} parent=11 // pred_fallthru
          _
        // Predicated region
        $region25: #{tpu_custom_call.1} parent=11 // pred_check
          %p194 = pneg %p126
        $region26: #{tpu_custom_call.1} parent=11 // pred_check_branch
          %196 = sbr.rel (%p194) target = $region28
        $region27: #{tpu_custom_call.1} parent=11 // pred_region
          %s198 = ssub.s32 16, 16
          %199 = vsyncadd [#allocation8], %s198
          %s201 = sshll.u32 [#allocation7], 4
          %s202 = int_to_ptr.vmem [resolvable:$true] %s201
          %204 = dma.hbm_to_vmem [thread:$0]  %s4, 16, %s202, [#allocation8]
        $region28: #{tpu_custom_call.1} parent=11 // pred_fallthru
          _
      $region12: #{tpu_custom_call.1} parent=5 // pred_fallthru
        _
      %p205 = scmp.lt.s32.totalorder %s16, 2
      // Predicated region
      $region29: #{tpu_custom_call.1} parent=5 // pred_check
        %p206 = pneg %p205
      $region30: #{tpu_custom_call.1} parent=5 // pred_check_branch
        %208 = sbr.rel (%p206) target = $region32
      $region31: #{tpu_custom_call.1} parent=5 // pred_region
        // Predicated region
        $region33: #{tpu_custom_call.1} parent=31 // pred_check
          %p209 = pneg %p36
        $region34: #{tpu_custom_call.1} parent=31 // pred_check_branch
          %211 = sbr.rel (%p209) target = $region36
        $region35: #{tpu_custom_call.1} parent=31 // pred_region
          %s212 = sand.u32 %s26, 1
          %s213 = scalar_lea.sflag [#allocation3], %s212
          %s214 = sand.u32 %s26, 1
          %s215 = smul.addr %s214, 64
          %s216 = scalar_lea.vmem [#allocation2], %s215
          %s218 = ssub.s32 1024, 1024
          %219 = vsyncadd %s213, %s218
          %s220 = smul.addr %s16, 16
          %s221 = smul.addr %s220, 64
          %s222 = scalar_lea.hbm %s0, %s221
          %s223 = sshll.u32 %s216, 4
          %s224 = int_to_ptr.vmem [resolvable:$true] %s223
          %229 = dma.hbm_to_vmem [thread:$0]  %s222, 1024, %s224, %s213, 512, 512, 32
        $region36: #{tpu_custom_call.1} parent=31 // pred_fallthru
          _
      $region32: #{tpu_custom_call.1} parent=5 // pred_fallthru
        _
      %p230 = scmp.le.s32.totalorder 1, %s16
      %p231 = scmp.lt.s32.totalorder %s16, 3
      %p232 = pnand %p230, %p231
      %p233 = pneg %p232
      // Predicated region
      $region37: #{tpu_custom_call.1} parent=5 // pred_check
        _
      $region38: #{tpu_custom_call.1} parent=5 // pred_check_branch
        %235 = sbr.rel (%p232) target = $region40
      $region39: #{tpu_custom_call.1} parent=5 // pred_region
        %s236 = ssub.s32 %s16, 1
        %s237 = sand.u32 %s29, 1
        %s238 = scalar_lea.sflag [#allocation3], %s237
        %s239 = sand.u32 %s29, 1
        %s240 = smul.addr %s239, 64
        %s241 = scalar_lea.vmem [#allocation2], %s240
        // Predicated region
        $region41: #{tpu_custom_call.1} parent=39 // pred_check
          %p242 = pneg %p42
        $region42: #{tpu_custom_call.1} parent=39 // pred_check_branch
          %244 = sbr.rel (%p242) target = $region44
        $region43: #{tpu_custom_call.1} parent=39 // pred_region
          %245 = dma.done %s238, 1024
        $region44: #{tpu_custom_call.1} parent=39 // pred_fallthru
          _
        // Predicated region
        $region45: #{tpu_custom_call.1} parent=39 // pred_check
          %p246 = pneg %p63
        $region46: #{tpu_custom_call.1} parent=39 // pred_check_branch
          %248 = sbr.rel (%p246) target = $region48
        $region47: #{tpu_custom_call.1} parent=39 // pred_region
          %249 = dma.done [#allocation5], 98304
        $region48: #{tpu_custom_call.1} parent=39 // pred_fallthru
          _
        // Predicated region
        $region49: #{tpu_custom_call.1} parent=39 // pred_check
          %p250 = pneg %p84
        $region50: #{tpu_custom_call.1} parent=39 // pred_check_branch
          %252 = sbr.rel (%p250) target = $region52
        $region51: #{tpu_custom_call.1} parent=39 // pred_region
          %253 = dma.done [#allocation5], 64
        $region52: #{tpu_custom_call.1} parent=39 // pred_fallthru
          _
        // Predicated region
        $region53: #{tpu_custom_call.1} parent=39 // pred_check
          %p254 = pneg %p126
        $region54: #{tpu_custom_call.1} parent=39 // pred_check_branch
          %256 = sbr.rel (%p254) target = $region56
        $region55: #{tpu_custom_call.1} parent=39 // pred_region
          %257 = dma.done [#allocation8], 16
        $region56: #{tpu_custom_call.1} parent=39 // pred_fallthru
          _
        %s258 = sand.u32 %s29, 1
        %s259 = scalar_lea.sflag [#allocation3], %s258
        %s260 = sand.u32 %s29, 1
        %s261 = smul.addr %s260, 64
        %s262 = scalar_lea.vmem [#allocation2], %s261
        %p263 = pneg %p42
        %p264 = pneg %p39
        %p265 = pneg %p63
        %p266 = pneg %p60
        %p267 = pneg %p84
        %p268 = pneg %p81
        %p269 = pneg %p105
        %p270 = pneg %p102
        %p271 = pneg %p126
        %p272 = pneg %p123
        %p273 = pneg %p152
        %p274 = pneg %p149
        %p275 = scmp.lt.s32.totalorder %s21, 1
        %s276 = scalar_select %p275, %s21, 1
        %s277 = smul.addr %s276, 4
        %s278 = smul.addr %s277, 8
        %s279 = scalar_lea.vmem %s5, %s278
        %p280 = scmp.lt.s32.totalorder %s21, 1
        %s281 = scalar_select %p280, %s21, 1
        %s282 = smul.addr %s281, 4
        %s283 = smul.addr %s282, 8
        %s284 = scalar_lea.vmem %s5, %s283
        %v286 = vld [vmem:[%s241] sm:$0xff]
        %v287 = vld [vmem:[%s241 + $0x8] sm:$0xff]
        %v288 = vld [vmem:[%s241 + $0x10] sm:$0xff]
        %v289 = vld [vmem:[%s241 + $0x18] sm:$0xff]
        %v290 = vld [vmem:[%s241 + $0x20] sm:$0xff]
        %v291 = vld [vmem:[%s241 + $0x28] sm:$0xff]
        %v292 = vld [vmem:[%s241 + $0x30] sm:$0xff]
        %v293 = vld [vmem:[%s241 + $0x38] sm:$0xff]
        %v294 = vlaneseq
        %v295 = vshrl.u32 %v294, 7
        %v296 = vadd.s32 %v295, 8
        %vm297 = vcmp.lt.s32.totalorder %v295, 0
        %v298 = vsub.s32 0, %v295
        %v299 = vsel %vm297, %v298, %v295
        %v300 = vshrl.u32 %v299, 4
        %v301 = vand.u32 %v299, 15
        %v302 = vsub.s32 0, %v301
        %v303 = vsel %vm297, %v302, %v301
        %vm304 = vcmp.lt.s32.totalorder %v296, 0
        %v305 = vsub.s32 0, %v296
        %v306 = vsel %vm304, %v305, %v296
        %v307 = vshrl.u32 %v306, 4
        %v308 = vand.u32 %v306, 15
        %v309 = vsub.s32 0, %v308
        %v310 = vsel %vm304, %v309, %v308
        %vm311 = vcmp.ne.s32.totalorder %v303, 0
        %vm312 = vcmp.ne.s32.totalorder %v310, 0
        %vm313 = vcmp.lt.s32.totalorder %v303, 0
        %vm314 = vcmp.lt.s32.totalorder %v310, 0
        %vm315 = vmand %vm313, %vm311
        %vm316 = vmand %vm314, %vm312
        %v317 = vadd.s32 %v303, 16
        %v318 = vadd.s32 %v310, 16
        %v319 = vsel %vm315, %v317, %v303
        %v320 = vsel %vm316, %v318, %v310
        %vm321 = vcmp.eq.s32.totalorder %v319, 0
        %vm322 = vcmp.eq.s32.totalorder %v320, 0
        %vm323 = vcmp.eq.s32.totalorder %v319, 15
        %vm324 = vcmp.eq.s32.totalorder %v320, 15
        %s325 = scalar_lea.vmem [#allocation4], 2048
        %v326 = vld [vmem:[%s325] sm:$0xff]
        %v327 = vld [vmem:[%s325 + $0x8] sm:$0xff]
        %v328 = vld [vmem:[%s325 + $0x10] sm:$0xff]
        %v329 = vld [vmem:[%s325 + $0x18] sm:$0xff]
        %v330 = vld [vmem:[%s325 + $0x20] sm:$0xff]
        %v331 = vld [vmem:[%s325 + $0x28] sm:$0xff]
        %v332 = vld [vmem:[%s325 + $0x30] sm:$0xff]
        %v333 = vld [vmem:[%s325 + $0x38] sm:$0xff]
        %v334 = vld [vmem:[%s325 + $0x40] sm:$0xff]
        %v335 = vld [vmem:[%s325 + $0x48] sm:$0xff]
        %v336 = vld [vmem:[%s325 + $0x50] sm:$0xff]
        %v337 = vld [vmem:[%s325 + $0x58] sm:$0xff]
        %v338 = vld [vmem:[%s325 + $0x60] sm:$0xff]
        %v339 = vld [vmem:[%s325 + $0x68] sm:$0xff]
        %v340 = vld [vmem:[%s325 + $0x70] sm:$0xff]
        %v341 = vld [vmem:[%s325 + $0x78] sm:$0xff]
        %v342 = vld [vmem:[%s325 + $0x80] sm:$0xff]
        %v343 = vld [vmem:[%s325 + $0x88] sm:$0xff]
        %v344 = vld [vmem:[%s325 + $0x90] sm:$0xff]
        %v345 = vld [vmem:[%s325 + $0x98] sm:$0xff]
        %v346 = vld [vmem:[%s325 + $0xa0] sm:$0xff]
        %v347 = vld [vmem:[%s325 + $0xa8] sm:$0xff]
        %v348 = vld [vmem:[%s325 + $0xb0] sm:$0xff]
        %v349 = vld [vmem:[%s325 + $0xb8] sm:$0xff]
        %v350 = vld [vmem:[%s325 + $0xc0] sm:$0xff]
        %v351 = vld [vmem:[%s325 + $0xc8] sm:$0xff]
        %v352 = vld [vmem:[%s325 + $0xd0] sm:$0xff]
        %v353 = vld [vmem:[%s325 + $0xd8] sm:$0xff]
        %v354 = vld [vmem:[%s325 + $0xe0] sm:$0xff]
        %v355 = vld [vmem:[%s325 + $0xe8] sm:$0xff]
        %v356 = vld [vmem:[%s325 + $0xf0] sm:$0xff]
        %v357 = vld [vmem:[%s325 + $0xf8] sm:$0xff]
        %v358 = vld [vmem:[%s325 + $0x100] sm:$0xff]
        %v359 = vld [vmem:[%s325 + $0x108] sm:$0xff]
        %v360 = vld [vmem:[%s325 + $0x110] sm:$0xff]
        %v361 = vld [vmem:[%s325 + $0x118] sm:$0xff]
        %v362 = vld [vmem:[%s325 + $0x120] sm:$0xff]
        %v363 = vld [vmem:[%s325 + $0x128] sm:$0xff]
        %v364 = vld [vmem:[%s325 + $0x130] sm:$0xff]
        %v365 = vld [vmem:[%s325 + $0x138] sm:$0xff]
        %v366 = vld [vmem:[%s325 + $0x140] sm:$0xff]
        %v367 = vld [vmem:[%s325 + $0x148] sm:$0xff]
        %v368 = vld [vmem:[%s325 + $0x150] sm:$0xff]
        %v369 = vld [vmem:[%s325 + $0x158] sm:$0xff]
        %v370 = vld [vmem:[%s325 + $0x160] sm:$0xff]
        %v371 = vld [vmem:[%s325 + $0x168] sm:$0xff]
        %v372 = vld [vmem:[%s325 + $0x170] sm:$0xff]
        %v373 = vld [vmem:[%s325 + $0x178] sm:$0xff]
        %v374 = vld [vmem:[%s325 + $0x180] sm:$0xff]
        %v375 = vld [vmem:[%s325 + $0x188] sm:$0xff]
        %v376 = vld [vmem:[%s325 + $0x190] sm:$0xff]
        %v377 = vld [vmem:[%s325 + $0x198] sm:$0xff]
        %v378 = vld [vmem:[%s325 + $0x1a0] sm:$0xff]
        %v379 = vld [vmem:[%s325 + $0x1a8] sm:$0xff]
        %v380 = vld [vmem:[%s325 + $0x1b0] sm:$0xff]
        %v381 = vld [vmem:[%s325 + $0x1b8] sm:$0xff]
        %v382 = vld [vmem:[%s325 + $0x1c0] sm:$0xff]
        %v383 = vld [vmem:[%s325 + $0x1c8] sm:$0xff]
        %v384 = vld [vmem:[%s325 + $0x1d0] sm:$0xff]
        %v385 = vld [vmem:[%s325 + $0x1d8] sm:$0xff]
        %v386 = vld [vmem:[%s325 + $0x1e0] sm:$0xff]
        %v387 = vld [vmem:[%s325 + $0x1e8] sm:$0xff]
        %v388 = vld [vmem:[%s325 + $0x1f0] sm:$0xff]
        %v389 = vld [vmem:[%s325 + $0x1f8] sm:$0xff]
        %v390 = vld [vmem:[%s325 + $0x200] sm:$0xff]
        %v391 = vld [vmem:[%s325 + $0x208] sm:$0xff]
        %v392 = vld [vmem:[%s325 + $0x210] sm:$0xff]
        %v393 = vld [vmem:[%s325 + $0x218] sm:$0xff]
        %v394 = vld [vmem:[%s325 + $0x220] sm:$0xff]
        %v395 = vld [vmem:[%s325 + $0x228] sm:$0xff]
        %v396 = vld [vmem:[%s325 + $0x230] sm:$0xff]
        %v397 = vld [vmem:[%s325 + $0x238] sm:$0xff]
        %v398 = vld [vmem:[%s325 + $0x240] sm:$0xff]
        %v399 = vld [vmem:[%s325 + $0x248] sm:$0xff]
        %v400 = vld [vmem:[%s325 + $0x250] sm:$0xff]
        %v401 = vld [vmem:[%s325 + $0x258] sm:$0xff]
        %v402 = vld [vmem:[%s325 + $0x260] sm:$0xff]
        %v403 = vld [vmem:[%s325 + $0x268] sm:$0xff]
        %v404 = vld [vmem:[%s325 + $0x270] sm:$0xff]
        %v405 = vld [vmem:[%s325 + $0x278] sm:$0xff]
        %v406 = vld [vmem:[%s325 + $0x280] sm:$0xff]
        %v407 = vld [vmem:[%s325 + $0x288] sm:$0xff]
        %v408 = vld [vmem:[%s325 + $0x290] sm:$0xff]
        %v409 = vld [vmem:[%s325 + $0x298] sm:$0xff]
        %v410 = vld [vmem:[%s325 + $0x2a0] sm:$0xff]
        %v411 = vld [vmem:[%s325 + $0x2a8] sm:$0xff]
        %v412 = vld [vmem:[%s325 + $0x2b0] sm:$0xff]
        %v413 = vld [vmem:[%s325 + $0x2b8] sm:$0xff]
        %v414 = vld [vmem:[%s325 + $0x2c0] sm:$0xff]
        %v415 = vld [vmem:[%s325 + $0x2c8] sm:$0xff]
        %v416 = vld [vmem:[%s325 + $0x2d0] sm:$0xff]
        %v417 = vld [vmem:[%s325 + $0x2d8] sm:$0xff]
        %v418 = vld [vmem:[%s325 + $0x2e0] sm:$0xff]
        %v419 = vld [vmem:[%s325 + $0x2e8] sm:$0xff]
        %v420 = vld [vmem:[%s325 + $0x2f0] sm:$0xff]
        %v421 = vld [vmem:[%s325 + $0x2f8] sm:$0xff]
        %v422 = vld [vmem:[%s325 + $0x300] sm:$0xff]
        %v423 = vld [vmem:[%s325 + $0x308] sm:$0xff]
        %v424 = vld [vmem:[%s325 + $0x310] sm:$0xff]
        %v425 = vld [vmem:[%s325 + $0x318] sm:$0xff]
        %v426 = vld [vmem:[%s325 + $0x320] sm:$0xff]
        %v427 = vld [vmem:[%s325 + $0x328] sm:$0xff]
        %v428 = vld [vmem:[%s325 + $0x330] sm:$0xff]
        %v429 = vld [vmem:[%s325 + $0x338] sm:$0xff]
        %v430 = vld [vmem:[%s325 + $0x340] sm:$0xff]
        %v431 = vld [vmem:[%s325 + $0x348] sm:$0xff]
        %v432 = vld [vmem:[%s325 + $0x350] sm:$0xff]
        %v433 = vld [vmem:[%s325 + $0x358] sm:$0xff]
        %v434 = vld [vmem:[%s325 + $0x360] sm:$0xff]
        %v435 = vld [vmem:[%s325 + $0x368] sm:$0xff]
        %v436 = vld [vmem:[%s325 + $0x370] sm:$0xff]
        %v437 = vld [vmem:[%s325 + $0x378] sm:$0xff]
        %v438 = vld [vmem:[%s325 + $0x380] sm:$0xff]
        %v439 = vld [vmem:[%s325 + $0x388] sm:$0xff]
        %v440 = vld [vmem:[%s325 + $0x390] sm:$0xff]
        %v441 = vld [vmem:[%s325 + $0x398] sm:$0xff]
        %v442 = vld [vmem:[%s325 + $0x3a0] sm:$0xff]
        %v443 = vld [vmem:[%s325 + $0x3a8] sm:$0xff]
        %v444 = vld [vmem:[%s325 + $0x3b0] sm:$0xff]
        %v445 = vld [vmem:[%s325 + $0x3b8] sm:$0xff]
        %v446 = vld [vmem:[%s325 + $0x3c0] sm:$0xff]
        %v447 = vld [vmem:[%s325 + $0x3c8] sm:$0xff]
        %v448 = vld [vmem:[%s325 + $0x3d0] sm:$0xff]
        %v449 = vld [vmem:[%s325 + $0x3d8] sm:$0xff]
        %v450 = vld [vmem:[%s325 + $0x3e0] sm:$0xff]
        %v451 = vld [vmem:[%s325 + $0x3e8] sm:$0xff]
        %v452 = vld [vmem:[%s325 + $0x3f0] sm:$0xff]
        %v453 = vld [vmem:[%s325 + $0x3f8] sm:$0xff]
        %v454 = vld [vmem:[%s325 + $0x400] sm:$0xff]
        %v455 = vld [vmem:[%s325 + $0x408] sm:$0xff]
        %v456 = vld [vmem:[%s325 + $0x410] sm:$0xff]
        %v457 = vld [vmem:[%s325 + $0x418] sm:$0xff]
        %v458 = vld [vmem:[%s325 + $0x420] sm:$0xff]
        %v459 = vld [vmem:[%s325 + $0x428] sm:$0xff]
        %v460 = vld [vmem:[%s325 + $0x430] sm:$0xff]
        %v461 = vld [vmem:[%s325 + $0x438] sm:$0xff]
        %v462 = vld [vmem:[%s325 + $0x440] sm:$0xff]
        %v463 = vld [vmem:[%s325 + $0x448] sm:$0xff]
        %v464 = vld [vmem:[%s325 + $0x450] sm:$0xff]
        %v465 = vld [vmem:[%s325 + $0x458] sm:$0xff]
        %v466 = vld [vmem:[%s325 + $0x460] sm:$0xff]
        %v467 = vld [vmem:[%s325 + $0x468] sm:$0xff]
        %v468 = vld [vmem:[%s325 + $0x470] sm:$0xff]
        %v469 = vld [vmem:[%s325 + $0x478] sm:$0xff]
        %v470 = vld [vmem:[%s325 + $0x480] sm:$0xff]
        %v471 = vld [vmem:[%s325 + $0x488] sm:$0xff]
        %v472 = vld [vmem:[%s325 + $0x490] sm:$0xff]
        %v473 = vld [vmem:[%s325 + $0x498] sm:$0xff]
        %v474 = vld [vmem:[%s325 + $0x4a0] sm:$0xff]
        %v475 = vld [vmem:[%s325 + $0x4a8] sm:$0xff]
        %v476 = vld [vmem:[%s325 + $0x4b0] sm:$0xff]
        %v477 = vld [vmem:[%s325 + $0x4b8] sm:$0xff]
        %v478 = vld [vmem:[%s325 + $0x4c0] sm:$0xff]
        %v479 = vld [vmem:[%s325 + $0x4c8] sm:$0xff]
        %v480 = vld [vmem:[%s325 + $0x4d0] sm:$0xff]
        %v481 = vld [vmem:[%s325 + $0x4d8] sm:$0xff]
        %v482 = vld [vmem:[%s325 + $0x4e0] sm:$0xff]
        %v483 = vld [vmem:[%s325 + $0x4e8] sm:$0xff]
        %v484 = vld [vmem:[%s325 + $0x4f0] sm:$0xff]
        %v485 = vld [vmem:[%s325 + $0x4f8] sm:$0xff]
        %v486 = vld [vmem:[%s325 + $0x500] sm:$0xff]
        %v487 = vld [vmem:[%s325 + $0x508] sm:$0xff]
        %v488 = vld [vmem:[%s325 + $0x510] sm:$0xff]
        %v489 = vld [vmem:[%s325 + $0x518] sm:$0xff]
        %v490 = vld [vmem:[%s325 + $0x520] sm:$0xff]
        %v491 = vld [vmem:[%s325 + $0x528] sm:$0xff]
        %v492 = vld [vmem:[%s325 + $0x530] sm:$0xff]
        %v493 = vld [vmem:[%s325 + $0x538] sm:$0xff]
        %v494 = vld [vmem:[%s325 + $0x540] sm:$0xff]
        %v495 = vld [vmem:[%s325 + $0x548] sm:$0xff]
        %v496 = vld [vmem:[%s325 + $0x550] sm:$0xff]
        %v497 = vld [vmem:[%s325 + $0x558] sm:$0xff]
        %v498 = vld [vmem:[%s325 + $0x560] sm:$0xff]
        %v499 = vld [vmem:[%s325 + $0x568] sm:$0xff]
        %v500 = vld [vmem:[%s325 + $0x570] sm:$0xff]
        %v501 = vld [vmem:[%s325 + $0x578] sm:$0xff]
        %v502 = vld [vmem:[%s325 + $0x580] sm:$0xff]
        %v503 = vld [vmem:[%s325 + $0x588] sm:$0xff]
        %v504 = vld [vmem:[%s325 + $0x590] sm:$0xff]
        %v505 = vld [vmem:[%s325 + $0x598] sm:$0xff]
        %v506 = vld [vmem:[%s325 + $0x5a0] sm:$0xff]
        %v507 = vld [vmem:[%s325 + $0x5a8] sm:$0xff]
        %v508 = vld [vmem:[%s325 + $0x5b0] sm:$0xff]
        %v509 = vld [vmem:[%s325 + $0x5b8] sm:$0xff]
        %v510 = vld [vmem:[%s325 + $0x5c0] sm:$0xff]
        %v511 = vld [vmem:[%s325 + $0x5c8] sm:$0xff]
        %v512 = vld [vmem:[%s325 + $0x5d0] sm:$0xff]
        %v513 = vld [vmem:[%s325 + $0x5d8] sm:$0xff]
        %v514 = vld [vmem:[%s325 + $0x5e0] sm:$0xff]
        %v515 = vld [vmem:[%s325 + $0x5e8] sm:$0xff]
        %v516 = vld [vmem:[%s325 + $0x5f0] sm:$0xff]
        %v517 = vld [vmem:[%s325 + $0x5f8] sm:$0xff]
        %v518 = vld [vmem:[%s325 + $0x600] sm:$0xff]
        %v519 = vld [vmem:[%s325 + $0x608] sm:$0xff]
        %v520 = vld [vmem:[%s325 + $0x610] sm:$0xff]
        %v521 = vld [vmem:[%s325 + $0x618] sm:$0xff]
        %v522 = vld [vmem:[%s325 + $0x620] sm:$0xff]
        %v523 = vld [vmem:[%s325 + $0x628] sm:$0xff]
        %v524 = vld [vmem:[%s325 + $0x630] sm:$0xff]
        %v525 = vld [vmem:[%s325 + $0x638] sm:$0xff]
        %v526 = vld [vmem:[%s325 + $0x640] sm:$0xff]
        %v527 = vld [vmem:[%s325 + $0x648] sm:$0xff]
        %v528 = vld [vmem:[%s325 + $0x650] sm:$0xff]
        %v529 = vld [vmem:[%s325 + $0x658] sm:$0xff]
        %v530 = vld [vmem:[%s325 + $0x660] sm:$0xff]
        %v531 = vld [vmem:[%s325 + $0x668] sm:$0xff]
        %v532 = vld [vmem:[%s325 + $0x670] sm:$0xff]
        %v533 = vld [vmem:[%s325 + $0x678] sm:$0xff]
        %v534 = vld [vmem:[%s325 + $0x680] sm:$0xff]
        %v535 = vld [vmem:[%s325 + $0x688] sm:$0xff]
        %v536 = vld [vmem:[%s325 + $0x690] sm:$0xff]
        %v537 = vld [vmem:[%s325 + $0x698] sm:$0xff]
        %v538 = vld [vmem:[%s325 + $0x6a0] sm:$0xff]
        %v539 = vld [vmem:[%s325 + $0x6a8] sm:$0xff]
        %v540 = vld [vmem:[%s325 + $0x6b0] sm:$0xff]
        %v541 = vld [vmem:[%s325 + $0x6b8] sm:$0xff]
        %v542 = vld [vmem:[%s325 + $0x6c0] sm:$0xff]
        %v543 = vld [vmem:[%s325 + $0x6c8] sm:$0xff]
        %v544 = vld [vmem:[%s325 + $0x6d0] sm:$0xff]
        %v545 = vld [vmem:[%s325 + $0x6d8] sm:$0xff]
        %v546 = vld [vmem:[%s325 + $0x6e0] sm:$0xff]
        %v547 = vld [vmem:[%s325 + $0x6e8] sm:$0xff]
        %v548 = vld [vmem:[%s325 + $0x6f0] sm:$0xff]
        %v549 = vld [vmem:[%s325 + $0x6f8] sm:$0xff]
        %v550 = vld [vmem:[%s325 + $0x700] sm:$0xff]
        %v551 = vld [vmem:[%s325 + $0x708] sm:$0xff]
        %v552 = vld [vmem:[%s325 + $0x710] sm:$0xff]
        %v553 = vld [vmem:[%s325 + $0x718] sm:$0xff]
        %v554 = vld [vmem:[%s325 + $0x720] sm:$0xff]
        %v555 = vld [vmem:[%s325 + $0x728] sm:$0xff]
        %v556 = vld [vmem:[%s325 + $0x730] sm:$0xff]
        %v557 = vld [vmem:[%s325 + $0x738] sm:$0xff]
        %v558 = vld [vmem:[%s325 + $0x740] sm:$0xff]
        %v559 = vld [vmem:[%s325 + $0x748] sm:$0xff]
        %v560 = vld [vmem:[%s325 + $0x750] sm:$0xff]
        %v561 = vld [vmem:[%s325 + $0x758] sm:$0xff]
        %v562 = vld [vmem:[%s325 + $0x760] sm:$0xff]
        %v563 = vld [vmem:[%s325 + $0x768] sm:$0xff]
        %v564 = vld [vmem:[%s325 + $0x770] sm:$0xff]
        %v565 = vld [vmem:[%s325 + $0x778] sm:$0xff]
        %v566 = vld [vmem:[%s325 + $0x780] sm:$0xff]
        %v567 = vld [vmem:[%s325 + $0x788] sm:$0xff]
        %v568 = vld [vmem:[%s325 + $0x790] sm:$0xff]
        %v569 = vld [vmem:[%s325 + $0x798] sm:$0xff]
        %v570 = vld [vmem:[%s325 + $0x7a0] sm:$0xff]
        %v571 = vld [vmem:[%s325 + $0x7a8] sm:$0xff]
        %v572 = vld [vmem:[%s325 + $0x7b0] sm:$0xff]
        %v573 = vld [vmem:[%s325 + $0x7b8] sm:$0xff]
        %v574 = vld [vmem:[%s325 + $0x7c0] sm:$0xff]
        %v575 = vld [vmem:[%s325 + $0x7c8] sm:$0xff]
        %v576 = vld [vmem:[%s325 + $0x7d0] sm:$0xff]
        %v577 = vld [vmem:[%s325 + $0x7d8] sm:$0xff]
        %v578 = vld [vmem:[%s325 + $0x7e0] sm:$0xff]
        %v579 = vld [vmem:[%s325 + $0x7e8] sm:$0xff]
        %v580 = vld [vmem:[%s325 + $0x7f0] sm:$0xff]
        %v581 = vld [vmem:[%s325 + $0x7f8] sm:$0xff]
        %v582 = vld [vmem:[#allocation4] sm:$0xff]
        %v583 = vld [vmem:[#allocation4 + $0x8] sm:$0xff]
        %v584 = vld [vmem:[#allocation4 + $0x10] sm:$0xff]
        %v585 = vld [vmem:[#allocation4 + $0x18] sm:$0xff]
        %v586 = vld [vmem:[#allocation4 + $0x20] sm:$0xff]
        %v587 = vld [vmem:[#allocation4 + $0x28] sm:$0xff]
        %v588 = vld [vmem:[#allocation4 + $0x30] sm:$0xff]
        %v589 = vld [vmem:[#allocation4 + $0x38] sm:$0xff]
        %v590 = vld [vmem:[#allocation4 + $0x40] sm:$0xff]
        %v591 = vld [vmem:[#allocation4 + $0x48] sm:$0xff]
        %v592 = vld [vmem:[#allocation4 + $0x50] sm:$0xff]
        %v593 = vld [vmem:[#allocation4 + $0x58] sm:$0xff]
        %v594 = vld [vmem:[#allocation4 + $0x60] sm:$0xff]
        %v595 = vld [vmem:[#allocation4 + $0x68] sm:$0xff]
        %v596 = vld [vmem:[#allocation4 + $0x70] sm:$0xff]
        %v597 = vld [vmem:[#allocation4 + $0x78] sm:$0xff]
        %v598 = vld [vmem:[#allocation4 + $0x80] sm:$0xff]
        %v599 = vld [vmem:[#allocation4 + $0x88] sm:$0xff]
        %v600 = vld [vmem:[#allocation4 + $0x90] sm:$0xff]
        %v601 = vld [vmem:[#allocation4 + $0x98] sm:$0xff]
        %v602 = vld [vmem:[#allocation4 + $0xa0] sm:$0xff]
        %v603 = vld [vmem:[#allocation4 + $0xa8] sm:$0xff]
        %v604 = vld [vmem:[#allocation4 + $0xb0] sm:$0xff]
        %v605 = vld [vmem:[#allocation4 + $0xb8] sm:$0xff]
        %v606 = vld [vmem:[#allocation4 + $0xc0] sm:$0xff]
        %v607 = vld [vmem:[#allocation4 + $0xc8] sm:$0xff]
        %v608 = vld [vmem:[#allocation4 + $0xd0] sm:$0xff]
        %v609 = vld [vmem:[#allocation4 + $0xd8] sm:$0xff]
        %v610 = vld [vmem:[#allocation4 + $0xe0] sm:$0xff]
        %v611 = vld [vmem:[#allocation4 + $0xe8] sm:$0xff]
        %v612 = vld [vmem:[#allocation4 + $0xf0] sm:$0xff]
        %v613 = vld [vmem:[#allocation4 + $0xf8] sm:$0xff]
        %v614 = vld [vmem:[#allocation4 + $0x100] sm:$0xff]
        %v615 = vld [vmem:[#allocation4 + $0x108] sm:$0xff]
        %v616 = vld [vmem:[#allocation4 + $0x110] sm:$0xff]
        %v617 = vld [vmem:[#allocation4 + $0x118] sm:$0xff]
        %v618 = vld [vmem:[#allocation4 + $0x120] sm:$0xff]
        %v619 = vld [vmem:[#allocation4 + $0x128] sm:$0xff]
        %v620 = vld [vmem:[#allocation4 + $0x130] sm:$0xff]
        %v621 = vld [vmem:[#allocation4 + $0x138] sm:$0xff]
        %v622 = vld [vmem:[#allocation4 + $0x140] sm:$0xff]
        %v623 = vld [vmem:[#allocation4 + $0x148] sm:$0xff]
        %v624 = vld [vmem:[#allocation4 + $0x150] sm:$0xff]
        %v625 = vld [vmem:[#allocation4 + $0x158] sm:$0xff]
        %v626 = vld [vmem:[#allocation4 + $0x160] sm:$0xff]
        %v627 = vld [vmem:[#allocation4 + $0x168] sm:$0xff]
        %v628 = vld [vmem:[#allocation4 + $0x170] sm:$0xff]
        %v629 = vld [vmem:[#allocation4 + $0x178] sm:$0xff]
        %v630 = vld [vmem:[#allocation4 + $0x180] sm:$0xff]
        %v631 = vld [vmem:[#allocation4 + $0x188] sm:$0xff]
        %v632 = vld [vmem:[#allocation4 + $0x190] sm:$0xff]
        %v633 = vld [vmem:[#allocation4 + $0x198] sm:$0xff]
        %v634 = vld [vmem:[#allocation4 + $0x1a0] sm:$0xff]
        %v635 = vld [vmem:[#allocation4 + $0x1a8] sm:$0xff]
        %v636 = vld [vmem:[#allocation4 + $0x1b0] sm:$0xff]
        %v637 = vld [vmem:[#allocation4 + $0x1b8] sm:$0xff]
        %v638 = vld [vmem:[#allocation4 + $0x1c0] sm:$0xff]
        %v639 = vld [vmem:[#allocation4 + $0x1c8] sm:$0xff]
        %v640 = vld [vmem:[#allocation4 + $0x1d0] sm:$0xff]
        %v641 = vld [vmem:[#allocation4 + $0x1d8] sm:$0xff]
        %v642 = vld [vmem:[#allocation4 + $0x1e0] sm:$0xff]
        %v643 = vld [vmem:[#allocation4 + $0x1e8] sm:$0xff]
        %v644 = vld [vmem:[#allocation4 + $0x1f0] sm:$0xff]
        %v645 = vld [vmem:[#allocation4 + $0x1f8] sm:$0xff]
        %v646 = vld [vmem:[#allocation4 + $0x200] sm:$0xff]
        %v647 = vld [vmem:[#allocation4 + $0x208] sm:$0xff]
        %v648 = vld [vmem:[#allocation4 + $0x210] sm:$0xff]
        %v649 = vld [vmem:[#allocation4 + $0x218] sm:$0xff]
        %v650 = vld [vmem:[#allocation4 + $0x220] sm:$0xff]
        %v651 = vld [vmem:[#allocation4 + $0x228] sm:$0xff]
        %v652 = vld [vmem:[#allocation4 + $0x230] sm:$0xff]
        %v653 = vld [vmem:[#allocation4 + $0x238] sm:$0xff]
        %v654 = vld [vmem:[#allocation4 + $0x240] sm:$0xff]
        %v655 = vld [vmem:[#allocation4 + $0x248] sm:$0xff]
        %v656 = vld [vmem:[#allocation4 + $0x250] sm:$0xff]
        %v657 = vld [vmem:[#allocation4 + $0x258] sm:$0xff]
        %v658 = vld [vmem:[#allocation4 + $0x260] sm:$0xff]
        %v659 = vld [vmem:[#allocation4 + $0x268] sm:$0xff]
        %v660 = vld [vmem:[#allocation4 + $0x270] sm:$0xff]
        %v661 = vld [vmem:[#allocation4 + $0x278] sm:$0xff]
        %v662 = vld [vmem:[#allocation4 + $0x280] sm:$0xff]
        %v663 = vld [vmem:[#allocation4 + $0x288] sm:$0xff]
        %v664 = vld [vmem:[#allocation4 + $0x290] sm:$0xff]
        %v665 = vld [vmem:[#allocation4 + $0x298] sm:$0xff]
        %v666 = vld [vmem:[#allocation4 + $0x2a0] sm:$0xff]
        %v667 = vld [vmem:[#allocation4 + $0x2a8] sm:$0xff]
        %v668 = vld [vmem:[#allocation4 + $0x2b0] sm:$0xff]
        %v669 = vld [vmem:[#allocation4 + $0x2b8] sm:$0xff]
        %v670 = vld [vmem:[#allocation4 + $0x2c0] sm:$0xff]
        %v671 = vld [vmem:[#allocation4 + $0x2c8] sm:$0xff]
        %v672 = vld [vmem:[#allocation4 + $0x2d0] sm:$0xff]
        %v673 = vld [vmem:[#allocation4 + $0x2d8] sm:$0xff]
        %v674 = vld [vmem:[#allocation4 + $0x2e0] sm:$0xff]
        %v675 = vld [vmem:[#allocation4 + $0x2e8] sm:$0xff]
        %v676 = vld [vmem:[#allocation4 + $0x2f0] sm:$0xff]
        %v677 = vld [vmem:[#allocation4 + $0x2f8] sm:$0xff]
        %v678 = vld [vmem:[#allocation4 + $0x300] sm:$0xff]
        %v679 = vld [vmem:[#allocation4 + $0x308] sm:$0xff]
        %v680 = vld [vmem:[#allocation4 + $0x310] sm:$0xff]
        %v681 = vld [vmem:[#allocation4 + $0x318] sm:$0xff]
        %v682 = vld [vmem:[#allocation4 + $0x320] sm:$0xff]
        %v683 = vld [vmem:[#allocation4 + $0x328] sm:$0xff]
        %v684 = vld [vmem:[#allocation4 + $0x330] sm:$0xff]
        %v685 = vld [vmem:[#allocation4 + $0x338] sm:$0xff]
        %v686 = vld [vmem:[#allocation4 + $0x340] sm:$0xff]
        %v687 = vld [vmem:[#allocation4 + $0x348] sm:$0xff]
        %v688 = vld [vmem:[#allocation4 + $0x350] sm:$0xff]
        %v689 = vld [vmem:[#allocation4 + $0x358] sm:$0xff]
        %v690 = vld [vmem:[#allocation4 + $0x360] sm:$0xff]
        %v691 = vld [vmem:[#allocation4 + $0x368] sm:$0xff]
        %v692 = vld [vmem:[#allocation4 + $0x370] sm:$0xff]
        %v693 = vld [vmem:[#allocation4 + $0x378] sm:$0xff]
        %v694 = vld [vmem:[#allocation4 + $0x380] sm:$0xff]
        %v695 = vld [vmem:[#allocation4 + $0x388] sm:$0xff]
        %v696 = vld [vmem:[#allocation4 + $0x390] sm:$0xff]
        %v697 = vld [vmem:[#allocation4 + $0x398] sm:$0xff]
        %v698 = vld [vmem:[#allocation4 + $0x3a0] sm:$0xff]
        %v699 = vld [vmem:[#allocation4 + $0x3a8] sm:$0xff]
        %v700 = vld [vmem:[#allocation4 + $0x3b0] sm:$0xff]
        %v701 = vld [vmem:[#allocation4 + $0x3b8] sm:$0xff]
        %v702 = vld [vmem:[#allocation4 + $0x3c0] sm:$0xff]
        %v703 = vld [vmem:[#allocation4 + $0x3c8] sm:$0xff]
        %v704 = vld [vmem:[#allocation4 + $0x3d0] sm:$0xff]
        %v705 = vld [vmem:[#allocation4 + $0x3d8] sm:$0xff]
        %v706 = vld [vmem:[#allocation4 + $0x3e0] sm:$0xff]
        %v707 = vld [vmem:[#allocation4 + $0x3e8] sm:$0xff]
        %v708 = vld [vmem:[#allocation4 + $0x3f0] sm:$0xff]
        %v709 = vld [vmem:[#allocation4 + $0x3f8] sm:$0xff]
        %v710 = vld [vmem:[#allocation4 + $0x400] sm:$0xff]
        %v711 = vld [vmem:[#allocation4 + $0x408] sm:$0xff]
        %v712 = vld [vmem:[#allocation4 + $0x410] sm:$0xff]
        %v713 = vld [vmem:[#allocation4 + $0x418] sm:$0xff]
        %v714 = vld [vmem:[#allocation4 + $0x420] sm:$0xff]
        %v715 = vld [vmem:[#allocation4 + $0x428] sm:$0xff]
        %v716 = vld [vmem:[#allocation4 + $0x430] sm:$0xff]
        %v717 = vld [vmem:[#allocation4 + $0x438] sm:$0xff]
        %v718 = vld [vmem:[#allocation4 + $0x440] sm:$0xff]
        %v719 = vld [vmem:[#allocation4 + $0x448] sm:$0xff]
        %v720 = vld [vmem:[#allocation4 + $0x450] sm:$0xff]
        %v721 = vld [vmem:[#allocation4 + $0x458] sm:$0xff]
        %v722 = vld [vmem:[#allocation4 + $0x460] sm:$0xff]
        %v723 = vld [vmem:[#allocation4 + $0x468] sm:$0xff]
        %v724 = vld [vmem:[#allocation4 + $0x470] sm:$0xff]
        %v725 = vld [vmem:[#allocation4 + $0x478] sm:$0xff]
        %v726 = vld [vmem:[#allocation4 + $0x480] sm:$0xff]
        %v727 = vld [vmem:[#allocation4 + $0x488] sm:$0xff]
        %v728 = vld [vmem:[#allocation4 + $0x490] sm:$0xff]
        %v729 = vld [vmem:[#allocation4 + $0x498] sm:$0xff]
        %v730 = vld [vmem:[#allocation4 + $0x4a0] sm:$0xff]
        %v731 = vld [vmem:[#allocation4 + $0x4a8] sm:$0xff]
        %v732 = vld [vmem:[#allocation4 + $0x4b0] sm:$0xff]
        %v733 = vld [vmem:[#allocation4 + $0x4b8] sm:$0xff]
        %v734 = vld [vmem:[#allocation4 + $0x4c0] sm:$0xff]
        %v735 = vld [vmem:[#allocation4 + $0x4c8] sm:$0xff]
        %v736 = vld [vmem:[#allocation4 + $0x4d0] sm:$0xff]
        %v737 = vld [vmem:[#allocation4 + $0x4d8] sm:$0xff]
        %v738 = vld [vmem:[#allocation4 + $0x4e0] sm:$0xff]
        %v739 = vld [vmem:[#allocation4 + $0x4e8] sm:$0xff]
        %v740 = vld [vmem:[#allocation4 + $0x4f0] sm:$0xff]
        %v741 = vld [vmem:[#allocation4 + $0x4f8] sm:$0xff]
        %v742 = vld [vmem:[#allocation4 + $0x500] sm:$0xff]
        %v743 = vld [vmem:[#allocation4 + $0x508] sm:$0xff]
        %v744 = vld [vmem:[#allocation4 + $0x510] sm:$0xff]
        %v745 = vld [vmem:[#allocation4 + $0x518] sm:$0xff]
        %v746 = vld [vmem:[#allocation4 + $0x520] sm:$0xff]
        %v747 = vld [vmem:[#allocation4 + $0x528] sm:$0xff]
        %v748 = vld [vmem:[#allocation4 + $0x530] sm:$0xff]
        %v749 = vld [vmem:[#allocation4 + $0x538] sm:$0xff]
        %v750 = vld [vmem:[#allocation4 + $0x540] sm:$0xff]
        %v751 = vld [vmem:[#allocation4 + $0x548] sm:$0xff]
        %v752 = vld [vmem:[#allocation4 + $0x550] sm:$0xff]
        %v753 = vld [vmem:[#allocation4 + $0x558] sm:$0xff]
        %v754 = vld [vmem:[#allocation4 + $0x560] sm:$0xff]
        %v755 = vld [vmem:[#allocation4 + $0x568] sm:$0xff]
        %v756 = vld [vmem:[#allocation4 + $0x570] sm:$0xff]
        %v757 = vld [vmem:[#allocation4 + $0x578] sm:$0xff]
        %v758 = vld [vmem:[#allocation4 + $0x580] sm:$0xff]
        %v759 = vld [vmem:[#allocation4 + $0x588] sm:$0xff]
        %v760 = vld [vmem:[#allocation4 + $0x590] sm:$0xff]
        %v761 = vld [vmem:[#allocation4 + $0x598] sm:$0xff]
        %v762 = vld [vmem:[#allocation4 + $0x5a0] sm:$0xff]
        %v763 = vld [vmem:[#allocation4 + $0x5a8] sm:$0xff]
        %v764 = vld [vmem:[#allocation4 + $0x5b0] sm:$0xff]
        %v765 = vld [vmem:[#allocation4 + $0x5b8] sm:$0xff]
        %v766 = vld [vmem:[#allocation4 + $0x5c0] sm:$0xff]
        %v767 = vld [vmem:[#allocation4 + $0x5c8] sm:$0xff]
        %v768 = vld [vmem:[#allocation4 + $0x5d0] sm:$0xff]
        %v769 = vld [vmem:[#allocation4 + $0x5d8] sm:$0xff]
        %v770 = vld [vmem:[#allocation4 + $0x5e0] sm:$0xff]
        %v771 = vld [vmem:[#allocation4 + $0x5e8] sm:$0xff]
        %v772 = vld [vmem:[#allocation4 + $0x5f0] sm:$0xff]
        %v773 = vld [vmem:[#allocation4 + $0x5f8] sm:$0xff]
        %v774 = vld [vmem:[#allocation4 + $0x600] sm:$0xff]
        %v775 = vld [vmem:[#allocation4 + $0x608] sm:$0xff]
        %v776 = vld [vmem:[#allocation4 + $0x610] sm:$0xff]
        %v777 = vld [vmem:[#allocation4 + $0x618] sm:$0xff]
        %v778 = vld [vmem:[#allocation4 + $0x620] sm:$0xff]
        %v779 = vld [vmem:[#allocation4 + $0x628] sm:$0xff]
        %v780 = vld [vmem:[#allocation4 + $0x630] sm:$0xff]
        %v781 = vld [vmem:[#allocation4 + $0x638] sm:$0xff]
        %v782 = vld [vmem:[#allocation4 + $0x640] sm:$0xff]
        %v783 = vld [vmem:[#allocation4 + $0x648] sm:$0xff]
        %v784 = vld [vmem:[#allocation4 + $0x650] sm:$0xff]
        %v785 = vld [vmem:[#allocation4 + $0x658] sm:$0xff]
        %v786 = vld [vmem:[#allocation4 + $0x660] sm:$0xff]
        %v787 = vld [vmem:[#allocation4 + $0x668] sm:$0xff]
        %v788 = vld [vmem:[#allocation4 + $0x670] sm:$0xff]
        %v789 = vld [vmem:[#allocation4 + $0x678] sm:$0xff]
        %v790 = vld [vmem:[#allocation4 + $0x680] sm:$0xff]
        %v791 = vld [vmem:[#allocation4 + $0x688] sm:$0xff]
        %v792 = vld [vmem:[#allocation4 + $0x690] sm:$0xff]
        %v793 = vld [vmem:[#allocation4 + $0x698] sm:$0xff]
        %v794 = vld [vmem:[#allocation4 + $0x6a0] sm:$0xff]
        %v795 = vld [vmem:[#allocation4 + $0x6a8] sm:$0xff]
        %v796 = vld [vmem:[#allocation4 + $0x6b0] sm:$0xff]
        %v797 = vld [vmem:[#allocation4 + $0x6b8] sm:$0xff]
        %v798 = vld [vmem:[#allocation4 + $0x6c0] sm:$0xff]
        %v799 = vld [vmem:[#allocation4 + $0x6c8] sm:$0xff]
        %v800 = vld [vmem:[#allocation4 + $0x6d0] sm:$0xff]
        %v801 = vld [vmem:[#allocation4 + $0x6d8] sm:$0xff]
        %v802 = vld [vmem:[#allocation4 + $0x6e0] sm:$0xff]
        %v803 = vld [vmem:[#allocation4 + $0x6e8] sm:$0xff]
        %v804 = vld [vmem:[#allocation4 + $0x6f0] sm:$0xff]
        %v805 = vld [vmem:[#allocation4 + $0x6f8] sm:$0xff]
        %v806 = vld [vmem:[#allocation4 + $0x700] sm:$0xff]
        %v807 = vld [vmem:[#allocation4 + $0x708] sm:$0xff]
        %v808 = vld [vmem:[#allocation4 + $0x710] sm:$0xff]
        %v809 = vld [vmem:[#allocation4 + $0x718] sm:$0xff]
        %v810 = vld [vmem:[#allocation4 + $0x720] sm:$0xff]
        %v811 = vld [vmem:[#allocation4 + $0x728] sm:$0xff]
        %v812 = vld [vmem:[#allocation4 + $0x730] sm:$0xff]
        %v813 = vld [vmem:[#allocation4 + $0x738] sm:$0xff]
        %v814 = vld [vmem:[#allocation4 + $0x740] sm:$0xff]
        %v815 = vld [vmem:[#allocation4 + $0x748] sm:$0xff]
        %v816 = vld [vmem:[#allocation4 + $0x750] sm:$0xff]
        %v817 = vld [vmem:[#allocation4 + $0x758] sm:$0xff]
        %v818 = vld [vmem:[#allocation4 + $0x760] sm:$0xff]
        %v819 = vld [vmem:[#allocation4 + $0x768] sm:$0xff]
        %v820 = vld [vmem:[#allocation4 + $0x770] sm:$0xff]
        %v821 = vld [vmem:[#allocation4 + $0x778] sm:$0xff]
        %v822 = vld [vmem:[#allocation4 + $0x780] sm:$0xff]
        %v823 = vld [vmem:[#allocation4 + $0x788] sm:$0xff]
        %v824 = vld [vmem:[#allocation4 + $0x790] sm:$0xff]
        %v825 = vld [vmem:[#allocation4 + $0x798] sm:$0xff]
        %v826 = vld [vmem:[#allocation4 + $0x7a0] sm:$0xff]
        %v827 = vld [vmem:[#allocation4 + $0x7a8] sm:$0xff]
        %v828 = vld [vmem:[#allocation4 + $0x7b0] sm:$0xff]
        %v829 = vld [vmem:[#allocation4 + $0x7b8] sm:$0xff]
        %v830 = vld [vmem:[#allocation4 + $0x7c0] sm:$0xff]
        %v831 = vld [vmem:[#allocation4 + $0x7c8] sm:$0xff]
        %v832 = vld [vmem:[#allocation4 + $0x7d0] sm:$0xff]
        %v833 = vld [vmem:[#allocation4 + $0x7d8] sm:$0xff]
        %v834 = vld [vmem:[#allocation4 + $0x7e0] sm:$0xff]
        %v835 = vld [vmem:[#allocation4 + $0x7e8] sm:$0xff]
        %v836 = vld [vmem:[#allocation4 + $0x7f0] sm:$0xff]
        %v837 = vld [vmem:[#allocation4 + $0x7f8] sm:$0xff]
        %v846 = vunpack.c.l.b16 %v286
        %v847 = vunpack.c.h.b16 %v286
        %v848 = vunpack.c.l.b16 %v287
        %v849 = vunpack.c.h.b16 %v287
        %v850 = vunpack.c.l.b16 %v288
        %v851 = vunpack.c.h.b16 %v288
        %v852 = vunpack.c.l.b16 %v289
        %v853 = vunpack.c.h.b16 %v289
        %v854 = vunpack.c.l.b16 %v290
        %v855 = vunpack.c.h.b16 %v290
        %v856 = vunpack.c.l.b16 %v291
        %v857 = vunpack.c.h.b16 %v291
        %v858 = vunpack.c.l.b16 %v292
        %v859 = vunpack.c.h.b16 %v292
        %v860 = vunpack.c.l.b16 %v293
        %v861 = vunpack.c.h.b16 %v293
        %v862 = vpack.c.b16 %v854, %v846
        %v863 = vpack.c.b16 %v855, %v847
        %v864 = vpack.c.b16 %v856, %v848
        %v865 = vpack.c.b16 %v857, %v849
        %v866 = vpack.c.b16 %v858, %v850
        %v867 = vpack.c.b16 %v859, %v851
        %v868 = vpack.c.b16 %v860, %v852
        %v869 = vpack.c.b16 %v861, %v853
        %v1134 = vunpack.c.l.b16 %v582
        %v1135 = vunpack.c.h.b16 %v582
        %v1136 = vunpack.c.l.b16 %v583
        %v1137 = vunpack.c.h.b16 %v583
        %v1138 = vunpack.c.l.b16 %v584
        %v1139 = vunpack.c.h.b16 %v584
        %v1140 = vunpack.c.l.b16 %v585
        %v1141 = vunpack.c.h.b16 %v585
        %v1142 = vunpack.c.l.b16 %v586
        %v1143 = vunpack.c.h.b16 %v586
        %v1144 = vunpack.c.l.b16 %v587
        %v1145 = vunpack.c.h.b16 %v587
        %v1146 = vunpack.c.l.b16 %v588
        %v1147 = vunpack.c.h.b16 %v588
        %v1148 = vunpack.c.l.b16 %v589
        %v1149 = vunpack.c.h.b16 %v589
        %v1150 = vunpack.c.l.b16 %v590
        %v1151 = vunpack.c.h.b16 %v590
        %v1152 = vunpack.c.l.b16 %v591
        %v1153 = vunpack.c.h.b16 %v591
        %v1154 = vunpack.c.l.b16 %v592
        %v1155 = vunpack.c.h.b16 %v592
        %v1156 = vunpack.c.l.b16 %v593
        %v1157 = vunpack.c.h.b16 %v593
        %v1158 = vunpack.c.l.b16 %v594
        %v1159 = vunpack.c.h.b16 %v594
        %v1160 = vunpack.c.l.b16 %v595
        %v1161 = vunpack.c.h.b16 %v595
        %v1162 = vunpack.c.l.b16 %v596
        %v1163 = vunpack.c.h.b16 %v596
        %v1164 = vunpack.c.l.b16 %v597
        %v1165 = vunpack.c.h.b16 %v597
        %v1166 = vunpack.c.l.b16 %v598
        %v1167 = vunpack.c.h.b16 %v598
        %v1168 = vunpack.c.l.b16 %v599
        %v1169 = vunpack.c.h.b16 %v599
        %v1170 = vunpack.c.l.b16 %v600
        %v1171 = vunpack.c.h.b16 %v600
        %v1172 = vunpack.c.l.b16 %v601
        %v1173 = vunpack.c.h.b16 %v601
        %v1174 = vunpack.c.l.b16 %v602
        %v1175 = vunpack.c.h.b16 %v602
        %v1176 = vunpack.c.l.b16 %v603
        %v1177 = vunpack.c.h.b16 %v603
        %v1178 = vunpack.c.l.b16 %v604
        %v1179 = vunpack.c.h.b16 %v604
        %v1180 = vunpack.c.l.b16 %v605
        %v1181 = vunpack.c.h.b16 %v605
        %v1182 = vunpack.c.l.b16 %v606
        %v1183 = vunpack.c.h.b16 %v606
        %v1184 = vunpack.c.l.b16 %v607
        %v1185 = vunpack.c.h.b16 %v607
        %v1186 = vunpack.c.l.b16 %v608
        %v1187 = vunpack.c.h.b16 %v608
        %v1188 = vunpack.c.l.b16 %v609
        %v1189 = vunpack.c.h.b16 %v609
        %v1190 = vunpack.c.l.b16 %v610
        %v1191 = vunpack.c.h.b16 %v610
        %v1192 = vunpack.c.l.b16 %v611
        %v1193 = vunpack.c.h.b16 %v611
        %v1194 = vunpack.c.l.b16 %v612
        %v1195 = vunpack.c.h.b16 %v612
        %v1196 = vunpack.c.l.b16 %v613
        %v1197 = vunpack.c.h.b16 %v613
        %v1198 = vunpack.c.l.b16 %v614
        %v1199 = vunpack.c.h.b16 %v614
        %v1200 = vunpack.c.l.b16 %v615
        %v1201 = vunpack.c.h.b16 %v615
        %v1202 = vunpack.c.l.b16 %v616
        %v1203 = vunpack.c.h.b16 %v616
        %v1204 = vunpack.c.l.b16 %v617
        %v1205 = vunpack.c.h.b16 %v617
        %v1206 = vunpack.c.l.b16 %v618
        %v1207 = vunpack.c.h.b16 %v618
        %v1208 = vunpack.c.l.b16 %v619
        %v1209 = vunpack.c.h.b16 %v619
        %v1210 = vunpack.c.l.b16 %v620
        %v1211 = vunpack.c.h.b16 %v620
        %v1212 = vunpack.c.l.b16 %v621
        %v1213 = vunpack.c.h.b16 %v621
        %v1214 = vunpack.c.l.b16 %v622
        %v1215 = vunpack.c.h.b16 %v622
        %v1216 = vunpack.c.l.b16 %v623
        %v1217 = vunpack.c.h.b16 %v623
        %v1218 = vunpack.c.l.b16 %v624
        %v1219 = vunpack.c.h.b16 %v624
        %v1220 = vunpack.c.l.b16 %v625
        %v1221 = vunpack.c.h.b16 %v625
        %v1222 = vunpack.c.l.b16 %v626
        %v1223 = vunpack.c.h.b16 %v626
        %v1224 = vunpack.c.l.b16 %v627
        %v1225 = vunpack.c.h.b16 %v627
        %v1226 = vunpack.c.l.b16 %v628
        %v1227 = vunpack.c.h.b16 %v628
        %v1228 = vunpack.c.l.b16 %v629
        %v1229 = vunpack.c.h.b16 %v629
        %v1230 = vunpack.c.l.b16 %v630
        %v1231 = vunpack.c.h.b16 %v630
        %v1232 = vunpack.c.l.b16 %v631
        %v1233 = vunpack.c.h.b16 %v631
        %v1234 = vunpack.c.l.b16 %v632
        %v1235 = vunpack.c.h.b16 %v632
        %v1236 = vunpack.c.l.b16 %v633
        %v1237 = vunpack.c.h.b16 %v633
        %v1238 = vunpack.c.l.b16 %v634
        %v1239 = vunpack.c.h.b16 %v634
        %v1240 = vunpack.c.l.b16 %v635
        %v1241 = vunpack.c.h.b16 %v635
        %v1242 = vunpack.c.l.b16 %v636
        %v1243 = vunpack.c.h.b16 %v636
        %v1244 = vunpack.c.l.b16 %v637
        %v1245 = vunpack.c.h.b16 %v637
        %v1246 = vunpack.c.l.b16 %v638
        %v1247 = vunpack.c.h.b16 %v638
        %v1248 = vunpack.c.l.b16 %v639
        %v1249 = vunpack.c.h.b16 %v639
        %v1250 = vunpack.c.l.b16 %v640
        %v1251 = vunpack.c.h.b16 %v640
        %v1252 = vunpack.c.l.b16 %v641
        %v1253 = vunpack.c.h.b16 %v641
        %v1254 = vunpack.c.l.b16 %v642
        %v1255 = vunpack.c.h.b16 %v642
        %v1256 = vunpack.c.l.b16 %v643
        %v1257 = vunpack.c.h.b16 %v643
        %v1258 = vunpack.c.l.b16 %v644
        %v1259 = vunpack.c.h.b16 %v644
        %v1260 = vunpack.c.l.b16 %v645
        %v1261 = vunpack.c.h.b16 %v645
        %v1262 = vunpack.c.l.b16 %v646
        %v1263 = vunpack.c.h.b16 %v646
        %v1264 = vunpack.c.l.b16 %v647
        %v1265 = vunpack.c.h.b16 %v647
        %v1266 = vunpack.c.l.b16 %v648
        %v1267 = vunpack.c.h.b16 %v648
        %v1268 = vunpack.c.l.b16 %v649
        %v1269 = vunpack.c.h.b16 %v649
        %v1270 = vunpack.c.l.b16 %v650
        %v1271 = vunpack.c.h.b16 %v650
        %v1272 = vunpack.c.l.b16 %v651
        %v1273 = vunpack.c.h.b16 %v651
        %v1274 = vunpack.c.l.b16 %v652
        %v1275 = vunpack.c.h.b16 %v652
        %v1276 = vunpack.c.l.b16 %v653
        %v1277 = vunpack.c.h.b16 %v653
        %v1278 = vunpack.c.l.b16 %v654
        %v1279 = vunpack.c.h.b16 %v654
        %v1280 = vunpack.c.l.b16 %v655
        %v1281 = vunpack.c.h.b16 %v655
        %v1282 = vunpack.c.l.b16 %v656
        %v1283 = vunpack.c.h.b16 %v656
        %v1284 = vunpack.c.l.b16 %v657
        %v1285 = vunpack.c.h.b16 %v657
        %v1286 = vunpack.c.l.b16 %v658
        %v1287 = vunpack.c.h.b16 %v658
        %v1288 = vunpack.c.l.b16 %v659
        %v1289 = vunpack.c.h.b16 %v659
        %v1290 = vunpack.c.l.b16 %v660
        %v1291 = vunpack.c.h.b16 %v660
        %v1292 = vunpack.c.l.b16 %v661
        %v1293 = vunpack.c.h.b16 %v661
        %v1294 = vunpack.c.l.b16 %v662
        %v1295 = vunpack.c.h.b16 %v662
        %v1296 = vunpack.c.l.b16 %v663
        %v1297 = vunpack.c.h.b16 %v663
        %v1298 = vunpack.c.l.b16 %v664
        %v1299 = vunpack.c.h.b16 %v664
        %v1300 = vunpack.c.l.b16 %v665
        %v1301 = vunpack.c.h.b16 %v665
        %v1302 = vunpack.c.l.b16 %v666
        %v1303 = vunpack.c.h.b16 %v666
        %v1304 = vunpack.c.l.b16 %v667
        %v1305 = vunpack.c.h.b16 %v667
        %v1306 = vunpack.c.l.b16 %v668
        %v1307 = vunpack.c.h.b16 %v668
        %v1308 = vunpack.c.l.b16 %v669
        %v1309 = vunpack.c.h.b16 %v669
        %v1310 = vunpack.c.l.b16 %v670
        %v1311 = vunpack.c.h.b16 %v670
        %v1312 = vunpack.c.l.b16 %v671
        %v1313 = vunpack.c.h.b16 %v671
        %v1314 = vunpack.c.l.b16 %v672
        %v1315 = vunpack.c.h.b16 %v672
        %v1316 = vunpack.c.l.b16 %v673
        %v1317 = vunpack.c.h.b16 %v673
        %v1318 = vunpack.c.l.b16 %v674
        %v1319 = vunpack.c.h.b16 %v674
        %v1320 = vunpack.c.l.b16 %v675
        %v1321 = vunpack.c.h.b16 %v675
        %v1322 = vunpack.c.l.b16 %v676
        %v1323 = vunpack.c.h.b16 %v676
        %v1324 = vunpack.c.l.b16 %v677
        %v1325 = vunpack.c.h.b16 %v677
        %v1326 = vunpack.c.l.b16 %v678
        %v1327 = vunpack.c.h.b16 %v678
        %v1328 = vunpack.c.l.b16 %v679
        %v1329 = vunpack.c.h.b16 %v679
        %v1330 = vunpack.c.l.b16 %v680
        %v1331 = vunpack.c.h.b16 %v680
        %v1332 = vunpack.c.l.b16 %v681
        %v1333 = vunpack.c.h.b16 %v681
        %v1334 = vunpack.c.l.b16 %v682
        %v1335 = vunpack.c.h.b16 %v682
        %v1336 = vunpack.c.l.b16 %v683
        %v1337 = vunpack.c.h.b16 %v683
        %v1338 = vunpack.c.l.b16 %v684
        %v1339 = vunpack.c.h.b16 %v684
        %v1340 = vunpack.c.l.b16 %v685
        %v1341 = vunpack.c.h.b16 %v685
        %v1342 = vunpack.c.l.b16 %v686
        %v1343 = vunpack.c.h.b16 %v686
        %v1344 = vunpack.c.l.b16 %v687
        %v1345 = vunpack.c.h.b16 %v687
        %v1346 = vunpack.c.l.b16 %v688
        %v1347 = vunpack.c.h.b16 %v688
        %v1348 = vunpack.c.l.b16 %v689
        %v1349 = vunpack.c.h.b16 %v689
        %v1350 = vunpack.c.l.b16 %v690
        %v1351 = vunpack.c.h.b16 %v690
        %v1352 = vunpack.c.l.b16 %v691
        %v1353 = vunpack.c.h.b16 %v691
        %v1354 = vunpack.c.l.b16 %v692
        %v1355 = vunpack.c.h.b16 %v692
        %v1356 = vunpack.c.l.b16 %v693
        %v1357 = vunpack.c.h.b16 %v693
        %v1358 = vunpack.c.l.b16 %v694
        %v1359 = vunpack.c.h.b16 %v694
        %v1360 = vunpack.c.l.b16 %v695
        %v1361 = vunpack.c.h.b16 %v695
        %v1362 = vunpack.c.l.b16 %v696
        %v1363 = vunpack.c.h.b16 %v696
        %v1364 = vunpack.c.l.b16 %v697
        %v1365 = vunpack.c.h.b16 %v697
        %v1366 = vunpack.c.l.b16 %v698
        %v1367 = vunpack.c.h.b16 %v698
        %v1368 = vunpack.c.l.b16 %v699
        %v1369 = vunpack.c.h.b16 %v699
        %v1370 = vunpack.c.l.b16 %v700
        %v1371 = vunpack.c.h.b16 %v700
        %v1372 = vunpack.c.l.b16 %v701
        %v1373 = vunpack.c.h.b16 %v701
        %v1374 = vunpack.c.l.b16 %v702
        %v1375 = vunpack.c.h.b16 %v702
        %v1376 = vunpack.c.l.b16 %v703
        %v1377 = vunpack.c.h.b16 %v703
        %v1378 = vunpack.c.l.b16 %v704
        %v1379 = vunpack.c.h.b16 %v704
        %v1380 = vunpack.c.l.b16 %v705
        %v1381 = vunpack.c.h.b16 %v705
        %v1382 = vunpack.c.l.b16 %v706
        %v1383 = vunpack.c.h.b16 %v706
        %v1384 = vunpack.c.l.b16 %v707
        %v1385 = vunpack.c.h.b16 %v707
        %v1386 = vunpack.c.l.b16 %v708
        %v1387 = vunpack.c.h.b16 %v708
        %v1388 = vunpack.c.l.b16 %v709
        %v1389 = vunpack.c.h.b16 %v709
        %v1390 = vunpack.c.l.b16 %v710
        %v1391 = vunpack.c.h.b16 %v710
        %v1392 = vunpack.c.l.b16 %v711
        %v1393 = vunpack.c.h.b16 %v711
        %v1394 = vunpack.c.l.b16 %v712
        %v1395 = vunpack.c.h.b16 %v712
        %v1396 = vunpack.c.l.b16 %v713
        %v1397 = vunpack.c.h.b16 %v713
        %v1398 = vunpack.c.l.b16 %v714
        %v1399 = vunpack.c.h.b16 %v714
        %v1400 = vunpack.c.l.b16 %v715
        %v1401 = vunpack.c.h.b16 %v715
        %v1402 = vunpack.c.l.b16 %v716
        %v1403 = vunpack.c.h.b16 %v716
        %v1404 = vunpack.c.l.b16 %v717
        %v1405 = vunpack.c.h.b16 %v717
        %v1406 = vunpack.c.l.b16 %v718
        %v1407 = vunpack.c.h.b16 %v718
        %v1408 = vunpack.c.l.b16 %v719
        %v1409 = vunpack.c.h.b16 %v719
        %v1410 = vunpack.c.l.b16 %v720
        %v1411 = vunpack.c.h.b16 %v720
        %v1412 = vunpack.c.l.b16 %v721
        %v1413 = vunpack.c.h.b16 %v721
        %v1414 = vunpack.c.l.b16 %v722
        %v1415 = vunpack.c.h.b16 %v722
        %v1416 = vunpack.c.l.b16 %v723
        %v1417 = vunpack.c.h.b16 %v723
        %v1418 = vunpack.c.l.b16 %v724
        %v1419 = vunpack.c.h.b16 %v724
        %v1420 = vunpack.c.l.b16 %v725
        %v1421 = vunpack.c.h.b16 %v725
        %v1422 = vunpack.c.l.b16 %v726
        %v1423 = vunpack.c.h.b16 %v726
        %v1424 = vunpack.c.l.b16 %v727
        %v1425 = vunpack.c.h.b16 %v727
        %v1426 = vunpack.c.l.b16 %v728
        %v1427 = vunpack.c.h.b16 %v728
        %v1428 = vunpack.c.l.b16 %v729
        %v1429 = vunpack.c.h.b16 %v729
        %v1430 = vunpack.c.l.b16 %v730
        %v1431 = vunpack.c.h.b16 %v730
        %v1432 = vunpack.c.l.b16 %v731
        %v1433 = vunpack.c.h.b16 %v731
        %v1434 = vunpack.c.l.b16 %v732
        %v1435 = vunpack.c.h.b16 %v732
        %v1436 = vunpack.c.l.b16 %v733
        %v1437 = vunpack.c.h.b16 %v733
        %v1438 = vunpack.c.l.b16 %v734
        %v1439 = vunpack.c.h.b16 %v734
        %v1440 = vunpack.c.l.b16 %v735
        %v1441 = vunpack.c.h.b16 %v735
        %v1442 = vunpack.c.l.b16 %v736
        %v1443 = vunpack.c.h.b16 %v736
        %v1444 = vunpack.c.l.b16 %v737
        %v1445 = vunpack.c.h.b16 %v737
        %v1446 = vunpack.c.l.b16 %v738
        %v1447 = vunpack.c.h.b16 %v738
        %v1448 = vunpack.c.l.b16 %v739
        %v1449 = vunpack.c.h.b16 %v739
        %v1450 = vunpack.c.l.b16 %v740
        %v1451 = vunpack.c.h.b16 %v740
        %v1452 = vunpack.c.l.b16 %v741
        %v1453 = vunpack.c.h.b16 %v741
        %v1454 = vunpack.c.l.b16 %v742
        %v1455 = vunpack.c.h.b16 %v742
        %v1456 = vunpack.c.l.b16 %v743
        %v1457 = vunpack.c.h.b16 %v743
        %v1458 = vunpack.c.l.b16 %v744
        %v1459 = vunpack.c.h.b16 %v744
        %v1460 = vunpack.c.l.b16 %v745
        %v1461 = vunpack.c.h.b16 %v745
        %v1462 = vunpack.c.l.b16 %v746
        %v1463 = vunpack.c.h.b16 %v746
        %v1464 = vunpack.c.l.b16 %v747
        %v1465 = vunpack.c.h.b16 %v747
        %v1466 = vunpack.c.l.b16 %v748
        %v1467 = vunpack.c.h.b16 %v748
        %v1468 = vunpack.c.l.b16 %v749
        %v1469 = vunpack.c.h.b16 %v749
        %v1470 = vunpack.c.l.b16 %v750
        %v1471 = vunpack.c.h.b16 %v750
        %v1472 = vunpack.c.l.b16 %v751
        %v1473 = vunpack.c.h.b16 %v751
        %v1474 = vunpack.c.l.b16 %v752
        %v1475 = vunpack.c.h.b16 %v752
        %v1476 = vunpack.c.l.b16 %v753
        %v1477 = vunpack.c.h.b16 %v753
        %v1478 = vunpack.c.l.b16 %v754
        %v1479 = vunpack.c.h.b16 %v754
        %v1480 = vunpack.c.l.b16 %v755
        %v1481 = vunpack.c.h.b16 %v755
        %v1482 = vunpack.c.l.b16 %v756
        %v1483 = vunpack.c.h.b16 %v756
        %v1484 = vunpack.c.l.b16 %v757
        %v1485 = vunpack.c.h.b16 %v757
        %v1486 = vunpack.c.l.b16 %v758
        %v1487 = vunpack.c.h.b16 %v758
        %v1488 = vunpack.c.l.b16 %v759
        %v1489 = vunpack.c.h.b16 %v759
        %v1490 = vunpack.c.l.b16 %v760
        %v1491 = vunpack.c.h.b16 %v760
        %v1492 = vunpack.c.l.b16 %v761
        %v1493 = vunpack.c.h.b16 %v761
        %v1494 = vunpack.c.l.b16 %v762
        %v1495 = vunpack.c.h.b16 %v762
        %v1496 = vunpack.c.l.b16 %v763
        %v1497 = vunpack.c.h.b16 %v763
        %v1498 = vunpack.c.l.b16 %v764
        %v1499 = vunpack.c.h.b16 %v764
        %v1500 = vunpack.c.l.b16 %v765
        %v1501 = vunpack.c.h.b16 %v765
        %v1502 = vunpack.c.l.b16 %v766
        %v1503 = vunpack.c.h.b16 %v766
        %v1504 = vunpack.c.l.b16 %v767
        %v1505 = vunpack.c.h.b16 %v767
        %v1506 = vunpack.c.l.b16 %v768
        %v1507 = vunpack.c.h.b16 %v768
        %v1508 = vunpack.c.l.b16 %v769
        %v1509 = vunpack.c.h.b16 %v769
        %v1510 = vunpack.c.l.b16 %v770
        %v1511 = vunpack.c.h.b16 %v770
        %v1512 = vunpack.c.l.b16 %v771
        %v1513 = vunpack.c.h.b16 %v771
        %v1514 = vunpack.c.l.b16 %v772
        %v1515 = vunpack.c.h.b16 %v772
        %v1516 = vunpack.c.l.b16 %v773
        %v1517 = vunpack.c.h.b16 %v773
        %v1518 = vunpack.c.l.b16 %v774
        %v1519 = vunpack.c.h.b16 %v774
        %v1520 = vunpack.c.l.b16 %v775
        %v1521 = vunpack.c.h.b16 %v775
        %v1522 = vunpack.c.l.b16 %v776
        %v1523 = vunpack.c.h.b16 %v776
        %v1524 = vunpack.c.l.b16 %v777
        %v1525 = vunpack.c.h.b16 %v777
        %v1526 = vunpack.c.l.b16 %v778
        %v1527 = vunpack.c.h.b16 %v778
        %v1528 = vunpack.c.l.b16 %v779
        %v1529 = vunpack.c.h.b16 %v779
        %v1530 = vunpack.c.l.b16 %v780
        %v1531 = vunpack.c.h.b16 %v780
        %v1532 = vunpack.c.l.b16 %v781
        %v1533 = vunpack.c.h.b16 %v781
        %v1534 = vunpack.c.l.b16 %v782
        %v1535 = vunpack.c.h.b16 %v782
        %v1536 = vunpack.c.l.b16 %v783
        %v1537 = vunpack.c.h.b16 %v783
        %v1538 = vunpack.c.l.b16 %v784
        %v1539 = vunpack.c.h.b16 %v784
        %v1540 = vunpack.c.l.b16 %v785
        %v1541 = vunpack.c.h.b16 %v785
        %v1542 = vunpack.c.l.b16 %v786
        %v1543 = vunpack.c.h.b16 %v786
        %v1544 = vunpack.c.l.b16 %v787
        %v1545 = vunpack.c.h.b16 %v787
        %v1546 = vunpack.c.l.b16 %v788
        %v1547 = vunpack.c.h.b16 %v788
        %v1548 = vunpack.c.l.b16 %v789
        %v1549 = vunpack.c.h.b16 %v789
        %v1550 = vunpack.c.l.b16 %v790
        %v1551 = vunpack.c.h.b16 %v790
        %v1552 = vunpack.c.l.b16 %v791
        %v1553 = vunpack.c.h.b16 %v791
        %v1554 = vunpack.c.l.b16 %v792
        %v1555 = vunpack.c.h.b16 %v792
        %v1556 = vunpack.c.l.b16 %v793
        %v1557 = vunpack.c.h.b16 %v793
        %v1558 = vunpack.c.l.b16 %v794
        %v1559 = vunpack.c.h.b16 %v794
        %v1560 = vunpack.c.l.b16 %v795
        %v1561 = vunpack.c.h.b16 %v795
        %v1562 = vunpack.c.l.b16 %v796
        %v1563 = vunpack.c.h.b16 %v796
        %v1564 = vunpack.c.l.b16 %v797
        %v1565 = vunpack.c.h.b16 %v797
        %v1566 = vunpack.c.l.b16 %v798
        %v1567 = vunpack.c.h.b16 %v798
        %v1568 = vunpack.c.l.b16 %v799
        %v1569 = vunpack.c.h.b16 %v799
        %v1570 = vunpack.c.l.b16 %v800
        %v1571 = vunpack.c.h.b16 %v800
        %v1572 = vunpack.c.l.b16 %v801
        %v1573 = vunpack.c.h.b16 %v801
        %v1574 = vunpack.c.l.b16 %v802
        %v1575 = vunpack.c.h.b16 %v802
        %v1576 = vunpack.c.l.b16 %v803
        %v1577 = vunpack.c.h.b16 %v803
        %v1578 = vunpack.c.l.b16 %v804
        %v1579 = vunpack.c.h.b16 %v804
        %v1580 = vunpack.c.l.b16 %v805
        %v1581 = vunpack.c.h.b16 %v805
        %v1582 = vunpack.c.l.b16 %v806
        %v1583 = vunpack.c.h.b16 %v806
        %v1584 = vunpack.c.l.b16 %v807
        %v1585 = vunpack.c.h.b16 %v807
        %v1586 = vunpack.c.l.b16 %v808
        %v1587 = vunpack.c.h.b16 %v808
        %v1588 = vunpack.c.l.b16 %v809
        %v1589 = vunpack.c.h.b16 %v809
        %v1590 = vunpack.c.l.b16 %v810
        %v1591 = vunpack.c.h.b16 %v810
        %v1592 = vunpack.c.l.b16 %v811
        %v1593 = vunpack.c.h.b16 %v811
        %v1594 = vunpack.c.l.b16 %v812
        %v1595 = vunpack.c.h.b16 %v812
        %v1596 = vunpack.c.l.b16 %v813
        %v1597 = vunpack.c.h.b16 %v813
        %v1598 = vunpack.c.l.b16 %v814
        %v1599 = vunpack.c.h.b16 %v814
        %v1600 = vunpack.c.l.b16 %v815
        %v1601 = vunpack.c.h.b16 %v815
        %v1602 = vunpack.c.l.b16 %v816
        %v1603 = vunpack.c.h.b16 %v816
        %v1604 = vunpack.c.l.b16 %v817
        %v1605 = vunpack.c.h.b16 %v817
        %v1606 = vunpack.c.l.b16 %v818
        %v1607 = vunpack.c.h.b16 %v818
        %v1608 = vunpack.c.l.b16 %v819
        %v1609 = vunpack.c.h.b16 %v819
        %v1610 = vunpack.c.l.b16 %v820
        %v1611 = vunpack.c.h.b16 %v820
        %v1612 = vunpack.c.l.b16 %v821
        %v1613 = vunpack.c.h.b16 %v821
        %v1614 = vunpack.c.l.b16 %v822
        %v1615 = vunpack.c.h.b16 %v822
        %v1616 = vunpack.c.l.b16 %v823
        %v1617 = vunpack.c.h.b16 %v823
        %v1618 = vunpack.c.l.b16 %v824
        %v1619 = vunpack.c.h.b16 %v824
        %v1620 = vunpack.c.l.b16 %v825
        %v1621 = vunpack.c.h.b16 %v825
        %v1622 = vunpack.c.l.b16 %v826
        %v1623 = vunpack.c.h.b16 %v826
        %v1624 = vunpack.c.l.b16 %v827
        %v1625 = vunpack.c.h.b16 %v827
        %v1626 = vunpack.c.l.b16 %v828
        %v1627 = vunpack.c.h.b16 %v828
        %v1628 = vunpack.c.l.b16 %v829
        %v1629 = vunpack.c.h.b16 %v829
        %v1630 = vunpack.c.l.b16 %v830
        %v1631 = vunpack.c.h.b16 %v830
        %v1632 = vunpack.c.l.b16 %v831
        %v1633 = vunpack.c.h.b16 %v831
        %v1634 = vunpack.c.l.b16 %v832
        %v1635 = vunpack.c.h.b16 %v832
        %v1636 = vunpack.c.l.b16 %v833
        %v1637 = vunpack.c.h.b16 %v833
        %v1638 = vunpack.c.l.b16 %v834
        %v1639 = vunpack.c.h.b16 %v834
        %v1640 = vunpack.c.l.b16 %v835
        %v1641 = vunpack.c.h.b16 %v835
        %v1642 = vunpack.c.l.b16 %v836
        %v1643 = vunpack.c.h.b16 %v836
        %v1644 = vunpack.c.l.b16 %v837
        %v1645 = vunpack.c.h.b16 %v837
        %v1646 = vpack.c.b16 %v1138, %v1134
        %v1647 = vpack.c.b16 %v1139, %v1135
        %v1648 = vpack.c.b16 %v1140, %v1136
        %v1649 = vpack.c.b16 %v1141, %v1137
        %v1650 = vpack.c.b16 %v1146, %v1142
        %v1651 = vpack.c.b16 %v1147, %v1143
        %v1652 = vpack.c.b16 %v1148, %v1144
        %v1653 = vpack.c.b16 %v1149, %v1145
        %v1654 = vpack.c.b16 %v1154, %v1150
        %v1655 = vpack.c.b16 %v1155, %v1151
        %v1656 = vpack.c.b16 %v1156, %v1152
        %v1657 = vpack.c.b16 %v1157, %v1153
        %v1658 = vpack.c.b16 %v1162, %v1158
        %v1659 = vpack.c.b16 %v1163, %v1159
        %v1660 = vpack.c.b16 %v1164, %v1160
        %v1661 = vpack.c.b16 %v1165, %v1161
        %v1662 = vpack.c.b16 %v1170, %v1166
        %v1663 = vpack.c.b16 %v1171, %v1167
        %v1664 = vpack.c.b16 %v1172, %v1168
        %v1665 = vpack.c.b16 %v1173, %v1169
        %v1666 = vpack.c.b16 %v1178, %v1174
        %v1667 = vpack.c.b16 %v1179, %v1175
        %v1668 = vpack.c.b16 %v1180, %v1176
        %v1669 = vpack.c.b16 %v1181, %v1177
        %v1670 = vpack.c.b16 %v1186, %v1182
        %v1671 = vpack.c.b16 %v1187, %v1183
        %v1672 = vpack.c.b16 %v1188, %v1184
        %v1673 = vpack.c.b16 %v1189, %v1185
        %v1674 = vpack.c.b16 %v1194, %v1190
        %v1675 = vpack.c.b16 %v1195, %v1191
        %v1676 = vpack.c.b16 %v1196, %v1192
        %v1677 = vpack.c.b16 %v1197, %v1193
        %v1678 = vpack.c.b16 %v1202, %v1198
        %v1679 = vpack.c.b16 %v1203, %v1199
        %v1680 = vpack.c.b16 %v1204, %v1200
        %v1681 = vpack.c.b16 %v1205, %v1201
        %v1682 = vpack.c.b16 %v1210, %v1206
        %v1683 = vpack.c.b16 %v1211, %v1207
        %v1684 = vpack.c.b16 %v1212, %v1208
        %v1685 = vpack.c.b16 %v1213, %v1209
        %v1686 = vpack.c.b16 %v1218, %v1214
        %v1687 = vpack.c.b16 %v1219, %v1215
        %v1688 = vpack.c.b16 %v1220, %v1216
        %v1689 = vpack.c.b16 %v1221, %v1217
        %v1690 = vpack.c.b16 %v1226, %v1222
        %v1691 = vpack.c.b16 %v1227, %v1223
        %v1692 = vpack.c.b16 %v1228, %v1224
        %v1693 = vpack.c.b16 %v1229, %v1225
        %v1694 = vpack.c.b16 %v1234, %v1230
        %v1695 = vpack.c.b16 %v1235, %v1231
        %v1696 = vpack.c.b16 %v1236, %v1232
        %v1697 = vpack.c.b16 %v1237, %v1233
        %v1698 = vpack.c.b16 %v1242, %v1238
        %v1699 = vpack.c.b16 %v1243, %v1239
        %v1700 = vpack.c.b16 %v1244, %v1240
        %v1701 = vpack.c.b16 %v1245, %v1241
        %v1702 = vpack.c.b16 %v1250, %v1246
        %v1703 = vpack.c.b16 %v1251, %v1247
        %v1704 = vpack.c.b16 %v1252, %v1248
        %v1705 = vpack.c.b16 %v1253, %v1249
        %v1706 = vpack.c.b16 %v1258, %v1254
        %v1707 = vpack.c.b16 %v1259, %v1255
        %v1708 = vpack.c.b16 %v1260, %v1256
        %v1709 = vpack.c.b16 %v1261, %v1257
        %v1710 = vpack.c.b16 %v1266, %v1262
        %v1711 = vpack.c.b16 %v1267, %v1263
        %v1712 = vpack.c.b16 %v1268, %v1264
        %v1713 = vpack.c.b16 %v1269, %v1265
        %v1714 = vpack.c.b16 %v1274, %v1270
        %v1715 = vpack.c.b16 %v1275, %v1271
        %v1716 = vpack.c.b16 %v1276, %v1272
        %v1717 = vpack.c.b16 %v1277, %v1273
        %v1718 = vpack.c.b16 %v1282, %v1278
        %v1719 = vpack.c.b16 %v1283, %v1279
        %v1720 = vpack.c.b16 %v1284, %v1280
        %v1721 = vpack.c.b16 %v1285, %v1281
        %v1722 = vpack.c.b16 %v1290, %v1286
        %v1723 = vpack.c.b16 %v1291, %v1287
        %v1724 = vpack.c.b16 %v1292, %v1288
        %v1725 = vpack.c.b16 %v1293, %v1289
        %v1726 = vpack.c.b16 %v1298, %v1294
        %v1727 = vpack.c.b16 %v1299, %v1295
        %v1728 = vpack.c.b16 %v1300, %v1296
        %v1729 = vpack.c.b16 %v1301, %v1297
        %v1730 = vpack.c.b16 %v1306, %v1302
        %v1731 = vpack.c.b16 %v1307, %v1303
        %v1732 = vpack.c.b16 %v1308, %v1304
        %v1733 = vpack.c.b16 %v1309, %v1305
        %v1734 = vpack.c.b16 %v1314, %v1310
        %v1735 = vpack.c.b16 %v1315, %v1311
        %v1736 = vpack.c.b16 %v1316, %v1312
        %v1737 = vpack.c.b16 %v1317, %v1313
        %v1738 = vpack.c.b16 %v1322, %v1318
        %v1739 = vpack.c.b16 %v1323, %v1319
        %v1740 = vpack.c.b16 %v1324, %v1320
        %v1741 = vpack.c.b16 %v1325, %v1321
        %v1742 = vpack.c.b16 %v1330, %v1326
        %v1743 = vpack.c.b16 %v1331, %v1327
        %v1744 = vpack.c.b16 %v1332, %v1328
        %v1745 = vpack.c.b16 %v1333, %v1329
        %v1746 = vpack.c.b16 %v1338, %v1334
        %v1747 = vpack.c.b16 %v1339, %v1335
        %v1748 = vpack.c.b16 %v1340, %v1336
        %v1749 = vpack.c.b16 %v1341, %v1337
        %v1750 = vpack.c.b16 %v1346, %v1342
        %v1751 = vpack.c.b16 %v1347, %v1343
        %v1752 = vpack.c.b16 %v1348, %v1344
        %v1753 = vpack.c.b16 %v1349, %v1345
        %v1754 = vpack.c.b16 %v1354, %v1350
        %v1755 = vpack.c.b16 %v1355, %v1351
        %v1756 = vpack.c.b16 %v1356, %v1352
        %v1757 = vpack.c.b16 %v1357, %v1353
        %v1758 = vpack.c.b16 %v1362, %v1358
        %v1759 = vpack.c.b16 %v1363, %v1359
        %v1760 = vpack.c.b16 %v1364, %v1360
        %v1761 = vpack.c.b16 %v1365, %v1361
        %v1762 = vpack.c.b16 %v1370, %v1366
        %v1763 = vpack.c.b16 %v1371, %v1367
        %v1764 = vpack.c.b16 %v1372, %v1368
        %v1765 = vpack.c.b16 %v1373, %v1369
        %v1766 = vpack.c.b16 %v1378, %v1374
        %v1767 = vpack.c.b16 %v1379, %v1375
        %v1768 = vpack.c.b16 %v1380, %v1376
        %v1769 = vpack.c.b16 %v1381, %v1377
        %v1770 = vpack.c.b16 %v1386, %v1382
        %v1771 = vpack.c.b16 %v1387, %v1383
        %v1772 = vpack.c.b16 %v1388, %v1384
        %v1773 = vpack.c.b16 %v1389, %v1385
        %v1774 = vpack.c.b16 %v1394, %v1390
        %v1775 = vpack.c.b16 %v1395, %v1391
        %v1776 = vpack.c.b16 %v1396, %v1392
        %v1777 = vpack.c.b16 %v1397, %v1393
        %v1778 = vpack.c.b16 %v1402, %v1398
        %v1779 = vpack.c.b16 %v1403, %v1399
        %v1780 = vpack.c.b16 %v1404, %v1400
        %v1781 = vpack.c.b16 %v1405, %v1401
        %v1782 = vpack.c.b16 %v1410, %v1406
        %v1783 = vpack.c.b16 %v1411, %v1407
        %v1784 = vpack.c.b16 %v1412, %v1408
        %v1785 = vpack.c.b16 %v1413, %v1409
        %v1786 = vpack.c.b16 %v1418, %v1414
        %v1787 = vpack.c.b16 %v1419, %v1415
        %v1788 = vpack.c.b16 %v1420, %v1416
        %v1789 = vpack.c.b16 %v1421, %v1417
        %v1790 = vpack.c.b16 %v1426, %v1422
        %v1791 = vpack.c.b16 %v1427, %v1423
        %v1792 = vpack.c.b16 %v1428, %v1424
        %v1793 = vpack.c.b16 %v1429, %v1425
        %v1794 = vpack.c.b16 %v1434, %v1430
        %v1795 = vpack.c.b16 %v1435, %v1431
        %v1796 = vpack.c.b16 %v1436, %v1432
        %v1797 = vpack.c.b16 %v1437, %v1433
        %v1798 = vpack.c.b16 %v1442, %v1438
        %v1799 = vpack.c.b16 %v1443, %v1439
        %v1800 = vpack.c.b16 %v1444, %v1440
        %v1801 = vpack.c.b16 %v1445, %v1441
        %v1802 = vpack.c.b16 %v1450, %v1446
        %v1803 = vpack.c.b16 %v1451, %v1447
        %v1804 = vpack.c.b16 %v1452, %v1448
        %v1805 = vpack.c.b16 %v1453, %v1449
        %v1806 = vpack.c.b16 %v1458, %v1454
        %v1807 = vpack.c.b16 %v1459, %v1455
        %v1808 = vpack.c.b16 %v1460, %v1456
        %v1809 = vpack.c.b16 %v1461, %v1457
        %v1810 = vpack.c.b16 %v1466, %v1462
        %v1811 = vpack.c.b16 %v1467, %v1463
        %v1812 = vpack.c.b16 %v1468, %v1464
        %v1813 = vpack.c.b16 %v1469, %v1465
        %v1814 = vpack.c.b16 %v1474, %v1470
        %v1815 = vpack.c.b16 %v1475, %v1471
        %v1816 = vpack.c.b16 %v1476, %v1472
        %v1817 = vpack.c.b16 %v1477, %v1473
        %v1818 = vpack.c.b16 %v1482, %v1478
        %v1819 = vpack.c.b16 %v1483, %v1479
        %v1820 = vpack.c.b16 %v1484, %v1480
        %v1821 = vpack.c.b16 %v1485, %v1481
        %v1822 = vpack.c.b16 %v1490, %v1486
        %v1823 = vpack.c.b16 %v1491, %v1487
        %v1824 = vpack.c.b16 %v1492, %v1488
        %v1825 = vpack.c.b16 %v1493, %v1489
        %v1826 = vpack.c.b16 %v1498, %v1494
        %v1827 = vpack.c.b16 %v1499, %v1495
        %v1828 = vpack.c.b16 %v1500, %v1496
        %v1829 = vpack.c.b16 %v1501, %v1497
        %v1830 = vpack.c.b16 %v1506, %v1502
        %v1831 = vpack.c.b16 %v1507, %v1503
        %v1832 = vpack.c.b16 %v1508, %v1504
        %v1833 = vpack.c.b16 %v1509, %v1505
        %v1834 = vpack.c.b16 %v1514, %v1510
        %v1835 = vpack.c.b16 %v1515, %v1511
        %v1836 = vpack.c.b16 %v1516, %v1512
        %v1837 = vpack.c.b16 %v1517, %v1513
        %v1838 = vpack.c.b16 %v1522, %v1518
        %v1839 = vpack.c.b16 %v1523, %v1519
        %v1840 = vpack.c.b16 %v1524, %v1520
        %v1841 = vpack.c.b16 %v1525, %v1521
        %v1842 = vpack.c.b16 %v1530, %v1526
        %v1843 = vpack.c.b16 %v1531, %v1527
        %v1844 = vpack.c.b16 %v1532, %v1528
        %v1845 = vpack.c.b16 %v1533, %v1529
        %v1846 = vpack.c.b16 %v1538, %v1534
        %v1847 = vpack.c.b16 %v1539, %v1535
        %v1848 = vpack.c.b16 %v1540, %v1536
        %v1849 = vpack.c.b16 %v1541, %v1537
        %v1850 = vpack.c.b16 %v1546, %v1542
        %v1851 = vpack.c.b16 %v1547, %v1543
        %v1852 = vpack.c.b16 %v1548, %v1544
        %v1853 = vpack.c.b16 %v1549, %v1545
        %v1854 = vpack.c.b16 %v1554, %v1550
        %v1855 = vpack.c.b16 %v1555, %v1551
        %v1856 = vpack.c.b16 %v1556, %v1552
        %v1857 = vpack.c.b16 %v1557, %v1553
        %v1858 = vpack.c.b16 %v1562, %v1558
        %v1859 = vpack.c.b16 %v1563, %v1559
        %v1860 = vpack.c.b16 %v1564, %v1560
        %v1861 = vpack.c.b16 %v1565, %v1561
        %v1862 = vpack.c.b16 %v1570, %v1566
        %v1863 = vpack.c.b16 %v1571, %v1567
        %v1864 = vpack.c.b16 %v1572, %v1568
        %v1865 = vpack.c.b16 %v1573, %v1569
        %v1866 = vpack.c.b16 %v1578, %v1574
        %v1867 = vpack.c.b16 %v1579, %v1575
        %v1868 = vpack.c.b16 %v1580, %v1576
        %v1869 = vpack.c.b16 %v1581, %v1577
        %v1870 = vpack.c.b16 %v1586, %v1582
        %v1871 = vpack.c.b16 %v1587, %v1583
        %v1872 = vpack.c.b16 %v1588, %v1584
        %v1873 = vpack.c.b16 %v1589, %v1585
        %v1874 = vpack.c.b16 %v1594, %v1590
        %v1875 = vpack.c.b16 %v1595, %v1591
        %v1876 = vpack.c.b16 %v1596, %v1592
        %v1877 = vpack.c.b16 %v1597, %v1593
        %v1878 = vpack.c.b16 %v1602, %v1598
        %v1879 = vpack.c.b16 %v1603, %v1599
        %v1880 = vpack.c.b16 %v1604, %v1600
        %v1881 = vpack.c.b16 %v1605, %v1601
        %v1882 = vpack.c.b16 %v1610, %v1606
        %v1883 = vpack.c.b16 %v1611, %v1607
        %v1884 = vpack.c.b16 %v1612, %v1608
        %v1885 = vpack.c.b16 %v1613, %v1609
        %v1886 = vpack.c.b16 %v1618, %v1614
        %v1887 = vpack.c.b16 %v1619, %v1615
        %v1888 = vpack.c.b16 %v1620, %v1616
        %v1889 = vpack.c.b16 %v1621, %v1617
        %v1890 = vpack.c.b16 %v1626, %v1622
        %v1891 = vpack.c.b16 %v1627, %v1623
        %v1892 = vpack.c.b16 %v1628, %v1624
        %v1893 = vpack.c.b16 %v1629, %v1625
        %v1894 = vpack.c.b16 %v1634, %v1630
        %v1895 = vpack.c.b16 %v1635, %v1631
        %v1896 = vpack.c.b16 %v1636, %v1632
        %v1897 = vpack.c.b16 %v1637, %v1633
        %v1898 = vpack.c.b16 %v1642, %v1638
        %v1899 = vpack.c.b16 %v1643, %v1639
        %v1900 = vpack.c.b16 %v1644, %v1640
        %v1901 = vpack.c.b16 %v1645, %v1641
        %2158 = vmatprep.subr.bf16.mxu0 %v1675
        %2159 = vmatpush1.bf16.msra.mxu0 %v1674
        %2160 = vmatprep.subr.bf16.mxu0 %v1671
        %2161 = vmatpush1.bf16.msra.mxu0 %v1670
        %2162 = vmatprep.subr.bf16.mxu0 %v1667
        %2163 = vmatpush1.bf16.msra.mxu0 %v1666
        %2164 = vmatprep.subr.bf16.mxu0 %v1663
        %2165 = vmatpush1.bf16.msra.mxu0 %v1662
        %2166 = vmatprep.subr.bf16.mxu0 %v1659
        %2167 = vmatpush1.bf16.msra.mxu0 %v1658
        %2168 = vmatprep.subr.bf16.mxu0 %v1655
        %2169 = vmatpush1.bf16.msra.mxu0 %v1654
        %2170 = vmatprep.subr.bf16.mxu0 %v1651
        %2171 = vmatpush1.bf16.msra.mxu0 %v1650
        %2172 = vmatprep.subr.bf16.mxu0 %v1647
        %2173 = vmatpush1.bf16.msra.mxu0 %v1646
        %2174 = vmatprep.subr.bf16.mxu0 %v1707
        %2175 = vmatpush2.bf16.msra.mxu0 %v1706
        %2176 = vmatprep.subr.bf16.mxu0 %v1703
        %2177 = vmatpush2.bf16.msra.mxu0 %v1702
        %2178 = vmatprep.subr.bf16.mxu0 %v1699
        %2179 = vmatpush2.bf16.msra.mxu0 %v1698
        %2180 = vmatprep.subr.bf16.mxu0 %v1695
        %2181 = vmatpush2.bf16.msra.mxu0 %v1694
        %2182 = vmatprep.subr.bf16.mxu0 %v1691
        %2183 = vmatpush2.bf16.msra.mxu0 %v1690
        %2184 = vmatprep.subr.bf16.mxu0 %v1687
        %2185 = vmatpush2.bf16.msra.mxu0 %v1686
        %2186 = vmatprep.subr.bf16.mxu0 %v1683
        %2187 = vmatpush2.bf16.msra.mxu0 %v1682
        %2188 = vmatprep.subr.bf16.mxu0 %v1679
        %2189 = vmatpush2.bf16.msra.mxu0 %v1678
        %2190 = vmatprep.mubr.bf16.mxu0 %v863
        %2191 = vmatmul.mubr.bf16.gmra.mxu0 %v862
        %v2192 = vpop.f32.mrf.mxu0
        %v2193 = vadd.f32 0.0, %v2192
        %v2194 = vpop.f32.mrf.mxu0
        %v2195 = vadd.f32 0.0, %v2194
        %v2196 = vpop.f32.mrf.mxu0
        %v2197 = vadd.f32 0.0, %v2196
        %v2198 = vpop.f32.mrf.mxu0
        %v2199 = vadd.f32 0.0, %v2198
        %2200 = vdwg.mxu0
        %2201 = vmatprep.subr.bf16.mxu0 %v1739
        %2202 = vmatpush1.bf16.msra.mxu0 %v1738
        %2203 = vmatprep.subr.bf16.mxu0 %v1735
        %2204 = vmatpush1.bf16.msra.mxu0 %v1734
        %2205 = vmatprep.subr.bf16.mxu0 %v1731
        %2206 = vmatpush1.bf16.msra.mxu0 %v1730
        %2207 = vmatprep.subr.bf16.mxu0 %v1727
        %2208 = vmatpush1.bf16.msra.mxu0 %v1726
        %2209 = vmatprep.subr.bf16.mxu0 %v1723
        %2210 = vmatpush1.bf16.msra.mxu0 %v1722
        %2211 = vmatprep.subr.bf16.mxu0 %v1719
        %2212 = vmatpush1.bf16.msra.mxu0 %v1718
        %2213 = vmatprep.subr.bf16.mxu0 %v1715
        %2214 = vmatpush1.bf16.msra.mxu0 %v1714
        %2215 = vmatprep.subr.bf16.mxu0 %v1711
        %2216 = vmatpush1.bf16.msra.mxu0 %v1710
        %2217 = vmatprep.subr.bf16.mxu0 %v1771
        %2218 = vmatpush2.bf16.msra.mxu0 %v1770
        %2219 = vmatprep.subr.bf16.mxu0 %v1767
        %2220 = vmatpush2.bf16.msra.mxu0 %v1766
        %2221 = vmatprep.subr.bf16.mxu0 %v1763
        %2222 = vmatpush2.bf16.msra.mxu0 %v1762
        %2223 = vmatprep.subr.bf16.mxu0 %v1759
        %2224 = vmatpush2.bf16.msra.mxu0 %v1758
        %2225 = vmatprep.subr.bf16.mxu0 %v1755
        %2226 = vmatpush2.bf16.msra.mxu0 %v1754
        %2227 = vmatprep.subr.bf16.mxu0 %v1751
        %2228 = vmatpush2.bf16.msra.mxu0 %v1750
        %2229 = vmatprep.subr.bf16.mxu0 %v1747
        %2230 = vmatpush2.bf16.msra.mxu0 %v1746
        %2231 = vmatprep.subr.bf16.mxu0 %v1743
        %2232 = vmatpush2.bf16.msra.mxu0 %v1742
        %2233 = vmatprep.mubr.bf16.mxu0 %v865
        %2234 = vmatmul.mubr.bf16.gmra.mxu0 %v864
        %v2235 = vpop.f32.mrf.mxu0
        %v2236 = vadd.f32 %v2193, %v2235
        %v2237 = vpop.f32.mrf.mxu0
        %v2238 = vadd.f32 %v2195, %v2237
        %v2239 = vpop.f32.mrf.mxu0
        %v2240 = vadd.f32 %v2197, %v2239
        %v2241 = vpop.f32.mrf.mxu0
        %v2242 = vadd.f32 %v2199, %v2241
        %2243 = vdwg.mxu0
        %2244 = vmatprep.subr.bf16.mxu0 %v1803
        %2245 = vmatpush1.bf16.msra.mxu0 %v1802
        %2246 = vmatprep.subr.bf16.mxu0 %v1799
        %2247 = vmatpush1.bf16.msra.mxu0 %v1798
        %2248 = vmatprep.subr.bf16.mxu0 %v1795
        %2249 = vmatpush1.bf16.msra.mxu0 %v1794
        %2250 = vmatprep.subr.bf16.mxu0 %v1791
        %2251 = vmatpush1.bf16.msra.mxu0 %v1790
        %2252 = vmatprep.subr.bf16.mxu0 %v1787
        %2253 = vmatpush1.bf16.msra.mxu0 %v1786
        %2254 = vmatprep.subr.bf16.mxu0 %v1783
        %2255 = vmatpush1.bf16.msra.mxu0 %v1782
        %2256 = vmatprep.subr.bf16.mxu0 %v1779
        %2257 = vmatpush1.bf16.msra.mxu0 %v1778
        %2258 = vmatprep.subr.bf16.mxu0 %v1775
        %2259 = vmatpush1.bf16.msra.mxu0 %v1774
        %2260 = vmatprep.subr.bf16.mxu0 %v1835
        %2261 = vmatpush2.bf16.msra.mxu0 %v1834
        %2262 = vmatprep.subr.bf16.mxu0 %v1831
        %2263 = vmatpush2.bf16.msra.mxu0 %v1830
        %2264 = vmatprep.subr.bf16.mxu0 %v1827
        %2265 = vmatpush2.bf16.msra.mxu0 %v1826
        %2266 = vmatprep.subr.bf16.mxu0 %v1823
        %2267 = vmatpush2.bf16.msra.mxu0 %v1822
        %2268 = vmatprep.subr.bf16.mxu0 %v1819
        %2269 = vmatpush2.bf16.msra.mxu0 %v1818
        %2270 = vmatprep.subr.bf16.mxu0 %v1815
        %2271 = vmatpush2.bf16.msra.mxu0 %v1814
        %2272 = vmatprep.subr.bf16.mxu0 %v1811
        %2273 = vmatpush2.bf16.msra.mxu0 %v1810
        %2274 = vmatprep.subr.bf16.mxu0 %v1807
        %2275 = vmatpush2.bf16.msra.mxu0 %v1806
        %2276 = vmatprep.mubr.bf16.mxu0 %v867
        %2277 = vmatmul.mubr.bf16.gmra.mxu0 %v866
        %v2278 = vpop.f32.mrf.mxu0
        %v2279 = vadd.f32 %v2236, %v2278
        %v2280 = vpop.f32.mrf.mxu0
        %v2281 = vadd.f32 %v2238, %v2280
        %v2282 = vpop.f32.mrf.mxu0
        %v2283 = vadd.f32 %v2240, %v2282
        %v2284 = vpop.f32.mrf.mxu0
        %v2285 = vadd.f32 %v2242, %v2284
        %2286 = vdwg.mxu0
        %2287 = vmatprep.subr.bf16.mxu0 %v1867
        %2288 = vmatpush1.bf16.msra.mxu0 %v1866
        %2289 = vmatprep.subr.bf16.mxu0 %v1863
        %2290 = vmatpush1.bf16.msra.mxu0 %v1862
        %2291 = vmatprep.subr.bf16.mxu0 %v1859
        %2292 = vmatpush1.bf16.msra.mxu0 %v1858
        %2293 = vmatprep.subr.bf16.mxu0 %v1855
        %2294 = vmatpush1.bf16.msra.mxu0 %v1854
        %2295 = vmatprep.subr.bf16.mxu0 %v1851
        %2296 = vmatpush1.bf16.msra.mxu0 %v1850
        %2297 = vmatprep.subr.bf16.mxu0 %v1847
        %2298 = vmatpush1.bf16.msra.mxu0 %v1846
        %2299 = vmatprep.subr.bf16.mxu0 %v1843
        %2300 = vmatpush1.bf16.msra.mxu0 %v1842
        %2301 = vmatprep.subr.bf16.mxu0 %v1839
        %2302 = vmatpush1.bf16.msra.mxu0 %v1838
        %2303 = vmatprep.subr.bf16.mxu0 %v1899
        %2304 = vmatpush2.bf16.msra.mxu0 %v1898
        %2305 = vmatprep.subr.bf16.mxu0 %v1895
        %2306 = vmatpush2.bf16.msra.mxu0 %v1894
        %2307 = vmatprep.subr.bf16.mxu0 %v1891
        %2308 = vmatpush2.bf16.msra.mxu0 %v1890
        %2309 = vmatprep.subr.bf16.mxu0 %v1887
        %2310 = vmatpush2.bf16.msra.mxu0 %v1886
        %2311 = vmatprep.subr.bf16.mxu0 %v1883
        %2312 = vmatpush2.bf16.msra.mxu0 %v1882
        %2313 = vmatprep.subr.bf16.mxu0 %v1879
        %2314 = vmatpush2.bf16.msra.mxu0 %v1878
        %2315 = vmatprep.subr.bf16.mxu0 %v1875
        %2316 = vmatpush2.bf16.msra.mxu0 %v1874
        %2317 = vmatprep.subr.bf16.mxu0 %v1871
        %2318 = vmatpush2.bf16.msra.mxu0 %v1870
        %2319 = vmatprep.mubr.bf16.mxu0 %v869
        %2320 = vmatmul.mubr.bf16.gmra.mxu0 %v868
        %v2321 = vpop.f32.mrf.mxu0
        %v2322 = vadd.f32 %v2279, %v2321
        %v2323 = vpop.f32.mrf.mxu0
        %v2324 = vadd.f32 %v2281, %v2323
        %v2325 = vpop.f32.mrf.mxu0
        %v2326 = vadd.f32 %v2283, %v2325
        %v2327 = vpop.f32.mrf.mxu0
        %v2328 = vadd.f32 %v2285, %v2327
        %2329 = vdwg.mxu0
        %2330 = vmatprep.subr.bf16.mxu0 %v1677
        %2331 = vmatpush1.bf16.msra.mxu0 %v1676
        %2332 = vmatprep.subr.bf16.mxu0 %v1673
        %2333 = vmatpush1.bf16.msra.mxu0 %v1672
        %2334 = vmatprep.subr.bf16.mxu0 %v1669
        %2335 = vmatpush1.bf16.msra.mxu0 %v1668
        %2336 = vmatprep.subr.bf16.mxu0 %v1665
        %2337 = vmatpush1.bf16.msra.mxu0 %v1664
        %2338 = vmatprep.subr.bf16.mxu0 %v1661
        %2339 = vmatpush1.bf16.msra.mxu0 %v1660
        %2340 = vmatprep.subr.bf16.mxu0 %v1657
        %2341 = vmatpush1.bf16.msra.mxu0 %v1656
        %2342 = vmatprep.subr.bf16.mxu0 %v1653
        %2343 = vmatpush1.bf16.msra.mxu0 %v1652
        %2344 = vmatprep.subr.bf16.mxu0 %v1649
        %2345 = vmatpush1.bf16.msra.mxu0 %v1648
        %2346 = vmatprep.subr.bf16.mxu0 %v1709
        %2347 = vmatpush2.bf16.msra.mxu0 %v1708
        %2348 = vmatprep.subr.bf16.mxu0 %v1705
        %2349 = vmatpush2.bf16.msra.mxu0 %v1704
        %2350 = vmatprep.subr.bf16.mxu0 %v1701
        %2351 = vmatpush2.bf16.msra.mxu0 %v1700
        %2352 = vmatprep.subr.bf16.mxu0 %v1697
        %2353 = vmatpush2.bf16.msra.mxu0 %v1696
        %2354 = vmatprep.subr.bf16.mxu0 %v1693
        %2355 = vmatpush2.bf16.msra.mxu0 %v1692
        %2356 = vmatprep.subr.bf16.mxu0 %v1689
        %2357 = vmatpush2.bf16.msra.mxu0 %v1688
        %2358 = vmatprep.subr.bf16.mxu0 %v1685
        %2359 = vmatpush2.bf16.msra.mxu0 %v1684
        %2360 = vmatprep.subr.bf16.mxu0 %v1681
        %2361 = vmatpush2.bf16.msra.mxu0 %v1680
        %2362 = vmatprep.mubr.bf16.mxu0 %v863
        %2363 = vmatmul.mubr.bf16.gmra.mxu0 %v862
        %v2364 = vpop.f32.mrf.mxu0
        %v2365 = vadd.f32 0.0, %v2364
        %v2366 = vpop.f32.mrf.mxu0
        %v2367 = vadd.f32 0.0, %v2366
        %v2368 = vpop.f32.mrf.mxu0
        %v2369 = vadd.f32 0.0, %v2368
        %v2370 = vpop.f32.mrf.mxu0
        %v2371 = vadd.f32 0.0, %v2370
        %2372 = vdwg.mxu0
        %2373 = vmatprep.subr.bf16.mxu0 %v1741
        %2374 = vmatpush1.bf16.msra.mxu0 %v1740
        %2375 = vmatprep.subr.bf16.mxu0 %v1737
        %2376 = vmatpush1.bf16.msra.mxu0 %v1736
        %2377 = vmatprep.subr.bf16.mxu0 %v1733
        %2378 = vmatpush1.bf16.msra.mxu0 %v1732
        %2379 = vmatprep.subr.bf16.mxu0 %v1729
        %2380 = vmatpush1.bf16.msra.mxu0 %v1728
        %2381 = vmatprep.subr.bf16.mxu0 %v1725
        %2382 = vmatpush1.bf16.msra.mxu0 %v1724
        %2383 = vmatprep.subr.bf16.mxu0 %v1721
        %2384 = vmatpush1.bf16.msra.mxu0 %v1720
        %2385 = vmatprep.subr.bf16.mxu0 %v1717
        %2386 = vmatpush1.bf16.msra.mxu0 %v1716
        %2387 = vmatprep.subr.bf16.mxu0 %v1713
        %2388 = vmatpush1.bf16.msra.mxu0 %v1712
        %2389 = vmatprep.subr.bf16.mxu0 %v1773
        %2390 = vmatpush2.bf16.msra.mxu0 %v1772
        %2391 = vmatprep.subr.bf16.mxu0 %v1769
        %2392 = vmatpush2.bf16.msra.mxu0 %v1768
        %2393 = vmatprep.subr.bf16.mxu0 %v1765
        %2394 = vmatpush2.bf16.msra.mxu0 %v1764
        %2395 = vmatprep.subr.bf16.mxu0 %v1761
        %2396 = vmatpush2.bf16.msra.mxu0 %v1760
        %2397 = vmatprep.subr.bf16.mxu0 %v1757
        %2398 = vmatpush2.bf16.msra.mxu0 %v1756
        %2399 = vmatprep.subr.bf16.mxu0 %v1753
        %2400 = vmatpush2.bf16.msra.mxu0 %v1752
        %2401 = vmatprep.subr.bf16.mxu0 %v1749
        %2402 = vmatpush2.bf16.msra.mxu0 %v1748
        %2403 = vmatprep.subr.bf16.mxu0 %v1745
        %2404 = vmatpush2.bf16.msra.mxu0 %v1744
        %2405 = vmatprep.mubr.bf16.mxu0 %v865
        %2406 = vmatmul.mubr.bf16.gmra.mxu0 %v864
        %v2407 = vpop.f32.mrf.mxu0
        %v2408 = vadd.f32 %v2365, %v2407
        %v2409 = vpop.f32.mrf.mxu0
        %v2410 = vadd.f32 %v2367, %v2409
        %v2411 = vpop.f32.mrf.mxu0
        %v2412 = vadd.f32 %v2369, %v2411
        %v2413 = vpop.f32.mrf.mxu0
        %v2414 = vadd.f32 %v2371, %v2413
        %2415 = vdwg.mxu0
        %2416 = vmatprep.subr.bf16.mxu0 %v1805
        %2417 = vmatpush1.bf16.msra.mxu0 %v1804
        %2418 = vmatprep.subr.bf16.mxu0 %v1801
        %2419 = vmatpush1.bf16.msra.mxu0 %v1800
        %2420 = vmatprep.subr.bf16.mxu0 %v1797
        %2421 = vmatpush1.bf16.msra.mxu0 %v1796
        %2422 = vmatprep.subr.bf16.mxu0 %v1793
        %2423 = vmatpush1.bf16.msra.mxu0 %v1792
        %2424 = vmatprep.subr.bf16.mxu0 %v1789
        %2425 = vmatpush1.bf16.msra.mxu0 %v1788
        %2426 = vmatprep.subr.bf16.mxu0 %v1785
        %2427 = vmatpush1.bf16.msra.mxu0 %v1784
        %2428 = vmatprep.subr.bf16.mxu0 %v1781
        %2429 = vmatpush1.bf16.msra.mxu0 %v1780
        %2430 = vmatprep.subr.bf16.mxu0 %v1777
        %2431 = vmatpush1.bf16.msra.mxu0 %v1776
        %2432 = vmatprep.subr.bf16.mxu0 %v1837
        %2433 = vmatpush2.bf16.msra.mxu0 %v1836
        %2434 = vmatprep.subr.bf16.mxu0 %v1833
        %2435 = vmatpush2.bf16.msra.mxu0 %v1832
        %2436 = vmatprep.subr.bf16.mxu0 %v1829
        %2437 = vmatpush2.bf16.msra.mxu0 %v1828
        %2438 = vmatprep.subr.bf16.mxu0 %v1825
        %2439 = vmatpush2.bf16.msra.mxu0 %v1824
        %2440 = vmatprep.subr.bf16.mxu0 %v1821
        %2441 = vmatpush2.bf16.msra.mxu0 %v1820
        %2442 = vmatprep.subr.bf16.mxu0 %v1817
        %2443 = vmatpush2.bf16.msra.mxu0 %v1816
        %2444 = vmatprep.subr.bf16.mxu0 %v1813
        %2445 = vmatpush2.bf16.msra.mxu0 %v1812
        %2446 = vmatprep.subr.bf16.mxu0 %v1809
        %2447 = vmatpush2.bf16.msra.mxu0 %v1808
        %2448 = vmatprep.mubr.bf16.mxu0 %v867
        %2449 = vmatmul.mubr.bf16.gmra.mxu0 %v866
        %v2450 = vpop.f32.mrf.mxu0
        %v2451 = vadd.f32 %v2408, %v2450
        %v2452 = vpop.f32.mrf.mxu0
        %v2453 = vadd.f32 %v2410, %v2452
        %v2454 = vpop.f32.mrf.mxu0
        %v2455 = vadd.f32 %v2412, %v2454
        %v2456 = vpop.f32.mrf.mxu0
        %v2457 = vadd.f32 %v2414, %v2456
        %2458 = vdwg.mxu0
        %2459 = vmatprep.subr.bf16.mxu0 %v1869
        %2460 = vmatpush1.bf16.msra.mxu0 %v1868
        %2461 = vmatprep.subr.bf16.mxu0 %v1865
        %2462 = vmatpush1.bf16.msra.mxu0 %v1864
        %2463 = vmatprep.subr.bf16.mxu0 %v1861
        %2464 = vmatpush1.bf16.msra.mxu0 %v1860
        %2465 = vmatprep.subr.bf16.mxu0 %v1857
        %2466 = vmatpush1.bf16.msra.mxu0 %v1856
        %2467 = vmatprep.subr.bf16.mxu0 %v1853
        %2468 = vmatpush1.bf16.msra.mxu0 %v1852
        %2469 = vmatprep.subr.bf16.mxu0 %v1849
        %2470 = vmatpush1.bf16.msra.mxu0 %v1848
        %2471 = vmatprep.subr.bf16.mxu0 %v1845
        %2472 = vmatpush1.bf16.msra.mxu0 %v1844
        %2473 = vmatprep.subr.bf16.mxu0 %v1841
        %2474 = vmatpush1.bf16.msra.mxu0 %v1840
        %2475 = vmatprep.subr.bf16.mxu0 %v1901
        %2476 = vmatpush2.bf16.msra.mxu0 %v1900
        %2477 = vmatprep.subr.bf16.mxu0 %v1897
        %2478 = vmatpush2.bf16.msra.mxu0 %v1896
        %2479 = vmatprep.subr.bf16.mxu0 %v1893
        %2480 = vmatpush2.bf16.msra.mxu0 %v1892
        %2481 = vmatprep.subr.bf16.mxu0 %v1889
        %2482 = vmatpush2.bf16.msra.mxu0 %v1888
        %2483 = vmatprep.subr.bf16.mxu0 %v1885
        %2484 = vmatpush2.bf16.msra.mxu0 %v1884
        %2485 = vmatprep.subr.bf16.mxu0 %v1881
        %2486 = vmatpush2.bf16.msra.mxu0 %v1880
        %2487 = vmatprep.subr.bf16.mxu0 %v1877
        %2488 = vmatpush2.bf16.msra.mxu0 %v1876
        %2489 = vmatprep.subr.bf16.mxu0 %v1873
        %2490 = vmatpush2.bf16.msra.mxu0 %v1872
        %2491 = vmatprep.mubr.bf16.mxu0 %v869
        %2492 = vmatmul.mubr.bf16.gmra.mxu0 %v868
        %v2493 = vpop.f32.mrf.mxu0
        %v2494 = vadd.f32 %v2451, %v2493
        %v2495 = vpop.f32.mrf.mxu0
        %v2496 = vadd.f32 %v2453, %v2495
        %v2497 = vpop.f32.mrf.mxu0
        %v2498 = vadd.f32 %v2455, %v2497
        %v2499 = vpop.f32.mrf.mxu0
        %v2500 = vadd.f32 %v2457, %v2499
        %2501 = vdwg.mxu0
        %v2502 = vrot.slane %v2322, 7
        %v2503 = vrot.slane %v2324, 7
        %v2504 = vrot.slane %v2494, 7
        %v2505 = vrot.slane %v2496, 7
        %v2506 = vrot.slane %v2326, 7
        %v2507 = vrot.slane %v2328, 7
        %v2508 = vrot.slane %v2498, 7
        %v2509 = vrot.slane %v2500, 7
        %vm2510 = vcmp.lt.s32.totalorder %v295, 1
        %v2511 = vsel %vm2510, %v2502, %v2506
        %v2512 = vsel %vm2510, %v2503, %v2507
        %v2513 = vsel %vm2510, %v2504, %v2508
        %v2514 = vsel %vm2510, %v2505, %v2509
        %v2515 = vsel %vm2510, %v2506, %v2502
        %v2516 = vsel %vm2510, %v2507, %v2503
        %v2517 = vsel %vm2510, %v2508, %v2504
        %v2518 = vsel %vm2510, %v2509, %v2505
        %v2519 = vsel %vm321, 1, 0
        %v2520 = vsel %vm322, 1, 0
        %vm2521 = vcmp.eq.s32.totalorder %v2519, 1
        %vm2522 = vcmp.eq.s32.totalorder %v2520, 1
        %v2523 = vsel %vm2521, 0.0, %v2515
        %v2524 = vsel %vm2521, 0.0, %v2516
        %v2525 = vsel %vm2521, 0.0, %v2517
        %v2526 = vsel %vm2521, 0.0, %v2518
        %v2527 = vsel %vm2522, 0.0, %v2511
        %v2528 = vsel %vm2522, 0.0, %v2512
        %v2529 = vsel %vm2522, 0.0, %v2513
        %v2530 = vsel %vm2522, 0.0, %v2514
        %v2787 = vunpack.c.l.b16 %v326
        %v2788 = vunpack.c.h.b16 %v326
        %v2789 = vunpack.c.l.b16 %v327
        %v2790 = vunpack.c.h.b16 %v327
        %v2791 = vunpack.c.l.b16 %v328
        %v2792 = vunpack.c.h.b16 %v328
        %v2793 = vunpack.c.l.b16 %v329
        %v2794 = vunpack.c.h.b16 %v329
        %v2795 = vunpack.c.l.b16 %v330
        %v2796 = vunpack.c.h.b16 %v330
        %v2797 = vunpack.c.l.b16 %v331
        %v2798 = vunpack.c.h.b16 %v331
        %v2799 = vunpack.c.l.b16 %v332
        %v2800 = vunpack.c.h.b16 %v332
        %v2801 = vunpack.c.l.b16 %v333
        %v2802 = vunpack.c.h.b16 %v333
        %v2803 = vunpack.c.l.b16 %v334
        %v2804 = vunpack.c.h.b16 %v334
        %v2805 = vunpack.c.l.b16 %v335
        %v2806 = vunpack.c.h.b16 %v335
        %v2807 = vunpack.c.l.b16 %v336
        %v2808 = vunpack.c.h.b16 %v336
        %v2809 = vunpack.c.l.b16 %v337
        %v2810 = vunpack.c.h.b16 %v337
        %v2811 = vunpack.c.l.b16 %v338
        %v2812 = vunpack.c.h.b16 %v338
        %v2813 = vunpack.c.l.b16 %v339
        %v2814 = vunpack.c.h.b16 %v339
        %v2815 = vunpack.c.l.b16 %v340
        %v2816 = vunpack.c.h.b16 %v340
        %v2817 = vunpack.c.l.b16 %v341
        %v2818 = vunpack.c.h.b16 %v341
        %v2819 = vunpack.c.l.b16 %v342
        %v2820 = vunpack.c.h.b16 %v342
        %v2821 = vunpack.c.l.b16 %v343
        %v2822 = vunpack.c.h.b16 %v343
        %v2823 = vunpack.c.l.b16 %v344
        %v2824 = vunpack.c.h.b16 %v344
        %v2825 = vunpack.c.l.b16 %v345
        %v2826 = vunpack.c.h.b16 %v345
        %v2827 = vunpack.c.l.b16 %v346
        %v2828 = vunpack.c.h.b16 %v346
        %v2829 = vunpack.c.l.b16 %v347
        %v2830 = vunpack.c.h.b16 %v347
        %v2831 = vunpack.c.l.b16 %v348
        %v2832 = vunpack.c.h.b16 %v348
        %v2833 = vunpack.c.l.b16 %v349
        %v2834 = vunpack.c.h.b16 %v349
        %v2835 = vunpack.c.l.b16 %v350
        %v2836 = vunpack.c.h.b16 %v350
        %v2837 = vunpack.c.l.b16 %v351
        %v2838 = vunpack.c.h.b16 %v351
        %v2839 = vunpack.c.l.b16 %v352
        %v2840 = vunpack.c.h.b16 %v352
        %v2841 = vunpack.c.l.b16 %v353
        %v2842 = vunpack.c.h.b16 %v353
        %v2843 = vunpack.c.l.b16 %v354
        %v2844 = vunpack.c.h.b16 %v354
        %v2845 = vunpack.c.l.b16 %v355
        %v2846 = vunpack.c.h.b16 %v355
        %v2847 = vunpack.c.l.b16 %v356
        %v2848 = vunpack.c.h.b16 %v356
        %v2849 = vunpack.c.l.b16 %v357
        %v2850 = vunpack.c.h.b16 %v357
        %v2851 = vunpack.c.l.b16 %v358
        %v2852 = vunpack.c.h.b16 %v358
        %v2853 = vunpack.c.l.b16 %v359
        %v2854 = vunpack.c.h.b16 %v359
        %v2855 = vunpack.c.l.b16 %v360
        %v2856 = vunpack.c.h.b16 %v360
        %v2857 = vunpack.c.l.b16 %v361
        %v2858 = vunpack.c.h.b16 %v361
        %v2859 = vunpack.c.l.b16 %v362
        %v2860 = vunpack.c.h.b16 %v362
        %v2861 = vunpack.c.l.b16 %v363
        %v2862 = vunpack.c.h.b16 %v363
        %v2863 = vunpack.c.l.b16 %v364
        %v2864 = vunpack.c.h.b16 %v364
        %v2865 = vunpack.c.l.b16 %v365
        %v2866 = vunpack.c.h.b16 %v365
        %v2867 = vunpack.c.l.b16 %v366
        %v2868 = vunpack.c.h.b16 %v366
        %v2869 = vunpack.c.l.b16 %v367
        %v2870 = vunpack.c.h.b16 %v367
        %v2871 = vunpack.c.l.b16 %v368
        %v2872 = vunpack.c.h.b16 %v368
        %v2873 = vunpack.c.l.b16 %v369
        %v2874 = vunpack.c.h.b16 %v369
        %v2875 = vunpack.c.l.b16 %v370
        %v2876 = vunpack.c.h.b16 %v370
        %v2877 = vunpack.c.l.b16 %v371
        %v2878 = vunpack.c.h.b16 %v371
        %v2879 = vunpack.c.l.b16 %v372
        %v2880 = vunpack.c.h.b16 %v372
        %v2881 = vunpack.c.l.b16 %v373
        %v2882 = vunpack.c.h.b16 %v373
        %v2883 = vunpack.c.l.b16 %v374
        %v2884 = vunpack.c.h.b16 %v374
        %v2885 = vunpack.c.l.b16 %v375
        %v2886 = vunpack.c.h.b16 %v375
        %v2887 = vunpack.c.l.b16 %v376
        %v2888 = vunpack.c.h.b16 %v376
        %v2889 = vunpack.c.l.b16 %v377
        %v2890 = vunpack.c.h.b16 %v377
        %v2891 = vunpack.c.l.b16 %v378
        %v2892 = vunpack.c.h.b16 %v378
        %v2893 = vunpack.c.l.b16 %v379
        %v2894 = vunpack.c.h.b16 %v379
        %v2895 = vunpack.c.l.b16 %v380
        %v2896 = vunpack.c.h.b16 %v380
        %v2897 = vunpack.c.l.b16 %v381
        %v2898 = vunpack.c.h.b16 %v381
        %v2899 = vunpack.c.l.b16 %v382
        %v2900 = vunpack.c.h.b16 %v382
        %v2901 = vunpack.c.l.b16 %v383
        %v2902 = vunpack.c.h.b16 %v383
        %v2903 = vunpack.c.l.b16 %v384
        %v2904 = vunpack.c.h.b16 %v384
        %v2905 = vunpack.c.l.b16 %v385
        %v2906 = vunpack.c.h.b16 %v385
        %v2907 = vunpack.c.l.b16 %v386
        %v2908 = vunpack.c.h.b16 %v386
        %v2909 = vunpack.c.l.b16 %v387
        %v2910 = vunpack.c.h.b16 %v387
        %v2911 = vunpack.c.l.b16 %v388
        %v2912 = vunpack.c.h.b16 %v388
        %v2913 = vunpack.c.l.b16 %v389
        %v2914 = vunpack.c.h.b16 %v389
        %v2915 = vunpack.c.l.b16 %v390
        %v2916 = vunpack.c.h.b16 %v390
        %v2917 = vunpack.c.l.b16 %v391
        %v2918 = vunpack.c.h.b16 %v391
        %v2919 = vunpack.c.l.b16 %v392
        %v2920 = vunpack.c.h.b16 %v392
        %v2921 = vunpack.c.l.b16 %v393
        %v2922 = vunpack.c.h.b16 %v393
        %v2923 = vunpack.c.l.b16 %v394
        %v2924 = vunpack.c.h.b16 %v394
        %v2925 = vunpack.c.l.b16 %v395
        %v2926 = vunpack.c.h.b16 %v395
        %v2927 = vunpack.c.l.b16 %v396
        %v2928 = vunpack.c.h.b16 %v396
        %v2929 = vunpack.c.l.b16 %v397
        %v2930 = vunpack.c.h.b16 %v397
        %v2931 = vunpack.c.l.b16 %v398
        %v2932 = vunpack.c.h.b16 %v398
        %v2933 = vunpack.c.l.b16 %v399
        %v2934 = vunpack.c.h.b16 %v399
        %v2935 = vunpack.c.l.b16 %v400
        %v2936 = vunpack.c.h.b16 %v400
        %v2937 = vunpack.c.l.b16 %v401
        %v2938 = vunpack.c.h.b16 %v401
        %v2939 = vunpack.c.l.b16 %v402
        %v2940 = vunpack.c.h.b16 %v402
        %v2941 = vunpack.c.l.b16 %v403
        %v2942 = vunpack.c.h.b16 %v403
        %v2943 = vunpack.c.l.b16 %v404
        %v2944 = vunpack.c.h.b16 %v404
        %v2945 = vunpack.c.l.b16 %v405
        %v2946 = vunpack.c.h.b16 %v405
        %v2947 = vunpack.c.l.b16 %v406
        %v2948 = vunpack.c.h.b16 %v406
        %v2949 = vunpack.c.l.b16 %v407
        %v2950 = vunpack.c.h.b16 %v407
        %v2951 = vunpack.c.l.b16 %v408
        %v2952 = vunpack.c.h.b16 %v408
        %v2953 = vunpack.c.l.b16 %v409
        %v2954 = vunpack.c.h.b16 %v409
        %v2955 = vunpack.c.l.b16 %v410
        %v2956 = vunpack.c.h.b16 %v410
        %v2957 = vunpack.c.l.b16 %v411
        %v2958 = vunpack.c.h.b16 %v411
        %v2959 = vunpack.c.l.b16 %v412
        %v2960 = vunpack.c.h.b16 %v412
        %v2961 = vunpack.c.l.b16 %v413
        %v2962 = vunpack.c.h.b16 %v413
        %v2963 = vunpack.c.l.b16 %v414
        %v2964 = vunpack.c.h.b16 %v414
        %v2965 = vunpack.c.l.b16 %v415
        %v2966 = vunpack.c.h.b16 %v415
        %v2967 = vunpack.c.l.b16 %v416
        %v2968 = vunpack.c.h.b16 %v416
        %v2969 = vunpack.c.l.b16 %v417
        %v2970 = vunpack.c.h.b16 %v417
        %v2971 = vunpack.c.l.b16 %v418
        %v2972 = vunpack.c.h.b16 %v418
        %v2973 = vunpack.c.l.b16 %v419
        %v2974 = vunpack.c.h.b16 %v419
        %v2975 = vunpack.c.l.b16 %v420
        %v2976 = vunpack.c.h.b16 %v420
        %v2977 = vunpack.c.l.b16 %v421
        %v2978 = vunpack.c.h.b16 %v421
        %v2979 = vunpack.c.l.b16 %v422
        %v2980 = vunpack.c.h.b16 %v422
        %v2981 = vunpack.c.l.b16 %v423
        %v2982 = vunpack.c.h.b16 %v423
        %v2983 = vunpack.c.l.b16 %v424
        %v2984 = vunpack.c.h.b16 %v424
        %v2985 = vunpack.c.l.b16 %v425
        %v2986 = vunpack.c.h.b16 %v425
        %v2987 = vunpack.c.l.b16 %v426
        %v2988 = vunpack.c.h.b16 %v426
        %v2989 = vunpack.c.l.b16 %v427
        %v2990 = vunpack.c.h.b16 %v427
        %v2991 = vunpack.c.l.b16 %v428
        %v2992 = vunpack.c.h.b16 %v428
        %v2993 = vunpack.c.l.b16 %v429
        %v2994 = vunpack.c.h.b16 %v429
        %v2995 = vunpack.c.l.b16 %v430
        %v2996 = vunpack.c.h.b16 %v430
        %v2997 = vunpack.c.l.b16 %v431
        %v2998 = vunpack.c.h.b16 %v431
        %v2999 = vunpack.c.l.b16 %v432
        %v3000 = vunpack.c.h.b16 %v432
        %v3001 = vunpack.c.l.b16 %v433
        %v3002 = vunpack.c.h.b16 %v433
        %v3003 = vunpack.c.l.b16 %v434
        %v3004 = vunpack.c.h.b16 %v434
        %v3005 = vunpack.c.l.b16 %v435
        %v3006 = vunpack.c.h.b16 %v435
        %v3007 = vunpack.c.l.b16 %v436
        %v3008 = vunpack.c.h.b16 %v436
        %v3009 = vunpack.c.l.b16 %v437
        %v3010 = vunpack.c.h.b16 %v437
        %v3011 = vunpack.c.l.b16 %v438
        %v3012 = vunpack.c.h.b16 %v438
        %v3013 = vunpack.c.l.b16 %v439
        %v3014 = vunpack.c.h.b16 %v439
        %v3015 = vunpack.c.l.b16 %v440
        %v3016 = vunpack.c.h.b16 %v440
        %v3017 = vunpack.c.l.b16 %v441
        %v3018 = vunpack.c.h.b16 %v441
        %v3019 = vunpack.c.l.b16 %v442
        %v3020 = vunpack.c.h.b16 %v442
        %v3021 = vunpack.c.l.b16 %v443
        %v3022 = vunpack.c.h.b16 %v443
        %v3023 = vunpack.c.l.b16 %v444
        %v3024 = vunpack.c.h.b16 %v444
        %v3025 = vunpack.c.l.b16 %v445
        %v3026 = vunpack.c.h.b16 %v445
        %v3027 = vunpack.c.l.b16 %v446
        %v3028 = vunpack.c.h.b16 %v446
        %v3029 = vunpack.c.l.b16 %v447
        %v3030 = vunpack.c.h.b16 %v447
        %v3031 = vunpack.c.l.b16 %v448
        %v3032 = vunpack.c.h.b16 %v448
        %v3033 = vunpack.c.l.b16 %v449
        %v3034 = vunpack.c.h.b16 %v449
        %v3035 = vunpack.c.l.b16 %v450
        %v3036 = vunpack.c.h.b16 %v450
        %v3037 = vunpack.c.l.b16 %v451
        %v3038 = vunpack.c.h.b16 %v451
        %v3039 = vunpack.c.l.b16 %v452
        %v3040 = vunpack.c.h.b16 %v452
        %v3041 = vunpack.c.l.b16 %v453
        %v3042 = vunpack.c.h.b16 %v453
        %v3043 = vunpack.c.l.b16 %v454
        %v3044 = vunpack.c.h.b16 %v454
        %v3045 = vunpack.c.l.b16 %v455
        %v3046 = vunpack.c.h.b16 %v455
        %v3047 = vunpack.c.l.b16 %v456
        %v3048 = vunpack.c.h.b16 %v456
        %v3049 = vunpack.c.l.b16 %v457
        %v3050 = vunpack.c.h.b16 %v457
        %v3051 = vunpack.c.l.b16 %v458
        %v3052 = vunpack.c.h.b16 %v458
        %v3053 = vunpack.c.l.b16 %v459
        %v3054 = vunpack.c.h.b16 %v459
        %v3055 = vunpack.c.l.b16 %v460
        %v3056 = vunpack.c.h.b16 %v460
        %v3057 = vunpack.c.l.b16 %v461
        %v3058 = vunpack.c.h.b16 %v461
        %v3059 = vunpack.c.l.b16 %v462
        %v3060 = vunpack.c.h.b16 %v462
        %v3061 = vunpack.c.l.b16 %v463
        %v3062 = vunpack.c.h.b16 %v463
        %v3063 = vunpack.c.l.b16 %v464
        %v3064 = vunpack.c.h.b16 %v464
        %v3065 = vunpack.c.l.b16 %v465
        %v3066 = vunpack.c.h.b16 %v465
        %v3067 = vunpack.c.l.b16 %v466
        %v3068 = vunpack.c.h.b16 %v466
        %v3069 = vunpack.c.l.b16 %v467
        %v3070 = vunpack.c.h.b16 %v467
        %v3071 = vunpack.c.l.b16 %v468
        %v3072 = vunpack.c.h.b16 %v468
        %v3073 = vunpack.c.l.b16 %v469
        %v3074 = vunpack.c.h.b16 %v469
        %v3075 = vunpack.c.l.b16 %v470
        %v3076 = vunpack.c.h.b16 %v470
        %v3077 = vunpack.c.l.b16 %v471
        %v3078 = vunpack.c.h.b16 %v471
        %v3079 = vunpack.c.l.b16 %v472
        %v3080 = vunpack.c.h.b16 %v472
        %v3081 = vunpack.c.l.b16 %v473
        %v3082 = vunpack.c.h.b16 %v473
        %v3083 = vunpack.c.l.b16 %v474
        %v3084 = vunpack.c.h.b16 %v474
        %v3085 = vunpack.c.l.b16 %v475
        %v3086 = vunpack.c.h.b16 %v475
        %v3087 = vunpack.c.l.b16 %v476
        %v3088 = vunpack.c.h.b16 %v476
        %v3089 = vunpack.c.l.b16 %v477
        %v3090 = vunpack.c.h.b16 %v477
        %v3091 = vunpack.c.l.b16 %v478
        %v3092 = vunpack.c.h.b16 %v478
        %v3093 = vunpack.c.l.b16 %v479
        %v3094 = vunpack.c.h.b16 %v479
        %v3095 = vunpack.c.l.b16 %v480
        %v3096 = vunpack.c.h.b16 %v480
        %v3097 = vunpack.c.l.b16 %v481
        %v3098 = vunpack.c.h.b16 %v481
        %v3099 = vunpack.c.l.b16 %v482
        %v3100 = vunpack.c.h.b16 %v482
        %v3101 = vunpack.c.l.b16 %v483
        %v3102 = vunpack.c.h.b16 %v483
        %v3103 = vunpack.c.l.b16 %v484
        %v3104 = vunpack.c.h.b16 %v484
        %v3105 = vunpack.c.l.b16 %v485
        %v3106 = vunpack.c.h.b16 %v485
        %v3107 = vunpack.c.l.b16 %v486
        %v3108 = vunpack.c.h.b16 %v486
        %v3109 = vunpack.c.l.b16 %v487
        %v3110 = vunpack.c.h.b16 %v487
        %v3111 = vunpack.c.l.b16 %v488
        %v3112 = vunpack.c.h.b16 %v488
        %v3113 = vunpack.c.l.b16 %v489
        %v3114 = vunpack.c.h.b16 %v489
        %v3115 = vunpack.c.l.b16 %v490
        %v3116 = vunpack.c.h.b16 %v490
        %v3117 = vunpack.c.l.b16 %v491
        %v3118 = vunpack.c.h.b16 %v491
        %v3119 = vunpack.c.l.b16 %v492
        %v3120 = vunpack.c.h.b16 %v492
        %v3121 = vunpack.c.l.b16 %v493
        %v3122 = vunpack.c.h.b16 %v493
        %v3123 = vunpack.c.l.b16 %v494
        %v3124 = vunpack.c.h.b16 %v494
        %v3125 = vunpack.c.l.b16 %v495
        %v3126 = vunpack.c.h.b16 %v495
        %v3127 = vunpack.c.l.b16 %v496
        %v3128 = vunpack.c.h.b16 %v496
        %v3129 = vunpack.c.l.b16 %v497
        %v3130 = vunpack.c.h.b16 %v497
        %v3131 = vunpack.c.l.b16 %v498
        %v3132 = vunpack.c.h.b16 %v498
        %v3133 = vunpack.c.l.b16 %v499
        %v3134 = vunpack.c.h.b16 %v499
        %v3135 = vunpack.c.l.b16 %v500
        %v3136 = vunpack.c.h.b16 %v500
        %v3137 = vunpack.c.l.b16 %v501
        %v3138 = vunpack.c.h.b16 %v501
        %v3139 = vunpack.c.l.b16 %v502
        %v3140 = vunpack.c.h.b16 %v502
        %v3141 = vunpack.c.l.b16 %v503
        %v3142 = vunpack.c.h.b16 %v503
        %v3143 = vunpack.c.l.b16 %v504
        %v3144 = vunpack.c.h.b16 %v504
        %v3145 = vunpack.c.l.b16 %v505
        %v3146 = vunpack.c.h.b16 %v505
        %v3147 = vunpack.c.l.b16 %v506
        %v3148 = vunpack.c.h.b16 %v506
        %v3149 = vunpack.c.l.b16 %v507
        %v3150 = vunpack.c.h.b16 %v507
        %v3151 = vunpack.c.l.b16 %v508
        %v3152 = vunpack.c.h.b16 %v508
        %v3153 = vunpack.c.l.b16 %v509
        %v3154 = vunpack.c.h.b16 %v509
        %v3155 = vunpack.c.l.b16 %v510
        %v3156 = vunpack.c.h.b16 %v510
        %v3157 = vunpack.c.l.b16 %v511
        %v3158 = vunpack.c.h.b16 %v511
        %v3159 = vunpack.c.l.b16 %v512
        %v3160 = vunpack.c.h.b16 %v512
        %v3161 = vunpack.c.l.b16 %v513
        %v3162 = vunpack.c.h.b16 %v513
        %v3163 = vunpack.c.l.b16 %v514
        %v3164 = vunpack.c.h.b16 %v514
        %v3165 = vunpack.c.l.b16 %v515
        %v3166 = vunpack.c.h.b16 %v515
        %v3167 = vunpack.c.l.b16 %v516
        %v3168 = vunpack.c.h.b16 %v516
        %v3169 = vunpack.c.l.b16 %v517
        %v3170 = vunpack.c.h.b16 %v517
        %v3171 = vunpack.c.l.b16 %v518
        %v3172 = vunpack.c.h.b16 %v518
        %v3173 = vunpack.c.l.b16 %v519
        %v3174 = vunpack.c.h.b16 %v519
        %v3175 = vunpack.c.l.b16 %v520
        %v3176 = vunpack.c.h.b16 %v520
        %v3177 = vunpack.c.l.b16 %v521
        %v3178 = vunpack.c.h.b16 %v521
        %v3179 = vunpack.c.l.b16 %v522
        %v3180 = vunpack.c.h.b16 %v522
        %v3181 = vunpack.c.l.b16 %v523
        %v3182 = vunpack.c.h.b16 %v523
        %v3183 = vunpack.c.l.b16 %v524
        %v3184 = vunpack.c.h.b16 %v524
        %v3185 = vunpack.c.l.b16 %v525
        %v3186 = vunpack.c.h.b16 %v525
        %v3187 = vunpack.c.l.b16 %v526
        %v3188 = vunpack.c.h.b16 %v526
        %v3189 = vunpack.c.l.b16 %v527
        %v3190 = vunpack.c.h.b16 %v527
        %v3191 = vunpack.c.l.b16 %v528
        %v3192 = vunpack.c.h.b16 %v528
        %v3193 = vunpack.c.l.b16 %v529
        %v3194 = vunpack.c.h.b16 %v529
        %v3195 = vunpack.c.l.b16 %v530
        %v3196 = vunpack.c.h.b16 %v530
        %v3197 = vunpack.c.l.b16 %v531
        %v3198 = vunpack.c.h.b16 %v531
        %v3199 = vunpack.c.l.b16 %v532
        %v3200 = vunpack.c.h.b16 %v532
        %v3201 = vunpack.c.l.b16 %v533
        %v3202 = vunpack.c.h.b16 %v533
        %v3203 = vunpack.c.l.b16 %v534
        %v3204 = vunpack.c.h.b16 %v534
        %v3205 = vunpack.c.l.b16 %v535
        %v3206 = vunpack.c.h.b16 %v535
        %v3207 = vunpack.c.l.b16 %v536
        %v3208 = vunpack.c.h.b16 %v536
        %v3209 = vunpack.c.l.b16 %v537
        %v3210 = vunpack.c.h.b16 %v537
        %v3211 = vunpack.c.l.b16 %v538
        %v3212 = vunpack.c.h.b16 %v538
        %v3213 = vunpack.c.l.b16 %v539
        %v3214 = vunpack.c.h.b16 %v539
        %v3215 = vunpack.c.l.b16 %v540
        %v3216 = vunpack.c.h.b16 %v540
        %v3217 = vunpack.c.l.b16 %v541
        %v3218 = vunpack.c.h.b16 %v541
        %v3219 = vunpack.c.l.b16 %v542
        %v3220 = vunpack.c.h.b16 %v542
        %v3221 = vunpack.c.l.b16 %v543
        %v3222 = vunpack.c.h.b16 %v543
        %v3223 = vunpack.c.l.b16 %v544
        %v3224 = vunpack.c.h.b16 %v544
        %v3225 = vunpack.c.l.b16 %v545
        %v3226 = vunpack.c.h.b16 %v545
        %v3227 = vunpack.c.l.b16 %v546
        %v3228 = vunpack.c.h.b16 %v546
        %v3229 = vunpack.c.l.b16 %v547
        %v3230 = vunpack.c.h.b16 %v547
        %v3231 = vunpack.c.l.b16 %v548
        %v3232 = vunpack.c.h.b16 %v548
        %v3233 = vunpack.c.l.b16 %v549
        %v3234 = vunpack.c.h.b16 %v549
        %v3235 = vunpack.c.l.b16 %v550
        %v3236 = vunpack.c.h.b16 %v550
        %v3237 = vunpack.c.l.b16 %v551
        %v3238 = vunpack.c.h.b16 %v551
        %v3239 = vunpack.c.l.b16 %v552
        %v3240 = vunpack.c.h.b16 %v552
        %v3241 = vunpack.c.l.b16 %v553
        %v3242 = vunpack.c.h.b16 %v553
        %v3243 = vunpack.c.l.b16 %v554
        %v3244 = vunpack.c.h.b16 %v554
        %v3245 = vunpack.c.l.b16 %v555
        %v3246 = vunpack.c.h.b16 %v555
        %v3247 = vunpack.c.l.b16 %v556
        %v3248 = vunpack.c.h.b16 %v556
        %v3249 = vunpack.c.l.b16 %v557
        %v3250 = vunpack.c.h.b16 %v557
        %v3251 = vunpack.c.l.b16 %v558
        %v3252 = vunpack.c.h.b16 %v558
        %v3253 = vunpack.c.l.b16 %v559
        %v3254 = vunpack.c.h.b16 %v559
        %v3255 = vunpack.c.l.b16 %v560
        %v3256 = vunpack.c.h.b16 %v560
        %v3257 = vunpack.c.l.b16 %v561
        %v3258 = vunpack.c.h.b16 %v561
        %v3259 = vunpack.c.l.b16 %v562
        %v3260 = vunpack.c.h.b16 %v562
        %v3261 = vunpack.c.l.b16 %v563
        %v3262 = vunpack.c.h.b16 %v563
        %v3263 = vunpack.c.l.b16 %v564
        %v3264 = vunpack.c.h.b16 %v564
        %v3265 = vunpack.c.l.b16 %v565
        %v3266 = vunpack.c.h.b16 %v565
        %v3267 = vunpack.c.l.b16 %v566
        %v3268 = vunpack.c.h.b16 %v566
        %v3269 = vunpack.c.l.b16 %v567
        %v3270 = vunpack.c.h.b16 %v567
        %v3271 = vunpack.c.l.b16 %v568
        %v3272 = vunpack.c.h.b16 %v568
        %v3273 = vunpack.c.l.b16 %v569
        %v3274 = vunpack.c.h.b16 %v569
        %v3275 = vunpack.c.l.b16 %v570
        %v3276 = vunpack.c.h.b16 %v570
        %v3277 = vunpack.c.l.b16 %v571
        %v3278 = vunpack.c.h.b16 %v571
        %v3279 = vunpack.c.l.b16 %v572
        %v3280 = vunpack.c.h.b16 %v572
        %v3281 = vunpack.c.l.b16 %v573
        %v3282 = vunpack.c.h.b16 %v573
        %v3283 = vunpack.c.l.b16 %v574
        %v3284 = vunpack.c.h.b16 %v574
        %v3285 = vunpack.c.l.b16 %v575
        %v3286 = vunpack.c.h.b16 %v575
        %v3287 = vunpack.c.l.b16 %v576
        %v3288 = vunpack.c.h.b16 %v576
        %v3289 = vunpack.c.l.b16 %v577
        %v3290 = vunpack.c.h.b16 %v577
        %v3291 = vunpack.c.l.b16 %v578
        %v3292 = vunpack.c.h.b16 %v578
        %v3293 = vunpack.c.l.b16 %v579
        %v3294 = vunpack.c.h.b16 %v579
        %v3295 = vunpack.c.l.b16 %v580
        %v3296 = vunpack.c.h.b16 %v580
        %v3297 = vunpack.c.l.b16 %v581
        %v3298 = vunpack.c.h.b16 %v581
        %v3299 = vpack.c.b16 %v2791, %v2787
        %v3300 = vpack.c.b16 %v2792, %v2788
        %v3301 = vpack.c.b16 %v2793, %v2789
        %v3302 = vpack.c.b16 %v2794, %v2790
        %v3303 = vpack.c.b16 %v2799, %v2795
        %v3304 = vpack.c.b16 %v2800, %v2796
        %v3305 = vpack.c.b16 %v2801, %v2797
        %v3306 = vpack.c.b16 %v2802, %v2798
        %v3307 = vpack.c.b16 %v2807, %v2803
        %v3308 = vpack.c.b16 %v2808, %v2804
        %v3309 = vpack.c.b16 %v2809, %v2805
        %v3310 = vpack.c.b16 %v2810, %v2806
        %v3311 = vpack.c.b16 %v2815, %v2811
        %v3312 = vpack.c.b16 %v2816, %v2812
        %v3313 = vpack.c.b16 %v2817, %v2813
        %v3314 = vpack.c.b16 %v2818, %v2814
        %v3315 = vpack.c.b16 %v2823, %v2819
        %v3316 = vpack.c.b16 %v2824, %v2820
        %v3317 = vpack.c.b16 %v2825, %v2821
        %v3318 = vpack.c.b16 %v2826, %v2822
        %v3319 = vpack.c.b16 %v2831, %v2827
        %v3320 = vpack.c.b16 %v2832, %v2828
        %v3321 = vpack.c.b16 %v2833, %v2829
        %v3322 = vpack.c.b16 %v2834, %v2830
        %v3323 = vpack.c.b16 %v2839, %v2835
        %v3324 = vpack.c.b16 %v2840, %v2836
        %v3325 = vpack.c.b16 %v2841, %v2837
        %v3326 = vpack.c.b16 %v2842, %v2838
        %v3327 = vpack.c.b16 %v2847, %v2843
        %v3328 = vpack.c.b16 %v2848, %v2844
        %v3329 = vpack.c.b16 %v2849, %v2845
        %v3330 = vpack.c.b16 %v2850, %v2846
        %v3331 = vpack.c.b16 %v2855, %v2851
        %v3332 = vpack.c.b16 %v2856, %v2852
        %v3333 = vpack.c.b16 %v2857, %v2853
        %v3334 = vpack.c.b16 %v2858, %v2854
        %v3335 = vpack.c.b16 %v2863, %v2859
        %v3336 = vpack.c.b16 %v2864, %v2860
        %v3337 = vpack.c.b16 %v2865, %v2861
        %v3338 = vpack.c.b16 %v2866, %v2862
        %v3339 = vpack.c.b16 %v2871, %v2867
        %v3340 = vpack.c.b16 %v2872, %v2868
        %v3341 = vpack.c.b16 %v2873, %v2869
        %v3342 = vpack.c.b16 %v2874, %v2870
        %v3343 = vpack.c.b16 %v2879, %v2875
        %v3344 = vpack.c.b16 %v2880, %v2876
        %v3345 = vpack.c.b16 %v2881, %v2877
        %v3346 = vpack.c.b16 %v2882, %v2878
        %v3347 = vpack.c.b16 %v2887, %v2883
        %v3348 = vpack.c.b16 %v2888, %v2884
        %v3349 = vpack.c.b16 %v2889, %v2885
        %v3350 = vpack.c.b16 %v2890, %v2886
        %v3351 = vpack.c.b16 %v2895, %v2891
        %v3352 = vpack.c.b16 %v2896, %v2892
        %v3353 = vpack.c.b16 %v2897, %v2893
        %v3354 = vpack.c.b16 %v2898, %v2894
        %v3355 = vpack.c.b16 %v2903, %v2899
        %v3356 = vpack.c.b16 %v2904, %v2900
        %v3357 = vpack.c.b16 %v2905, %v2901
        %v3358 = vpack.c.b16 %v2906, %v2902
        %v3359 = vpack.c.b16 %v2911, %v2907
        %v3360 = vpack.c.b16 %v2912, %v2908
        %v3361 = vpack.c.b16 %v2913, %v2909
        %v3362 = vpack.c.b16 %v2914, %v2910
        %v3363 = vpack.c.b16 %v2919, %v2915
        %v3364 = vpack.c.b16 %v2920, %v2916
        %v3365 = vpack.c.b16 %v2921, %v2917
        %v3366 = vpack.c.b16 %v2922, %v2918
        %v3367 = vpack.c.b16 %v2927, %v2923
        %v3368 = vpack.c.b16 %v2928, %v2924
        %v3369 = vpack.c.b16 %v2929, %v2925
        %v3370 = vpack.c.b16 %v2930, %v2926
        %v3371 = vpack.c.b16 %v2935, %v2931
        %v3372 = vpack.c.b16 %v2936, %v2932
        %v3373 = vpack.c.b16 %v2937, %v2933
        %v3374 = vpack.c.b16 %v2938, %v2934
        %v3375 = vpack.c.b16 %v2943, %v2939
        %v3376 = vpack.c.b16 %v2944, %v2940
        %v3377 = vpack.c.b16 %v2945, %v2941
        %v3378 = vpack.c.b16 %v2946, %v2942
        %v3379 = vpack.c.b16 %v2951, %v2947
        %v3380 = vpack.c.b16 %v2952, %v2948
        %v3381 = vpack.c.b16 %v2953, %v2949
        %v3382 = vpack.c.b16 %v2954, %v2950
        %v3383 = vpack.c.b16 %v2959, %v2955
        %v3384 = vpack.c.b16 %v2960, %v2956
        %v3385 = vpack.c.b16 %v2961, %v2957
        %v3386 = vpack.c.b16 %v2962, %v2958
        %v3387 = vpack.c.b16 %v2967, %v2963
        %v3388 = vpack.c.b16 %v2968, %v2964
        %v3389 = vpack.c.b16 %v2969, %v2965
        %v3390 = vpack.c.b16 %v2970, %v2966
        %v3391 = vpack.c.b16 %v2975, %v2971
        %v3392 = vpack.c.b16 %v2976, %v2972
        %v3393 = vpack.c.b16 %v2977, %v2973
        %v3394 = vpack.c.b16 %v2978, %v2974
        %v3395 = vpack.c.b16 %v2983, %v2979
        %v3396 = vpack.c.b16 %v2984, %v2980
        %v3397 = vpack.c.b16 %v2985, %v2981
        %v3398 = vpack.c.b16 %v2986, %v2982
        %v3399 = vpack.c.b16 %v2991, %v2987
        %v3400 = vpack.c.b16 %v2992, %v2988
        %v3401 = vpack.c.b16 %v2993, %v2989
        %v3402 = vpack.c.b16 %v2994, %v2990
        %v3403 = vpack.c.b16 %v2999, %v2995
        %v3404 = vpack.c.b16 %v3000, %v2996
        %v3405 = vpack.c.b16 %v3001, %v2997
        %v3406 = vpack.c.b16 %v3002, %v2998
        %v3407 = vpack.c.b16 %v3007, %v3003
        %v3408 = vpack.c.b16 %v3008, %v3004
        %v3409 = vpack.c.b16 %v3009, %v3005
        %v3410 = vpack.c.b16 %v3010, %v3006
        %v3411 = vpack.c.b16 %v3015, %v3011
        %v3412 = vpack.c.b16 %v3016, %v3012
        %v3413 = vpack.c.b16 %v3017, %v3013
        %v3414 = vpack.c.b16 %v3018, %v3014
        %v3415 = vpack.c.b16 %v3023, %v3019
        %v3416 = vpack.c.b16 %v3024, %v3020
        %v3417 = vpack.c.b16 %v3025, %v3021
        %v3418 = vpack.c.b16 %v3026, %v3022
        %v3419 = vpack.c.b16 %v3031, %v3027
        %v3420 = vpack.c.b16 %v3032, %v3028
        %v3421 = vpack.c.b16 %v3033, %v3029
        %v3422 = vpack.c.b16 %v3034, %v3030
        %v3423 = vpack.c.b16 %v3039, %v3035
        %v3424 = vpack.c.b16 %v3040, %v3036
        %v3425 = vpack.c.b16 %v3041, %v3037
        %v3426 = vpack.c.b16 %v3042, %v3038
        %v3427 = vpack.c.b16 %v3047, %v3043
        %v3428 = vpack.c.b16 %v3048, %v3044
        %v3429 = vpack.c.b16 %v3049, %v3045
        %v3430 = vpack.c.b16 %v3050, %v3046
        %v3431 = vpack.c.b16 %v3055, %v3051
        %v3432 = vpack.c.b16 %v3056, %v3052
        %v3433 = vpack.c.b16 %v3057, %v3053
        %v3434 = vpack.c.b16 %v3058, %v3054
        %v3435 = vpack.c.b16 %v3063, %v3059
        %v3436 = vpack.c.b16 %v3064, %v3060
        %v3437 = vpack.c.b16 %v3065, %v3061
        %v3438 = vpack.c.b16 %v3066, %v3062
        %v3439 = vpack.c.b16 %v3071, %v3067
        %v3440 = vpack.c.b16 %v3072, %v3068
        %v3441 = vpack.c.b16 %v3073, %v3069
        %v3442 = vpack.c.b16 %v3074, %v3070
        %v3443 = vpack.c.b16 %v3079, %v3075
        %v3444 = vpack.c.b16 %v3080, %v3076
        %v3445 = vpack.c.b16 %v3081, %v3077
        %v3446 = vpack.c.b16 %v3082, %v3078
        %v3447 = vpack.c.b16 %v3087, %v3083
        %v3448 = vpack.c.b16 %v3088, %v3084
        %v3449 = vpack.c.b16 %v3089, %v3085
        %v3450 = vpack.c.b16 %v3090, %v3086
        %v3451 = vpack.c.b16 %v3095, %v3091
        %v3452 = vpack.c.b16 %v3096, %v3092
        %v3453 = vpack.c.b16 %v3097, %v3093
        %v3454 = vpack.c.b16 %v3098, %v3094
        %v3455 = vpack.c.b16 %v3103, %v3099
        %v3456 = vpack.c.b16 %v3104, %v3100
        %v3457 = vpack.c.b16 %v3105, %v3101
        %v3458 = vpack.c.b16 %v3106, %v3102
        %v3459 = vpack.c.b16 %v3111, %v3107
        %v3460 = vpack.c.b16 %v3112, %v3108
        %v3461 = vpack.c.b16 %v3113, %v3109
        %v3462 = vpack.c.b16 %v3114, %v3110
        %v3463 = vpack.c.b16 %v3119, %v3115
        %v3464 = vpack.c.b16 %v3120, %v3116
        %v3465 = vpack.c.b16 %v3121, %v3117
        %v3466 = vpack.c.b16 %v3122, %v3118
        %v3467 = vpack.c.b16 %v3127, %v3123
        %v3468 = vpack.c.b16 %v3128, %v3124
        %v3469 = vpack.c.b16 %v3129, %v3125
        %v3470 = vpack.c.b16 %v3130, %v3126
        %v3471 = vpack.c.b16 %v3135, %v3131
        %v3472 = vpack.c.b16 %v3136, %v3132
        %v3473 = vpack.c.b16 %v3137, %v3133
        %v3474 = vpack.c.b16 %v3138, %v3134
        %v3475 = vpack.c.b16 %v3143, %v3139
        %v3476 = vpack.c.b16 %v3144, %v3140
        %v3477 = vpack.c.b16 %v3145, %v3141
        %v3478 = vpack.c.b16 %v3146, %v3142
        %v3479 = vpack.c.b16 %v3151, %v3147
        %v3480 = vpack.c.b16 %v3152, %v3148
        %v3481 = vpack.c.b16 %v3153, %v3149
        %v3482 = vpack.c.b16 %v3154, %v3150
        %v3483 = vpack.c.b16 %v3159, %v3155
        %v3484 = vpack.c.b16 %v3160, %v3156
        %v3485 = vpack.c.b16 %v3161, %v3157
        %v3486 = vpack.c.b16 %v3162, %v3158
        %v3487 = vpack.c.b16 %v3167, %v3163
        %v3488 = vpack.c.b16 %v3168, %v3164
        %v3489 = vpack.c.b16 %v3169, %v3165
        %v3490 = vpack.c.b16 %v3170, %v3166
        %v3491 = vpack.c.b16 %v3175, %v3171
        %v3492 = vpack.c.b16 %v3176, %v3172
        %v3493 = vpack.c.b16 %v3177, %v3173
        %v3494 = vpack.c.b16 %v3178, %v3174
        %v3495 = vpack.c.b16 %v3183, %v3179
        %v3496 = vpack.c.b16 %v3184, %v3180
        %v3497 = vpack.c.b16 %v3185, %v3181
        %v3498 = vpack.c.b16 %v3186, %v3182
        %v3499 = vpack.c.b16 %v3191, %v3187
        %v3500 = vpack.c.b16 %v3192, %v3188
        %v3501 = vpack.c.b16 %v3193, %v3189
        %v3502 = vpack.c.b16 %v3194, %v3190
        %v3503 = vpack.c.b16 %v3199, %v3195
        %v3504 = vpack.c.b16 %v3200, %v3196
        %v3505 = vpack.c.b16 %v3201, %v3197
        %v3506 = vpack.c.b16 %v3202, %v3198
        %v3507 = vpack.c.b16 %v3207, %v3203
        %v3508 = vpack.c.b16 %v3208, %v3204
        %v3509 = vpack.c.b16 %v3209, %v3205
        %v3510 = vpack.c.b16 %v3210, %v3206
        %v3511 = vpack.c.b16 %v3215, %v3211
        %v3512 = vpack.c.b16 %v3216, %v3212
        %v3513 = vpack.c.b16 %v3217, %v3213
        %v3514 = vpack.c.b16 %v3218, %v3214
        %v3515 = vpack.c.b16 %v3223, %v3219
        %v3516 = vpack.c.b16 %v3224, %v3220
        %v3517 = vpack.c.b16 %v3225, %v3221
        %v3518 = vpack.c.b16 %v3226, %v3222
        %v3519 = vpack.c.b16 %v3231, %v3227
        %v3520 = vpack.c.b16 %v3232, %v3228
        %v3521 = vpack.c.b16 %v3233, %v3229
        %v3522 = vpack.c.b16 %v3234, %v3230
        %v3523 = vpack.c.b16 %v3239, %v3235
        %v3524 = vpack.c.b16 %v3240, %v3236
        %v3525 = vpack.c.b16 %v3241, %v3237
        %v3526 = vpack.c.b16 %v3242, %v3238
        %v3527 = vpack.c.b16 %v3247, %v3243
        %v3528 = vpack.c.b16 %v3248, %v3244
        %v3529 = vpack.c.b16 %v3249, %v3245
        %v3530 = vpack.c.b16 %v3250, %v3246
        %v3531 = vpack.c.b16 %v3255, %v3251
        %v3532 = vpack.c.b16 %v3256, %v3252
        %v3533 = vpack.c.b16 %v3257, %v3253
        %v3534 = vpack.c.b16 %v3258, %v3254
        %v3535 = vpack.c.b16 %v3263, %v3259
        %v3536 = vpack.c.b16 %v3264, %v3260
        %v3537 = vpack.c.b16 %v3265, %v3261
        %v3538 = vpack.c.b16 %v3266, %v3262
        %v3539 = vpack.c.b16 %v3271, %v3267
        %v3540 = vpack.c.b16 %v3272, %v3268
        %v3541 = vpack.c.b16 %v3273, %v3269
        %v3542 = vpack.c.b16 %v3274, %v3270
        %v3543 = vpack.c.b16 %v3279, %v3275
        %v3544 = vpack.c.b16 %v3280, %v3276
        %v3545 = vpack.c.b16 %v3281, %v3277
        %v3546 = vpack.c.b16 %v3282, %v3278
        %v3547 = vpack.c.b16 %v3287, %v3283
        %v3548 = vpack.c.b16 %v3288, %v3284
        %v3549 = vpack.c.b16 %v3289, %v3285
        %v3550 = vpack.c.b16 %v3290, %v3286
        %v3551 = vpack.c.b16 %v3295, %v3291
        %v3552 = vpack.c.b16 %v3296, %v3292
        %v3553 = vpack.c.b16 %v3297, %v3293
        %v3554 = vpack.c.b16 %v3298, %v3294
        %3811 = vmatprep.subr.bf16.mxu0 %v3328
        %3812 = vmatpush1.bf16.msra.mxu0 %v3327
        %3813 = vmatprep.subr.bf16.mxu0 %v3324
        %3814 = vmatpush1.bf16.msra.mxu0 %v3323
        %3815 = vmatprep.subr.bf16.mxu0 %v3320
        %3816 = vmatpush1.bf16.msra.mxu0 %v3319
        %3817 = vmatprep.subr.bf16.mxu0 %v3316
        %3818 = vmatpush1.bf16.msra.mxu0 %v3315
        %3819 = vmatprep.subr.bf16.mxu0 %v3312
        %3820 = vmatpush1.bf16.msra.mxu0 %v3311
        %3821 = vmatprep.subr.bf16.mxu0 %v3308
        %3822 = vmatpush1.bf16.msra.mxu0 %v3307
        %3823 = vmatprep.subr.bf16.mxu0 %v3304
        %3824 = vmatpush1.bf16.msra.mxu0 %v3303
        %3825 = vmatprep.subr.bf16.mxu0 %v3300
        %3826 = vmatpush1.bf16.msra.mxu0 %v3299
        %3827 = vmatprep.subr.bf16.mxu0 %v3360
        %3828 = vmatpush2.bf16.msra.mxu0 %v3359
        %3829 = vmatprep.subr.bf16.mxu0 %v3356
        %3830 = vmatpush2.bf16.msra.mxu0 %v3355
        %3831 = vmatprep.subr.bf16.mxu0 %v3352
        %3832 = vmatpush2.bf16.msra.mxu0 %v3351
        %3833 = vmatprep.subr.bf16.mxu0 %v3348
        %3834 = vmatpush2.bf16.msra.mxu0 %v3347
        %3835 = vmatprep.subr.bf16.mxu0 %v3344
        %3836 = vmatpush2.bf16.msra.mxu0 %v3343
        %3837 = vmatprep.subr.bf16.mxu0 %v3340
        %3838 = vmatpush2.bf16.msra.mxu0 %v3339
        %3839 = vmatprep.subr.bf16.mxu0 %v3336
        %3840 = vmatpush2.bf16.msra.mxu0 %v3335
        %3841 = vmatprep.subr.bf16.mxu0 %v3332
        %3842 = vmatpush2.bf16.msra.mxu0 %v3331
        %3843 = vmatprep.mubr.bf16.mxu0 %v863
        %3844 = vmatmul.mubr.bf16.gmra.mxu0 %v862
        %v3845 = vpop.f32.mrf.mxu0
        %v3846 = vadd.f32 %v2523, %v3845
        %v3847 = vpop.f32.mrf.mxu0
        %v3848 = vadd.f32 %v2524, %v3847
        %v3849 = vpop.f32.mrf.mxu0
        %v3850 = vadd.f32 %v2527, %v3849
        %v3851 = vpop.f32.mrf.mxu0
        %v3852 = vadd.f32 %v2528, %v3851
        %3853 = vdwg.mxu0
        %3854 = vmatprep.subr.bf16.mxu0 %v3392
        %3855 = vmatpush1.bf16.msra.mxu0 %v3391
        %3856 = vmatprep.subr.bf16.mxu0 %v3388
        %3857 = vmatpush1.bf16.msra.mxu0 %v3387
        %3858 = vmatprep.subr.bf16.mxu0 %v3384
        %3859 = vmatpush1.bf16.msra.mxu0 %v3383
        %3860 = vmatprep.subr.bf16.mxu0 %v3380
        %3861 = vmatpush1.bf16.msra.mxu0 %v3379
        %3862 = vmatprep.subr.bf16.mxu0 %v3376
        %3863 = vmatpush1.bf16.msra.mxu0 %v3375
        %3864 = vmatprep.subr.bf16.mxu0 %v3372
        %3865 = vmatpush1.bf16.msra.mxu0 %v3371
        %3866 = vmatprep.subr.bf16.mxu0 %v3368
        %3867 = vmatpush1.bf16.msra.mxu0 %v3367
        %3868 = vmatprep.subr.bf16.mxu0 %v3364
        %3869 = vmatpush1.bf16.msra.mxu0 %v3363
        %3870 = vmatprep.subr.bf16.mxu0 %v3424
        %3871 = vmatpush2.bf16.msra.mxu0 %v3423
        %3872 = vmatprep.subr.bf16.mxu0 %v3420
        %3873 = vmatpush2.bf16.msra.mxu0 %v3419
        %3874 = vmatprep.subr.bf16.mxu0 %v3416
        %3875 = vmatpush2.bf16.msra.mxu0 %v3415
        %3876 = vmatprep.subr.bf16.mxu0 %v3412
        %3877 = vmatpush2.bf16.msra.mxu0 %v3411
        %3878 = vmatprep.subr.bf16.mxu0 %v3408
        %3879 = vmatpush2.bf16.msra.mxu0 %v3407
        %3880 = vmatprep.subr.bf16.mxu0 %v3404
        %3881 = vmatpush2.bf16.msra.mxu0 %v3403
        %3882 = vmatprep.subr.bf16.mxu0 %v3400
        %3883 = vmatpush2.bf16.msra.mxu0 %v3399
        %3884 = vmatprep.subr.bf16.mxu0 %v3396
        %3885 = vmatpush2.bf16.msra.mxu0 %v3395
        %3886 = vmatprep.mubr.bf16.mxu0 %v865
        %3887 = vmatmul.mubr.bf16.gmra.mxu0 %v864
        %v3888 = vpop.f32.mrf.mxu0
        %v3889 = vadd.f32 %v3846, %v3888
        %v3890 = vpop.f32.mrf.mxu0
        %v3891 = vadd.f32 %v3848, %v3890
        %v3892 = vpop.f32.mrf.mxu0
        %v3893 = vadd.f32 %v3850, %v3892
        %v3894 = vpop.f32.mrf.mxu0
        %v3895 = vadd.f32 %v3852, %v3894
        %3896 = vdwg.mxu0
        %3897 = vmatprep.subr.bf16.mxu0 %v3456
        %3898 = vmatpush1.bf16.msra.mxu0 %v3455
        %3899 = vmatprep.subr.bf16.mxu0 %v3452
        %3900 = vmatpush1.bf16.msra.mxu0 %v3451
        %3901 = vmatprep.subr.bf16.mxu0 %v3448
        %3902 = vmatpush1.bf16.msra.mxu0 %v3447
        %3903 = vmatprep.subr.bf16.mxu0 %v3444
        %3904 = vmatpush1.bf16.msra.mxu0 %v3443
        %3905 = vmatprep.subr.bf16.mxu0 %v3440
        %3906 = vmatpush1.bf16.msra.mxu0 %v3439
        %3907 = vmatprep.subr.bf16.mxu0 %v3436
        %3908 = vmatpush1.bf16.msra.mxu0 %v3435
        %3909 = vmatprep.subr.bf16.mxu0 %v3432
        %3910 = vmatpush1.bf16.msra.mxu0 %v3431
        %3911 = vmatprep.subr.bf16.mxu0 %v3428
        %3912 = vmatpush1.bf16.msra.mxu0 %v3427
        %3913 = vmatprep.subr.bf16.mxu0 %v3488
        %3914 = vmatpush2.bf16.msra.mxu0 %v3487
        %3915 = vmatprep.subr.bf16.mxu0 %v3484
        %3916 = vmatpush2.bf16.msra.mxu0 %v3483
        %3917 = vmatprep.subr.bf16.mxu0 %v3480
        %3918 = vmatpush2.bf16.msra.mxu0 %v3479
        %3919 = vmatprep.subr.bf16.mxu0 %v3476
        %3920 = vmatpush2.bf16.msra.mxu0 %v3475
        %3921 = vmatprep.subr.bf16.mxu0 %v3472
        %3922 = vmatpush2.bf16.msra.mxu0 %v3471
        %3923 = vmatprep.subr.bf16.mxu0 %v3468
        %3924 = vmatpush2.bf16.msra.mxu0 %v3467
        %3925 = vmatprep.subr.bf16.mxu0 %v3464
        %3926 = vmatpush2.bf16.msra.mxu0 %v3463
        %3927 = vmatprep.subr.bf16.mxu0 %v3460
        %3928 = vmatpush2.bf16.msra.mxu0 %v3459
        %3929 = vmatprep.mubr.bf16.mxu0 %v867
        %3930 = vmatmul.mubr.bf16.gmra.mxu0 %v866
        %v3931 = vpop.f32.mrf.mxu0
        %v3932 = vadd.f32 %v3889, %v3931
        %v3933 = vpop.f32.mrf.mxu0
        %v3934 = vadd.f32 %v3891, %v3933
        %v3935 = vpop.f32.mrf.mxu0
        %v3936 = vadd.f32 %v3893, %v3935
        %v3937 = vpop.f32.mrf.mxu0
        %v3938 = vadd.f32 %v3895, %v3937
        %3939 = vdwg.mxu0
        %3940 = vmatprep.subr.bf16.mxu0 %v3520
        %3941 = vmatpush1.bf16.msra.mxu0 %v3519
        %3942 = vmatprep.subr.bf16.mxu0 %v3516
        %3943 = vmatpush1.bf16.msra.mxu0 %v3515
        %3944 = vmatprep.subr.bf16.mxu0 %v3512
        %3945 = vmatpush1.bf16.msra.mxu0 %v3511
        %3946 = vmatprep.subr.bf16.mxu0 %v3508
        %3947 = vmatpush1.bf16.msra.mxu0 %v3507
        %3948 = vmatprep.subr.bf16.mxu0 %v3504
        %3949 = vmatpush1.bf16.msra.mxu0 %v3503
        %3950 = vmatprep.subr.bf16.mxu0 %v3500
        %3951 = vmatpush1.bf16.msra.mxu0 %v3499
        %3952 = vmatprep.subr.bf16.mxu0 %v3496
        %3953 = vmatpush1.bf16.msra.mxu0 %v3495
        %3954 = vmatprep.subr.bf16.mxu0 %v3492
        %3955 = vmatpush1.bf16.msra.mxu0 %v3491
        %3956 = vmatprep.subr.bf16.mxu0 %v3552
        %3957 = vmatpush2.bf16.msra.mxu0 %v3551
        %3958 = vmatprep.subr.bf16.mxu0 %v3548
        %3959 = vmatpush2.bf16.msra.mxu0 %v3547
        %3960 = vmatprep.subr.bf16.mxu0 %v3544
        %3961 = vmatpush2.bf16.msra.mxu0 %v3543
        %3962 = vmatprep.subr.bf16.mxu0 %v3540
        %3963 = vmatpush2.bf16.msra.mxu0 %v3539
        %3964 = vmatprep.subr.bf16.mxu0 %v3536
        %3965 = vmatpush2.bf16.msra.mxu0 %v3535
        %3966 = vmatprep.subr.bf16.mxu0 %v3532
        %3967 = vmatpush2.bf16.msra.mxu0 %v3531
        %3968 = vmatprep.subr.bf16.mxu0 %v3528
        %3969 = vmatpush2.bf16.msra.mxu0 %v3527
        %3970 = vmatprep.subr.bf16.mxu0 %v3524
        %3971 = vmatpush2.bf16.msra.mxu0 %v3523
        %3972 = vmatprep.mubr.bf16.mxu0 %v869
        %3973 = vmatmul.mubr.bf16.gmra.mxu0 %v868
        %v3974 = vpop.f32.mrf.mxu0
        %v3975 = vadd.f32 %v3932, %v3974
        %v3976 = vpop.f32.mrf.mxu0
        %v3977 = vadd.f32 %v3934, %v3976
        %v3978 = vpop.f32.mrf.mxu0
        %v3979 = vadd.f32 %v3936, %v3978
        %v3980 = vpop.f32.mrf.mxu0
        %v3981 = vadd.f32 %v3938, %v3980
        %3982 = vdwg.mxu0
        %3983 = vmatprep.subr.bf16.mxu0 %v3330
        %3984 = vmatpush1.bf16.msra.mxu0 %v3329
        %3985 = vmatprep.subr.bf16.mxu0 %v3326
        %3986 = vmatpush1.bf16.msra.mxu0 %v3325
        %3987 = vmatprep.subr.bf16.mxu0 %v3322
        %3988 = vmatpush1.bf16.msra.mxu0 %v3321
        %3989 = vmatprep.subr.bf16.mxu0 %v3318
        %3990 = vmatpush1.bf16.msra.mxu0 %v3317
        %3991 = vmatprep.subr.bf16.mxu0 %v3314
        %3992 = vmatpush1.bf16.msra.mxu0 %v3313
        %3993 = vmatprep.subr.bf16.mxu0 %v3310
        %3994 = vmatpush1.bf16.msra.mxu0 %v3309
        %3995 = vmatprep.subr.bf16.mxu0 %v3306
        %3996 = vmatpush1.bf16.msra.mxu0 %v3305
        %3997 = vmatprep.subr.bf16.mxu0 %v3302
        %3998 = vmatpush1.bf16.msra.mxu0 %v3301
        %3999 = vmatprep.subr.bf16.mxu0 %v3362
        %4000 = vmatpush2.bf16.msra.mxu0 %v3361
        %4001 = vmatprep.subr.bf16.mxu0 %v3358
        %4002 = vmatpush2.bf16.msra.mxu0 %v3357
        %4003 = vmatprep.subr.bf16.mxu0 %v3354
        %4004 = vmatpush2.bf16.msra.mxu0 %v3353
        %4005 = vmatprep.subr.bf16.mxu0 %v3350
        %4006 = vmatpush2.bf16.msra.mxu0 %v3349
        %4007 = vmatprep.subr.bf16.mxu0 %v3346
        %4008 = vmatpush2.bf16.msra.mxu0 %v3345
        %4009 = vmatprep.subr.bf16.mxu0 %v3342
        %4010 = vmatpush2.bf16.msra.mxu0 %v3341
        %4011 = vmatprep.subr.bf16.mxu0 %v3338
        %4012 = vmatpush2.bf16.msra.mxu0 %v3337
        %4013 = vmatprep.subr.bf16.mxu0 %v3334
        %4014 = vmatpush2.bf16.msra.mxu0 %v3333
        %4015 = vmatprep.mubr.bf16.mxu0 %v863
        %4016 = vmatmul.mubr.bf16.gmra.mxu0 %v862
        %v4017 = vpop.f32.mrf.mxu0
        %v4018 = vadd.f32 %v2525, %v4017
        %v4019 = vpop.f32.mrf.mxu0
        %v4020 = vadd.f32 %v2526, %v4019
        %v4021 = vpop.f32.mrf.mxu0
        %v4022 = vadd.f32 %v2529, %v4021
        %v4023 = vpop.f32.mrf.mxu0
        %v4024 = vadd.f32 %v2530, %v4023
        %4025 = vdwg.mxu0
        %4026 = vmatprep.subr.bf16.mxu0 %v3394
        %4027 = vmatpush1.bf16.msra.mxu0 %v3393
        %4028 = vmatprep.subr.bf16.mxu0 %v3390
        %4029 = vmatpush1.bf16.msra.mxu0 %v3389
        %4030 = vmatprep.subr.bf16.mxu0 %v3386
        %4031 = vmatpush1.bf16.msra.mxu0 %v3385
        %4032 = vmatprep.subr.bf16.mxu0 %v3382
        %4033 = vmatpush1.bf16.msra.mxu0 %v3381
        %4034 = vmatprep.subr.bf16.mxu0 %v3378
        %4035 = vmatpush1.bf16.msra.mxu0 %v3377
        %4036 = vmatprep.subr.bf16.mxu0 %v3374
        %4037 = vmatpush1.bf16.msra.mxu0 %v3373
        %4038 = vmatprep.subr.bf16.mxu0 %v3370
        %4039 = vmatpush1.bf16.msra.mxu0 %v3369
        %4040 = vmatprep.subr.bf16.mxu0 %v3366
        %4041 = vmatpush1.bf16.msra.mxu0 %v3365
        %4042 = vmatprep.subr.bf16.mxu0 %v3426
        %4043 = vmatpush2.bf16.msra.mxu0 %v3425
        %4044 = vmatprep.subr.bf16.mxu0 %v3422
        %4045 = vmatpush2.bf16.msra.mxu0 %v3421
        %4046 = vmatprep.subr.bf16.mxu0 %v3418
        %4047 = vmatpush2.bf16.msra.mxu0 %v3417
        %4048 = vmatprep.subr.bf16.mxu0 %v3414
        %4049 = vmatpush2.bf16.msra.mxu0 %v3413
        %4050 = vmatprep.subr.bf16.mxu0 %v3410
        %4051 = vmatpush2.bf16.msra.mxu0 %v3409
        %4052 = vmatprep.subr.bf16.mxu0 %v3406
        %4053 = vmatpush2.bf16.msra.mxu0 %v3405
        %4054 = vmatprep.subr.bf16.mxu0 %v3402
        %4055 = vmatpush2.bf16.msra.mxu0 %v3401
        %4056 = vmatprep.subr.bf16.mxu0 %v3398
        %4057 = vmatpush2.bf16.msra.mxu0 %v3397
        %4058 = vmatprep.mubr.bf16.mxu0 %v865
        %4059 = vmatmul.mubr.bf16.gmra.mxu0 %v864
        %v4060 = vpop.f32.mrf.mxu0
        %v4061 = vadd.f32 %v4018, %v4060
        %v4062 = vpop.f32.mrf.mxu0
        %v4063 = vadd.f32 %v4020, %v4062
        %v4064 = vpop.f32.mrf.mxu0
        %v4065 = vadd.f32 %v4022, %v4064
        %v4066 = vpop.f32.mrf.mxu0
        %v4067 = vadd.f32 %v4024, %v4066
        %4068 = vdwg.mxu0
        %4069 = vmatprep.subr.bf16.mxu0 %v3458
        %4070 = vmatpush1.bf16.msra.mxu0 %v3457
        %4071 = vmatprep.subr.bf16.mxu0 %v3454
        %4072 = vmatpush1.bf16.msra.mxu0 %v3453
        %4073 = vmatprep.subr.bf16.mxu0 %v3450
        %4074 = vmatpush1.bf16.msra.mxu0 %v3449
        %4075 = vmatprep.subr.bf16.mxu0 %v3446
        %4076 = vmatpush1.bf16.msra.mxu0 %v3445
        %4077 = vmatprep.subr.bf16.mxu0 %v3442
        %4078 = vmatpush1.bf16.msra.mxu0 %v3441
        %4079 = vmatprep.subr.bf16.mxu0 %v3438
        %4080 = vmatpush1.bf16.msra.mxu0 %v3437
        %4081 = vmatprep.subr.bf16.mxu0 %v3434
        %4082 = vmatpush1.bf16.msra.mxu0 %v3433
        %4083 = vmatprep.subr.bf16.mxu0 %v3430
        %4084 = vmatpush1.bf16.msra.mxu0 %v3429
        %4085 = vmatprep.subr.bf16.mxu0 %v3490
        %4086 = vmatpush2.bf16.msra.mxu0 %v3489
        %4087 = vmatprep.subr.bf16.mxu0 %v3486
        %4088 = vmatpush2.bf16.msra.mxu0 %v3485
        %4089 = vmatprep.subr.bf16.mxu0 %v3482
        %4090 = vmatpush2.bf16.msra.mxu0 %v3481
        %4091 = vmatprep.subr.bf16.mxu0 %v3478
        %4092 = vmatpush2.bf16.msra.mxu0 %v3477
        %4093 = vmatprep.subr.bf16.mxu0 %v3474
        %4094 = vmatpush2.bf16.msra.mxu0 %v3473
        %4095 = vmatprep.subr.bf16.mxu0 %v3470
        %4096 = vmatpush2.bf16.msra.mxu0 %v3469
        %4097 = vmatprep.subr.bf16.mxu0 %v3466
        %4098 = vmatpush2.bf16.msra.mxu0 %v3465
        %4099 = vmatprep.subr.bf16.mxu0 %v3462
        %4100 = vmatpush2.bf16.msra.mxu0 %v3461
        %4101 = vmatprep.mubr.bf16.mxu0 %v867
        %4102 = vmatmul.mubr.bf16.gmra.mxu0 %v866
        %v4103 = vpop.f32.mrf.mxu0
        %v4104 = vadd.f32 %v4061, %v4103
        %v4105 = vpop.f32.mrf.mxu0
        %v4106 = vadd.f32 %v4063, %v4105
        %v4107 = vpop.f32.mrf.mxu0
        %v4108 = vadd.f32 %v4065, %v4107
        %v4109 = vpop.f32.mrf.mxu0
        %v4110 = vadd.f32 %v4067, %v4109
        %4111 = vdwg.mxu0
        %4112 = vmatprep.subr.bf16.mxu0 %v3522
        %4113 = vmatpush1.bf16.msra.mxu0 %v3521
        %4114 = vmatprep.subr.bf16.mxu0 %v3518
        %4115 = vmatpush1.bf16.msra.mxu0 %v3517
        %4116 = vmatprep.subr.bf16.mxu0 %v3514
        %4117 = vmatpush1.bf16.msra.mxu0 %v3513
        %4118 = vmatprep.subr.bf16.mxu0 %v3510
        %4119 = vmatpush1.bf16.msra.mxu0 %v3509
        %4120 = vmatprep.subr.bf16.mxu0 %v3506
        %4121 = vmatpush1.bf16.msra.mxu0 %v3505
        %4122 = vmatprep.subr.bf16.mxu0 %v3502
        %4123 = vmatpush1.bf16.msra.mxu0 %v3501
        %4124 = vmatprep.subr.bf16.mxu0 %v3498
        %4125 = vmatpush1.bf16.msra.mxu0 %v3497
        %4126 = vmatprep.subr.bf16.mxu0 %v3494
        %4127 = vmatpush1.bf16.msra.mxu0 %v3493
        %4128 = vmatprep.subr.bf16.mxu0 %v3554
        %4129 = vmatpush2.bf16.msra.mxu0 %v3553
        %4130 = vmatprep.subr.bf16.mxu0 %v3550
        %4131 = vmatpush2.bf16.msra.mxu0 %v3549
        %4132 = vmatprep.subr.bf16.mxu0 %v3546
        %4133 = vmatpush2.bf16.msra.mxu0 %v3545
        %4134 = vmatprep.subr.bf16.mxu0 %v3542
        %4135 = vmatpush2.bf16.msra.mxu0 %v3541
        %4136 = vmatprep.subr.bf16.mxu0 %v3538
        %4137 = vmatpush2.bf16.msra.mxu0 %v3537
        %4138 = vmatprep.subr.bf16.mxu0 %v3534
        %4139 = vmatpush2.bf16.msra.mxu0 %v3533
        %4140 = vmatprep.subr.bf16.mxu0 %v3530
        %4141 = vmatpush2.bf16.msra.mxu0 %v3529
        %4142 = vmatprep.subr.bf16.mxu0 %v3526
        %4143 = vmatpush2.bf16.msra.mxu0 %v3525
        %4144 = vmatprep.mubr.bf16.mxu0 %v869
        %4145 = vmatmul.mubr.bf16.gmra.mxu0 %v868
        %v4146 = vpop.f32.mrf.mxu0
        %v4147 = vadd.f32 %v4104, %v4146
        %v4148 = vpop.f32.mrf.mxu0
        %v4149 = vadd.f32 %v4106, %v4148
        %v4150 = vpop.f32.mrf.mxu0
        %v4151 = vadd.f32 %v4108, %v4150
        %v4152 = vpop.f32.mrf.mxu0
        %v4153 = vadd.f32 %v4110, %v4152
        %4154 = vdwg.mxu0
        %s4155 = scalar_lea.vmem [#allocation4], 4096
        %v4156 = vld [vmem:[%s4155] sm:$0xff]
        %v4157 = vld [vmem:[%s4155 + $0x8] sm:$0xff]
        %v4158 = vld [vmem:[%s4155 + $0x10] sm:$0xff]
        %v4159 = vld [vmem:[%s4155 + $0x18] sm:$0xff]
        %v4160 = vld [vmem:[%s4155 + $0x20] sm:$0xff]
        %v4161 = vld [vmem:[%s4155 + $0x28] sm:$0xff]
        %v4162 = vld [vmem:[%s4155 + $0x30] sm:$0xff]
        %v4163 = vld [vmem:[%s4155 + $0x38] sm:$0xff]
        %v4164 = vld [vmem:[%s4155 + $0x40] sm:$0xff]
        %v4165 = vld [vmem:[%s4155 + $0x48] sm:$0xff]
        %v4166 = vld [vmem:[%s4155 + $0x50] sm:$0xff]
        %v4167 = vld [vmem:[%s4155 + $0x58] sm:$0xff]
        %v4168 = vld [vmem:[%s4155 + $0x60] sm:$0xff]
        %v4169 = vld [vmem:[%s4155 + $0x68] sm:$0xff]
        %v4170 = vld [vmem:[%s4155 + $0x70] sm:$0xff]
        %v4171 = vld [vmem:[%s4155 + $0x78] sm:$0xff]
        %v4172 = vld [vmem:[%s4155 + $0x80] sm:$0xff]
        %v4173 = vld [vmem:[%s4155 + $0x88] sm:$0xff]
        %v4174 = vld [vmem:[%s4155 + $0x90] sm:$0xff]
        %v4175 = vld [vmem:[%s4155 + $0x98] sm:$0xff]
        %v4176 = vld [vmem:[%s4155 + $0xa0] sm:$0xff]
        %v4177 = vld [vmem:[%s4155 + $0xa8] sm:$0xff]
        %v4178 = vld [vmem:[%s4155 + $0xb0] sm:$0xff]
        %v4179 = vld [vmem:[%s4155 + $0xb8] sm:$0xff]
        %v4180 = vld [vmem:[%s4155 + $0xc0] sm:$0xff]
        %v4181 = vld [vmem:[%s4155 + $0xc8] sm:$0xff]
        %v4182 = vld [vmem:[%s4155 + $0xd0] sm:$0xff]
        %v4183 = vld [vmem:[%s4155 + $0xd8] sm:$0xff]
        %v4184 = vld [vmem:[%s4155 + $0xe0] sm:$0xff]
        %v4185 = vld [vmem:[%s4155 + $0xe8] sm:$0xff]
        %v4186 = vld [vmem:[%s4155 + $0xf0] sm:$0xff]
        %v4187 = vld [vmem:[%s4155 + $0xf8] sm:$0xff]
        %v4188 = vld [vmem:[%s4155 + $0x100] sm:$0xff]
        %v4189 = vld [vmem:[%s4155 + $0x108] sm:$0xff]
        %v4190 = vld [vmem:[%s4155 + $0x110] sm:$0xff]
        %v4191 = vld [vmem:[%s4155 + $0x118] sm:$0xff]
        %v4192 = vld [vmem:[%s4155 + $0x120] sm:$0xff]
        %v4193 = vld [vmem:[%s4155 + $0x128] sm:$0xff]
        %v4194 = vld [vmem:[%s4155 + $0x130] sm:$0xff]
        %v4195 = vld [vmem:[%s4155 + $0x138] sm:$0xff]
        %v4196 = vld [vmem:[%s4155 + $0x140] sm:$0xff]
        %v4197 = vld [vmem:[%s4155 + $0x148] sm:$0xff]
        %v4198 = vld [vmem:[%s4155 + $0x150] sm:$0xff]
        %v4199 = vld [vmem:[%s4155 + $0x158] sm:$0xff]
        %v4200 = vld [vmem:[%s4155 + $0x160] sm:$0xff]
        %v4201 = vld [vmem:[%s4155 + $0x168] sm:$0xff]
        %v4202 = vld [vmem:[%s4155 + $0x170] sm:$0xff]
        %v4203 = vld [vmem:[%s4155 + $0x178] sm:$0xff]
        %v4204 = vld [vmem:[%s4155 + $0x180] sm:$0xff]
        %v4205 = vld [vmem:[%s4155 + $0x188] sm:$0xff]
        %v4206 = vld [vmem:[%s4155 + $0x190] sm:$0xff]
        %v4207 = vld [vmem:[%s4155 + $0x198] sm:$0xff]
        %v4208 = vld [vmem:[%s4155 + $0x1a0] sm:$0xff]
        %v4209 = vld [vmem:[%s4155 + $0x1a8] sm:$0xff]
        %v4210 = vld [vmem:[%s4155 + $0x1b0] sm:$0xff]
        %v4211 = vld [vmem:[%s4155 + $0x1b8] sm:$0xff]
        %v4212 = vld [vmem:[%s4155 + $0x1c0] sm:$0xff]
        %v4213 = vld [vmem:[%s4155 + $0x1c8] sm:$0xff]
        %v4214 = vld [vmem:[%s4155 + $0x1d0] sm:$0xff]
        %v4215 = vld [vmem:[%s4155 + $0x1d8] sm:$0xff]
        %v4216 = vld [vmem:[%s4155 + $0x1e0] sm:$0xff]
        %v4217 = vld [vmem:[%s4155 + $0x1e8] sm:$0xff]
        %v4218 = vld [vmem:[%s4155 + $0x1f0] sm:$0xff]
        %v4219 = vld [vmem:[%s4155 + $0x1f8] sm:$0xff]
        %v4220 = vld [vmem:[%s4155 + $0x200] sm:$0xff]
        %v4221 = vld [vmem:[%s4155 + $0x208] sm:$0xff]
        %v4222 = vld [vmem:[%s4155 + $0x210] sm:$0xff]
        %v4223 = vld [vmem:[%s4155 + $0x218] sm:$0xff]
        %v4224 = vld [vmem:[%s4155 + $0x220] sm:$0xff]
        %v4225 = vld [vmem:[%s4155 + $0x228] sm:$0xff]
        %v4226 = vld [vmem:[%s4155 + $0x230] sm:$0xff]
        %v4227 = vld [vmem:[%s4155 + $0x238] sm:$0xff]
        %v4228 = vld [vmem:[%s4155 + $0x240] sm:$0xff]
        %v4229 = vld [vmem:[%s4155 + $0x248] sm:$0xff]
        %v4230 = vld [vmem:[%s4155 + $0x250] sm:$0xff]
        %v4231 = vld [vmem:[%s4155 + $0x258] sm:$0xff]
        %v4232 = vld [vmem:[%s4155 + $0x260] sm:$0xff]
        %v4233 = vld [vmem:[%s4155 + $0x268] sm:$0xff]
        %v4234 = vld [vmem:[%s4155 + $0x270] sm:$0xff]
        %v4235 = vld [vmem:[%s4155 + $0x278] sm:$0xff]
        %v4236 = vld [vmem:[%s4155 + $0x280] sm:$0xff]
        %v4237 = vld [vmem:[%s4155 + $0x288] sm:$0xff]
        %v4238 = vld [vmem:[%s4155 + $0x290] sm:$0xff]
        %v4239 = vld [vmem:[%s4155 + $0x298] sm:$0xff]
        %v4240 = vld [vmem:[%s4155 + $0x2a0] sm:$0xff]
        %v4241 = vld [vmem:[%s4155 + $0x2a8] sm:$0xff]
        %v4242 = vld [vmem:[%s4155 + $0x2b0] sm:$0xff]
        %v4243 = vld [vmem:[%s4155 + $0x2b8] sm:$0xff]
        %v4244 = vld [vmem:[%s4155 + $0x2c0] sm:$0xff]
        %v4245 = vld [vmem:[%s4155 + $0x2c8] sm:$0xff]
        %v4246 = vld [vmem:[%s4155 + $0x2d0] sm:$0xff]
        %v4247 = vld [vmem:[%s4155 + $0x2d8] sm:$0xff]
        %v4248 = vld [vmem:[%s4155 + $0x2e0] sm:$0xff]
        %v4249 = vld [vmem:[%s4155 + $0x2e8] sm:$0xff]
        %v4250 = vld [vmem:[%s4155 + $0x2f0] sm:$0xff]
        %v4251 = vld [vmem:[%s4155 + $0x2f8] sm:$0xff]
        %v4252 = vld [vmem:[%s4155 + $0x300] sm:$0xff]
        %v4253 = vld [vmem:[%s4155 + $0x308] sm:$0xff]
        %v4254 = vld [vmem:[%s4155 + $0x310] sm:$0xff]
        %v4255 = vld [vmem:[%s4155 + $0x318] sm:$0xff]
        %v4256 = vld [vmem:[%s4155 + $0x320] sm:$0xff]
        %v4257 = vld [vmem:[%s4155 + $0x328] sm:$0xff]
        %v4258 = vld [vmem:[%s4155 + $0x330] sm:$0xff]
        %v4259 = vld [vmem:[%s4155 + $0x338] sm:$0xff]
        %v4260 = vld [vmem:[%s4155 + $0x340] sm:$0xff]
        %v4261 = vld [vmem:[%s4155 + $0x348] sm:$0xff]
        %v4262 = vld [vmem:[%s4155 + $0x350] sm:$0xff]
        %v4263 = vld [vmem:[%s4155 + $0x358] sm:$0xff]
        %v4264 = vld [vmem:[%s4155 + $0x360] sm:$0xff]
        %v4265 = vld [vmem:[%s4155 + $0x368] sm:$0xff]
        %v4266 = vld [vmem:[%s4155 + $0x370] sm:$0xff]
        %v4267 = vld [vmem:[%s4155 + $0x378] sm:$0xff]
        %v4268 = vld [vmem:[%s4155 + $0x380] sm:$0xff]
        %v4269 = vld [vmem:[%s4155 + $0x388] sm:$0xff]
        %v4270 = vld [vmem:[%s4155 + $0x390] sm:$0xff]
        %v4271 = vld [vmem:[%s4155 + $0x398] sm:$0xff]
        %v4272 = vld [vmem:[%s4155 + $0x3a0] sm:$0xff]
        %v4273 = vld [vmem:[%s4155 + $0x3a8] sm:$0xff]
        %v4274 = vld [vmem:[%s4155 + $0x3b0] sm:$0xff]
        %v4275 = vld [vmem:[%s4155 + $0x3b8] sm:$0xff]
        %v4276 = vld [vmem:[%s4155 + $0x3c0] sm:$0xff]
        %v4277 = vld [vmem:[%s4155 + $0x3c8] sm:$0xff]
        %v4278 = vld [vmem:[%s4155 + $0x3d0] sm:$0xff]
        %v4279 = vld [vmem:[%s4155 + $0x3d8] sm:$0xff]
        %v4280 = vld [vmem:[%s4155 + $0x3e0] sm:$0xff]
        %v4281 = vld [vmem:[%s4155 + $0x3e8] sm:$0xff]
        %v4282 = vld [vmem:[%s4155 + $0x3f0] sm:$0xff]
        %v4283 = vld [vmem:[%s4155 + $0x3f8] sm:$0xff]
        %v4284 = vld [vmem:[%s4155 + $0x400] sm:$0xff]
        %v4285 = vld [vmem:[%s4155 + $0x408] sm:$0xff]
        %v4286 = vld [vmem:[%s4155 + $0x410] sm:$0xff]
        %v4287 = vld [vmem:[%s4155 + $0x418] sm:$0xff]
        %v4288 = vld [vmem:[%s4155 + $0x420] sm:$0xff]
        %v4289 = vld [vmem:[%s4155 + $0x428] sm:$0xff]
        %v4290 = vld [vmem:[%s4155 + $0x430] sm:$0xff]
        %v4291 = vld [vmem:[%s4155 + $0x438] sm:$0xff]
        %v4292 = vld [vmem:[%s4155 + $0x440] sm:$0xff]
        %v4293 = vld [vmem:[%s4155 + $0x448] sm:$0xff]
        %v4294 = vld [vmem:[%s4155 + $0x450] sm:$0xff]
        %v4295 = vld [vmem:[%s4155 + $0x458] sm:$0xff]
        %v4296 = vld [vmem:[%s4155 + $0x460] sm:$0xff]
        %v4297 = vld [vmem:[%s4155 + $0x468] sm:$0xff]
        %v4298 = vld [vmem:[%s4155 + $0x470] sm:$0xff]
        %v4299 = vld [vmem:[%s4155 + $0x478] sm:$0xff]
        %v4300 = vld [vmem:[%s4155 + $0x480] sm:$0xff]
        %v4301 = vld [vmem:[%s4155 + $0x488] sm:$0xff]
        %v4302 = vld [vmem:[%s4155 + $0x490] sm:$0xff]
        %v4303 = vld [vmem:[%s4155 + $0x498] sm:$0xff]
        %v4304 = vld [vmem:[%s4155 + $0x4a0] sm:$0xff]
        %v4305 = vld [vmem:[%s4155 + $0x4a8] sm:$0xff]
        %v4306 = vld [vmem:[%s4155 + $0x4b0] sm:$0xff]
        %v4307 = vld [vmem:[%s4155 + $0x4b8] sm:$0xff]
        %v4308 = vld [vmem:[%s4155 + $0x4c0] sm:$0xff]
        %v4309 = vld [vmem:[%s4155 + $0x4c8] sm:$0xff]
        %v4310 = vld [vmem:[%s4155 + $0x4d0] sm:$0xff]
        %v4311 = vld [vmem:[%s4155 + $0x4d8] sm:$0xff]
        %v4312 = vld [vmem:[%s4155 + $0x4e0] sm:$0xff]
        %v4313 = vld [vmem:[%s4155 + $0x4e8] sm:$0xff]
        %v4314 = vld [vmem:[%s4155 + $0x4f0] sm:$0xff]
        %v4315 = vld [vmem:[%s4155 + $0x4f8] sm:$0xff]
        %v4316 = vld [vmem:[%s4155 + $0x500] sm:$0xff]
        %v4317 = vld [vmem:[%s4155 + $0x508] sm:$0xff]
        %v4318 = vld [vmem:[%s4155 + $0x510] sm:$0xff]
        %v4319 = vld [vmem:[%s4155 + $0x518] sm:$0xff]
        %v4320 = vld [vmem:[%s4155 + $0x520] sm:$0xff]
        %v4321 = vld [vmem:[%s4155 + $0x528] sm:$0xff]
        %v4322 = vld [vmem:[%s4155 + $0x530] sm:$0xff]
        %v4323 = vld [vmem:[%s4155 + $0x538] sm:$0xff]
        %v4324 = vld [vmem:[%s4155 + $0x540] sm:$0xff]
        %v4325 = vld [vmem:[%s4155 + $0x548] sm:$0xff]
        %v4326 = vld [vmem:[%s4155 + $0x550] sm:$0xff]
        %v4327 = vld [vmem:[%s4155 + $0x558] sm:$0xff]
        %v4328 = vld [vmem:[%s4155 + $0x560] sm:$0xff]
        %v4329 = vld [vmem:[%s4155 + $0x568] sm:$0xff]
        %v4330 = vld [vmem:[%s4155 + $0x570] sm:$0xff]
        %v4331 = vld [vmem:[%s4155 + $0x578] sm:$0xff]
        %v4332 = vld [vmem:[%s4155 + $0x580] sm:$0xff]
        %v4333 = vld [vmem:[%s4155 + $0x588] sm:$0xff]
        %v4334 = vld [vmem:[%s4155 + $0x590] sm:$0xff]
        %v4335 = vld [vmem:[%s4155 + $0x598] sm:$0xff]
        %v4336 = vld [vmem:[%s4155 + $0x5a0] sm:$0xff]
        %v4337 = vld [vmem:[%s4155 + $0x5a8] sm:$0xff]
        %v4338 = vld [vmem:[%s4155 + $0x5b0] sm:$0xff]
        %v4339 = vld [vmem:[%s4155 + $0x5b8] sm:$0xff]
        %v4340 = vld [vmem:[%s4155 + $0x5c0] sm:$0xff]
        %v4341 = vld [vmem:[%s4155 + $0x5c8] sm:$0xff]
        %v4342 = vld [vmem:[%s4155 + $0x5d0] sm:$0xff]
        %v4343 = vld [vmem:[%s4155 + $0x5d8] sm:$0xff]
        %v4344 = vld [vmem:[%s4155 + $0x5e0] sm:$0xff]
        %v4345 = vld [vmem:[%s4155 + $0x5e8] sm:$0xff]
        %v4346 = vld [vmem:[%s4155 + $0x5f0] sm:$0xff]
        %v4347 = vld [vmem:[%s4155 + $0x5f8] sm:$0xff]
        %v4348 = vld [vmem:[%s4155 + $0x600] sm:$0xff]
        %v4349 = vld [vmem:[%s4155 + $0x608] sm:$0xff]
        %v4350 = vld [vmem:[%s4155 + $0x610] sm:$0xff]
        %v4351 = vld [vmem:[%s4155 + $0x618] sm:$0xff]
        %v4352 = vld [vmem:[%s4155 + $0x620] sm:$0xff]
        %v4353 = vld [vmem:[%s4155 + $0x628] sm:$0xff]
        %v4354 = vld [vmem:[%s4155 + $0x630] sm:$0xff]
        %v4355 = vld [vmem:[%s4155 + $0x638] sm:$0xff]
        %v4356 = vld [vmem:[%s4155 + $0x640] sm:$0xff]
        %v4357 = vld [vmem:[%s4155 + $0x648] sm:$0xff]
        %v4358 = vld [vmem:[%s4155 + $0x650] sm:$0xff]
        %v4359 = vld [vmem:[%s4155 + $0x658] sm:$0xff]
        %v4360 = vld [vmem:[%s4155 + $0x660] sm:$0xff]
        %v4361 = vld [vmem:[%s4155 + $0x668] sm:$0xff]
        %v4362 = vld [vmem:[%s4155 + $0x670] sm:$0xff]
        %v4363 = vld [vmem:[%s4155 + $0x678] sm:$0xff]
        %v4364 = vld [vmem:[%s4155 + $0x680] sm:$0xff]
        %v4365 = vld [vmem:[%s4155 + $0x688] sm:$0xff]
        %v4366 = vld [vmem:[%s4155 + $0x690] sm:$0xff]
        %v4367 = vld [vmem:[%s4155 + $0x698] sm:$0xff]
        %v4368 = vld [vmem:[%s4155 + $0x6a0] sm:$0xff]
        %v4369 = vld [vmem:[%s4155 + $0x6a8] sm:$0xff]
        %v4370 = vld [vmem:[%s4155 + $0x6b0] sm:$0xff]
        %v4371 = vld [vmem:[%s4155 + $0x6b8] sm:$0xff]
        %v4372 = vld [vmem:[%s4155 + $0x6c0] sm:$0xff]
        %v4373 = vld [vmem:[%s4155 + $0x6c8] sm:$0xff]
        %v4374 = vld [vmem:[%s4155 + $0x6d0] sm:$0xff]
        %v4375 = vld [vmem:[%s4155 + $0x6d8] sm:$0xff]
        %v4376 = vld [vmem:[%s4155 + $0x6e0] sm:$0xff]
        %v4377 = vld [vmem:[%s4155 + $0x6e8] sm:$0xff]
        %v4378 = vld [vmem:[%s4155 + $0x6f0] sm:$0xff]
        %v4379 = vld [vmem:[%s4155 + $0x6f8] sm:$0xff]
        %v4380 = vld [vmem:[%s4155 + $0x700] sm:$0xff]
        %v4381 = vld [vmem:[%s4155 + $0x708] sm:$0xff]
        %v4382 = vld [vmem:[%s4155 + $0x710] sm:$0xff]
        %v4383 = vld [vmem:[%s4155 + $0x718] sm:$0xff]
        %v4384 = vld [vmem:[%s4155 + $0x720] sm:$0xff]
        %v4385 = vld [vmem:[%s4155 + $0x728] sm:$0xff]
        %v4386 = vld [vmem:[%s4155 + $0x730] sm:$0xff]
        %v4387 = vld [vmem:[%s4155 + $0x738] sm:$0xff]
        %v4388 = vld [vmem:[%s4155 + $0x740] sm:$0xff]
        %v4389 = vld [vmem:[%s4155 + $0x748] sm:$0xff]
        %v4390 = vld [vmem:[%s4155 + $0x750] sm:$0xff]
        %v4391 = vld [vmem:[%s4155 + $0x758] sm:$0xff]
        %v4392 = vld [vmem:[%s4155 + $0x760] sm:$0xff]
        %v4393 = vld [vmem:[%s4155 + $0x768] sm:$0xff]
        %v4394 = vld [vmem:[%s4155 + $0x770] sm:$0xff]
        %v4395 = vld [vmem:[%s4155 + $0x778] sm:$0xff]
        %v4396 = vld [vmem:[%s4155 + $0x780] sm:$0xff]
        %v4397 = vld [vmem:[%s4155 + $0x788] sm:$0xff]
        %v4398 = vld [vmem:[%s4155 + $0x790] sm:$0xff]
        %v4399 = vld [vmem:[%s4155 + $0x798] sm:$0xff]
        %v4400 = vld [vmem:[%s4155 + $0x7a0] sm:$0xff]
        %v4401 = vld [vmem:[%s4155 + $0x7a8] sm:$0xff]
        %v4402 = vld [vmem:[%s4155 + $0x7b0] sm:$0xff]
        %v4403 = vld [vmem:[%s4155 + $0x7b8] sm:$0xff]
        %v4404 = vld [vmem:[%s4155 + $0x7c0] sm:$0xff]
        %v4405 = vld [vmem:[%s4155 + $0x7c8] sm:$0xff]
        %v4406 = vld [vmem:[%s4155 + $0x7d0] sm:$0xff]
        %v4407 = vld [vmem:[%s4155 + $0x7d8] sm:$0xff]
        %v4408 = vld [vmem:[%s4155 + $0x7e0] sm:$0xff]
        %v4409 = vld [vmem:[%s4155 + $0x7e8] sm:$0xff]
        %v4410 = vld [vmem:[%s4155 + $0x7f0] sm:$0xff]
        %v4411 = vld [vmem:[%s4155 + $0x7f8] sm:$0xff]
        %v4668 = vunpack.c.l.b16 %v4156
        %v4669 = vunpack.c.h.b16 %v4156
        %v4670 = vunpack.c.l.b16 %v4157
        %v4671 = vunpack.c.h.b16 %v4157
        %v4672 = vunpack.c.l.b16 %v4158
        %v4673 = vunpack.c.h.b16 %v4158
        %v4674 = vunpack.c.l.b16 %v4159
        %v4675 = vunpack.c.h.b16 %v4159
        %v4676 = vunpack.c.l.b16 %v4160
        %v4677 = vunpack.c.h.b16 %v4160
        %v4678 = vunpack.c.l.b16 %v4161
        %v4679 = vunpack.c.h.b16 %v4161
        %v4680 = vunpack.c.l.b16 %v4162
        %v4681 = vunpack.c.h.b16 %v4162
        %v4682 = vunpack.c.l.b16 %v4163
        %v4683 = vunpack.c.h.b16 %v4163
        %v4684 = vunpack.c.l.b16 %v4164
        %v4685 = vunpack.c.h.b16 %v4164
        %v4686 = vunpack.c.l.b16 %v4165
        %v4687 = vunpack.c.h.b16 %v4165
        %v4688 = vunpack.c.l.b16 %v4166
        %v4689 = vunpack.c.h.b16 %v4166
        %v4690 = vunpack.c.l.b16 %v4167
        %v4691 = vunpack.c.h.b16 %v4167
        %v4692 = vunpack.c.l.b16 %v4168
        %v4693 = vunpack.c.h.b16 %v4168
        %v4694 = vunpack.c.l.b16 %v4169
        %v4695 = vunpack.c.h.b16 %v4169
        %v4696 = vunpack.c.l.b16 %v4170
        %v4697 = vunpack.c.h.b16 %v4170
        %v4698 = vunpack.c.l.b16 %v4171
        %v4699 = vunpack.c.h.b16 %v4171
        %v4700 = vunpack.c.l.b16 %v4172
        %v4701 = vunpack.c.h.b16 %v4172
        %v4702 = vunpack.c.l.b16 %v4173
        %v4703 = vunpack.c.h.b16 %v4173
        %v4704 = vunpack.c.l.b16 %v4174
        %v4705 = vunpack.c.h.b16 %v4174
        %v4706 = vunpack.c.l.b16 %v4175
        %v4707 = vunpack.c.h.b16 %v4175
        %v4708 = vunpack.c.l.b16 %v4176
        %v4709 = vunpack.c.h.b16 %v4176
        %v4710 = vunpack.c.l.b16 %v4177
        %v4711 = vunpack.c.h.b16 %v4177
        %v4712 = vunpack.c.l.b16 %v4178
        %v4713 = vunpack.c.h.b16 %v4178
        %v4714 = vunpack.c.l.b16 %v4179
        %v4715 = vunpack.c.h.b16 %v4179
        %v4716 = vunpack.c.l.b16 %v4180
        %v4717 = vunpack.c.h.b16 %v4180
        %v4718 = vunpack.c.l.b16 %v4181
        %v4719 = vunpack.c.h.b16 %v4181
        %v4720 = vunpack.c.l.b16 %v4182
        %v4721 = vunpack.c.h.b16 %v4182
        %v4722 = vunpack.c.l.b16 %v4183
        %v4723 = vunpack.c.h.b16 %v4183
        %v4724 = vunpack.c.l.b16 %v4184
        %v4725 = vunpack.c.h.b16 %v4184
        %v4726 = vunpack.c.l.b16 %v4185
        %v4727 = vunpack.c.h.b16 %v4185
        %v4728 = vunpack.c.l.b16 %v4186
        %v4729 = vunpack.c.h.b16 %v4186
        %v4730 = vunpack.c.l.b16 %v4187
        %v4731 = vunpack.c.h.b16 %v4187
        %v4732 = vunpack.c.l.b16 %v4188
        %v4733 = vunpack.c.h.b16 %v4188
        %v4734 = vunpack.c.l.b16 %v4189
        %v4735 = vunpack.c.h.b16 %v4189
        %v4736 = vunpack.c.l.b16 %v4190
        %v4737 = vunpack.c.h.b16 %v4190
        %v4738 = vunpack.c.l.b16 %v4191
        %v4739 = vunpack.c.h.b16 %v4191
        %v4740 = vunpack.c.l.b16 %v4192
        %v4741 = vunpack.c.h.b16 %v4192
        %v4742 = vunpack.c.l.b16 %v4193
        %v4743 = vunpack.c.h.b16 %v4193
        %v4744 = vunpack.c.l.b16 %v4194
        %v4745 = vunpack.c.h.b16 %v4194
        %v4746 = vunpack.c.l.b16 %v4195
        %v4747 = vunpack.c.h.b16 %v4195
        %v4748 = vunpack.c.l.b16 %v4196
        %v4749 = vunpack.c.h.b16 %v4196
        %v4750 = vunpack.c.l.b16 %v4197
        %v4751 = vunpack.c.h.b16 %v4197
        %v4752 = vunpack.c.l.b16 %v4198
        %v4753 = vunpack.c.h.b16 %v4198
        %v4754 = vunpack.c.l.b16 %v4199
        %v4755 = vunpack.c.h.b16 %v4199
        %v4756 = vunpack.c.l.b16 %v4200
        %v4757 = vunpack.c.h.b16 %v4200
        %v4758 = vunpack.c.l.b16 %v4201
        %v4759 = vunpack.c.h.b16 %v4201
        %v4760 = vunpack.c.l.b16 %v4202
        %v4761 = vunpack.c.h.b16 %v4202
        %v4762 = vunpack.c.l.b16 %v4203
        %v4763 = vunpack.c.h.b16 %v4203
        %v4764 = vunpack.c.l.b16 %v4204
        %v4765 = vunpack.c.h.b16 %v4204
        %v4766 = vunpack.c.l.b16 %v4205
        %v4767 = vunpack.c.h.b16 %v4205
        %v4768 = vunpack.c.l.b16 %v4206
        %v4769 = vunpack.c.h.b16 %v4206
        %v4770 = vunpack.c.l.b16 %v4207
        %v4771 = vunpack.c.h.b16 %v4207
        %v4772 = vunpack.c.l.b16 %v4208
        %v4773 = vunpack.c.h.b16 %v4208
        %v4774 = vunpack.c.l.b16 %v4209
        %v4775 = vunpack.c.h.b16 %v4209
        %v4776 = vunpack.c.l.b16 %v4210
        %v4777 = vunpack.c.h.b16 %v4210
        %v4778 = vunpack.c.l.b16 %v4211
        %v4779 = vunpack.c.h.b16 %v4211
        %v4780 = vunpack.c.l.b16 %v4212
        %v4781 = vunpack.c.h.b16 %v4212
        %v4782 = vunpack.c.l.b16 %v4213
        %v4783 = vunpack.c.h.b16 %v4213
        %v4784 = vunpack.c.l.b16 %v4214
        %v4785 = vunpack.c.h.b16 %v4214
        %v4786 = vunpack.c.l.b16 %v4215
        %v4787 = vunpack.c.h.b16 %v4215
        %v4788 = vunpack.c.l.b16 %v4216
        %v4789 = vunpack.c.h.b16 %v4216
        %v4790 = vunpack.c.l.b16 %v4217
        %v4791 = vunpack.c.h.b16 %v4217
        %v4792 = vunpack.c.l.b16 %v4218
        %v4793 = vunpack.c.h.b16 %v4218
        %v4794 = vunpack.c.l.b16 %v4219
        %v4795 = vunpack.c.h.b16 %v4219
        %v4796 = vunpack.c.l.b16 %v4220
        %v4797 = vunpack.c.h.b16 %v4220
        %v4798 = vunpack.c.l.b16 %v4221
        %v4799 = vunpack.c.h.b16 %v4221
        %v4800 = vunpack.c.l.b16 %v4222
        %v4801 = vunpack.c.h.b16 %v4222
        %v4802 = vunpack.c.l.b16 %v4223
        %v4803 = vunpack.c.h.b16 %v4223
        %v4804 = vunpack.c.l.b16 %v4224
        %v4805 = vunpack.c.h.b16 %v4224
        %v4806 = vunpack.c.l.b16 %v4225
        %v4807 = vunpack.c.h.b16 %v4225
        %v4808 = vunpack.c.l.b16 %v4226
        %v4809 = vunpack.c.h.b16 %v4226
        %v4810 = vunpack.c.l.b16 %v4227
        %v4811 = vunpack.c.h.b16 %v4227
        %v4812 = vunpack.c.l.b16 %v4228
        %v4813 = vunpack.c.h.b16 %v4228
        %v4814 = vunpack.c.l.b16 %v4229
        %v4815 = vunpack.c.h.b16 %v4229
        %v4816 = vunpack.c.l.b16 %v4230
        %v4817 = vunpack.c.h.b16 %v4230
        %v4818 = vunpack.c.l.b16 %v4231
        %v4819 = vunpack.c.h.b16 %v4231
        %v4820 = vunpack.c.l.b16 %v4232
        %v4821 = vunpack.c.h.b16 %v4232
        %v4822 = vunpack.c.l.b16 %v4233
        %v4823 = vunpack.c.h.b16 %v4233
        %v4824 = vunpack.c.l.b16 %v4234
        %v4825 = vunpack.c.h.b16 %v4234
        %v4826 = vunpack.c.l.b16 %v4235
        %v4827 = vunpack.c.h.b16 %v4235
        %v4828 = vunpack.c.l.b16 %v4236
        %v4829 = vunpack.c.h.b16 %v4236
        %v4830 = vunpack.c.l.b16 %v4237
        %v4831 = vunpack.c.h.b16 %v4237
        %v4832 = vunpack.c.l.b16 %v4238
        %v4833 = vunpack.c.h.b16 %v4238
        %v4834 = vunpack.c.l.b16 %v4239
        %v4835 = vunpack.c.h.b16 %v4239
        %v4836 = vunpack.c.l.b16 %v4240
        %v4837 = vunpack.c.h.b16 %v4240
        %v4838 = vunpack.c.l.b16 %v4241
        %v4839 = vunpack.c.h.b16 %v4241
        %v4840 = vunpack.c.l.b16 %v4242
        %v4841 = vunpack.c.h.b16 %v4242
        %v4842 = vunpack.c.l.b16 %v4243
        %v4843 = vunpack.c.h.b16 %v4243
        %v4844 = vunpack.c.l.b16 %v4244
        %v4845 = vunpack.c.h.b16 %v4244
        %v4846 = vunpack.c.l.b16 %v4245
        %v4847 = vunpack.c.h.b16 %v4245
        %v4848 = vunpack.c.l.b16 %v4246
        %v4849 = vunpack.c.h.b16 %v4246
        %v4850 = vunpack.c.l.b16 %v4247
        %v4851 = vunpack.c.h.b16 %v4247
        %v4852 = vunpack.c.l.b16 %v4248
        %v4853 = vunpack.c.h.b16 %v4248
        %v4854 = vunpack.c.l.b16 %v4249
        %v4855 = vunpack.c.h.b16 %v4249
        %v4856 = vunpack.c.l.b16 %v4250
        %v4857 = vunpack.c.h.b16 %v4250
        %v4858 = vunpack.c.l.b16 %v4251
        %v4859 = vunpack.c.h.b16 %v4251
        %v4860 = vunpack.c.l.b16 %v4252
        %v4861 = vunpack.c.h.b16 %v4252
        %v4862 = vunpack.c.l.b16 %v4253
        %v4863 = vunpack.c.h.b16 %v4253
        %v4864 = vunpack.c.l.b16 %v4254
        %v4865 = vunpack.c.h.b16 %v4254
        %v4866 = vunpack.c.l.b16 %v4255
        %v4867 = vunpack.c.h.b16 %v4255
        %v4868 = vunpack.c.l.b16 %v4256
        %v4869 = vunpack.c.h.b16 %v4256
        %v4870 = vunpack.c.l.b16 %v4257
        %v4871 = vunpack.c.h.b16 %v4257
        %v4872 = vunpack.c.l.b16 %v4258
        %v4873 = vunpack.c.h.b16 %v4258
        %v4874 = vunpack.c.l.b16 %v4259
        %v4875 = vunpack.c.h.b16 %v4259
        %v4876 = vunpack.c.l.b16 %v4260
        %v4877 = vunpack.c.h.b16 %v4260
        %v4878 = vunpack.c.l.b16 %v4261
        %v4879 = vunpack.c.h.b16 %v4261
        %v4880 = vunpack.c.l.b16 %v4262
        %v4881 = vunpack.c.h.b16 %v4262
        %v4882 = vunpack.c.l.b16 %v4263
        %v4883 = vunpack.c.h.b16 %v4263
        %v4884 = vunpack.c.l.b16 %v4264
        %v4885 = vunpack.c.h.b16 %v4264
        %v4886 = vunpack.c.l.b16 %v4265
        %v4887 = vunpack.c.h.b16 %v4265
        %v4888 = vunpack.c.l.b16 %v4266
        %v4889 = vunpack.c.h.b16 %v4266
        %v4890 = vunpack.c.l.b16 %v4267
        %v4891 = vunpack.c.h.b16 %v4267
        %v4892 = vunpack.c.l.b16 %v4268
        %v4893 = vunpack.c.h.b16 %v4268
        %v4894 = vunpack.c.l.b16 %v4269
        %v4895 = vunpack.c.h.b16 %v4269
        %v4896 = vunpack.c.l.b16 %v4270
        %v4897 = vunpack.c.h.b16 %v4270
        %v4898 = vunpack.c.l.b16 %v4271
        %v4899 = vunpack.c.h.b16 %v4271
        %v4900 = vunpack.c.l.b16 %v4272
        %v4901 = vunpack.c.h.b16 %v4272
        %v4902 = vunpack.c.l.b16 %v4273
        %v4903 = vunpack.c.h.b16 %v4273
        %v4904 = vunpack.c.l.b16 %v4274
        %v4905 = vunpack.c.h.b16 %v4274
        %v4906 = vunpack.c.l.b16 %v4275
        %v4907 = vunpack.c.h.b16 %v4275
        %v4908 = vunpack.c.l.b16 %v4276
        %v4909 = vunpack.c.h.b16 %v4276
        %v4910 = vunpack.c.l.b16 %v4277
        %v4911 = vunpack.c.h.b16 %v4277
        %v4912 = vunpack.c.l.b16 %v4278
        %v4913 = vunpack.c.h.b16 %v4278
        %v4914 = vunpack.c.l.b16 %v4279
        %v4915 = vunpack.c.h.b16 %v4279
        %v4916 = vunpack.c.l.b16 %v4280
        %v4917 = vunpack.c.h.b16 %v4280
        %v4918 = vunpack.c.l.b16 %v4281
        %v4919 = vunpack.c.h.b16 %v4281
        %v4920 = vunpack.c.l.b16 %v4282
        %v4921 = vunpack.c.h.b16 %v4282
        %v4922 = vunpack.c.l.b16 %v4283
        %v4923 = vunpack.c.h.b16 %v4283
        %v4924 = vunpack.c.l.b16 %v4284
        %v4925 = vunpack.c.h.b16 %v4284
        %v4926 = vunpack.c.l.b16 %v4285
        %v4927 = vunpack.c.h.b16 %v4285
        %v4928 = vunpack.c.l.b16 %v4286
        %v4929 = vunpack.c.h.b16 %v4286
        %v4930 = vunpack.c.l.b16 %v4287
        %v4931 = vunpack.c.h.b16 %v4287
        %v4932 = vunpack.c.l.b16 %v4288
        %v4933 = vunpack.c.h.b16 %v4288
        %v4934 = vunpack.c.l.b16 %v4289
        %v4935 = vunpack.c.h.b16 %v4289
        %v4936 = vunpack.c.l.b16 %v4290
        %v4937 = vunpack.c.h.b16 %v4290
        %v4938 = vunpack.c.l.b16 %v4291
        %v4939 = vunpack.c.h.b16 %v4291
        %v4940 = vunpack.c.l.b16 %v4292
        %v4941 = vunpack.c.h.b16 %v4292
        %v4942 = vunpack.c.l.b16 %v4293
        %v4943 = vunpack.c.h.b16 %v4293
        %v4944 = vunpack.c.l.b16 %v4294
        %v4945 = vunpack.c.h.b16 %v4294
        %v4946 = vunpack.c.l.b16 %v4295
        %v4947 = vunpack.c.h.b16 %v4295
        %v4948 = vunpack.c.l.b16 %v4296
        %v4949 = vunpack.c.h.b16 %v4296
        %v4950 = vunpack.c.l.b16 %v4297
        %v4951 = vunpack.c.h.b16 %v4297
        %v4952 = vunpack.c.l.b16 %v4298
        %v4953 = vunpack.c.h.b16 %v4298
        %v4954 = vunpack.c.l.b16 %v4299
        %v4955 = vunpack.c.h.b16 %v4299
        %v4956 = vunpack.c.l.b16 %v4300
        %v4957 = vunpack.c.h.b16 %v4300
        %v4958 = vunpack.c.l.b16 %v4301
        %v4959 = vunpack.c.h.b16 %v4301
        %v4960 = vunpack.c.l.b16 %v4302
        %v4961 = vunpack.c.h.b16 %v4302
        %v4962 = vunpack.c.l.b16 %v4303
        %v4963 = vunpack.c.h.b16 %v4303
        %v4964 = vunpack.c.l.b16 %v4304
        %v4965 = vunpack.c.h.b16 %v4304
        %v4966 = vunpack.c.l.b16 %v4305
        %v4967 = vunpack.c.h.b16 %v4305
        %v4968 = vunpack.c.l.b16 %v4306
        %v4969 = vunpack.c.h.b16 %v4306
        %v4970 = vunpack.c.l.b16 %v4307
        %v4971 = vunpack.c.h.b16 %v4307
        %v4972 = vunpack.c.l.b16 %v4308
        %v4973 = vunpack.c.h.b16 %v4308
        %v4974 = vunpack.c.l.b16 %v4309
        %v4975 = vunpack.c.h.b16 %v4309
        %v4976 = vunpack.c.l.b16 %v4310
        %v4977 = vunpack.c.h.b16 %v4310
        %v4978 = vunpack.c.l.b16 %v4311
        %v4979 = vunpack.c.h.b16 %v4311
        %v4980 = vunpack.c.l.b16 %v4312
        %v4981 = vunpack.c.h.b16 %v4312
        %v4982 = vunpack.c.l.b16 %v4313
        %v4983 = vunpack.c.h.b16 %v4313
        %v4984 = vunpack.c.l.b16 %v4314
        %v4985 = vunpack.c.h.b16 %v4314
        %v4986 = vunpack.c.l.b16 %v4315
        %v4987 = vunpack.c.h.b16 %v4315
        %v4988 = vunpack.c.l.b16 %v4316
        %v4989 = vunpack.c.h.b16 %v4316
        %v4990 = vunpack.c.l.b16 %v4317
        %v4991 = vunpack.c.h.b16 %v4317
        %v4992 = vunpack.c.l.b16 %v4318
        %v4993 = vunpack.c.h.b16 %v4318
        %v4994 = vunpack.c.l.b16 %v4319
        %v4995 = vunpack.c.h.b16 %v4319
        %v4996 = vunpack.c.l.b16 %v4320
        %v4997 = vunpack.c.h.b16 %v4320
        %v4998 = vunpack.c.l.b16 %v4321
        %v4999 = vunpack.c.h.b16 %v4321
        %v5000 = vunpack.c.l.b16 %v4322
        %v5001 = vunpack.c.h.b16 %v4322
        %v5002 = vunpack.c.l.b16 %v4323
        %v5003 = vunpack.c.h.b16 %v4323
        %v5004 = vunpack.c.l.b16 %v4324
        %v5005 = vunpack.c.h.b16 %v4324
        %v5006 = vunpack.c.l.b16 %v4325
        %v5007 = vunpack.c.h.b16 %v4325
        %v5008 = vunpack.c.l.b16 %v4326
        %v5009 = vunpack.c.h.b16 %v4326
        %v5010 = vunpack.c.l.b16 %v4327
        %v5011 = vunpack.c.h.b16 %v4327
        %v5012 = vunpack.c.l.b16 %v4328
        %v5013 = vunpack.c.h.b16 %v4328
        %v5014 = vunpack.c.l.b16 %v4329
        %v5015 = vunpack.c.h.b16 %v4329
        %v5016 = vunpack.c.l.b16 %v4330
        %v5017 = vunpack.c.h.b16 %v4330
        %v5018 = vunpack.c.l.b16 %v4331
        %v5019 = vunpack.c.h.b16 %v4331
        %v5020 = vunpack.c.l.b16 %v4332
        %v5021 = vunpack.c.h.b16 %v4332
        %v5022 = vunpack.c.l.b16 %v4333
        %v5023 = vunpack.c.h.b16 %v4333
        %v5024 = vunpack.c.l.b16 %v4334
        %v5025 = vunpack.c.h.b16 %v4334
        %v5026 = vunpack.c.l.b16 %v4335
        %v5027 = vunpack.c.h.b16 %v4335
        %v5028 = vunpack.c.l.b16 %v4336
        %v5029 = vunpack.c.h.b16 %v4336
        %v5030 = vunpack.c.l.b16 %v4337
        %v5031 = vunpack.c.h.b16 %v4337
        %v5032 = vunpack.c.l.b16 %v4338
        %v5033 = vunpack.c.h.b16 %v4338
        %v5034 = vunpack.c.l.b16 %v4339
        %v5035 = vunpack.c.h.b16 %v4339
        %v5036 = vunpack.c.l.b16 %v4340
        %v5037 = vunpack.c.h.b16 %v4340
        %v5038 = vunpack.c.l.b16 %v4341
        %v5039 = vunpack.c.h.b16 %v4341
        %v5040 = vunpack.c.l.b16 %v4342
        %v5041 = vunpack.c.h.b16 %v4342
        %v5042 = vunpack.c.l.b16 %v4343
        %v5043 = vunpack.c.h.b16 %v4343
        %v5044 = vunpack.c.l.b16 %v4344
        %v5045 = vunpack.c.h.b16 %v4344
        %v5046 = vunpack.c.l.b16 %v4345
        %v5047 = vunpack.c.h.b16 %v4345
        %v5048 = vunpack.c.l.b16 %v4346
        %v5049 = vunpack.c.h.b16 %v4346
        %v5050 = vunpack.c.l.b16 %v4347
        %v5051 = vunpack.c.h.b16 %v4347
        %v5052 = vunpack.c.l.b16 %v4348
        %v5053 = vunpack.c.h.b16 %v4348
        %v5054 = vunpack.c.l.b16 %v4349
        %v5055 = vunpack.c.h.b16 %v4349
        %v5056 = vunpack.c.l.b16 %v4350
        %v5057 = vunpack.c.h.b16 %v4350
        %v5058 = vunpack.c.l.b16 %v4351
        %v5059 = vunpack.c.h.b16 %v4351
        %v5060 = vunpack.c.l.b16 %v4352
        %v5061 = vunpack.c.h.b16 %v4352
        %v5062 = vunpack.c.l.b16 %v4353
        %v5063 = vunpack.c.h.b16 %v4353
        %v5064 = vunpack.c.l.b16 %v4354
        %v5065 = vunpack.c.h.b16 %v4354
        %v5066 = vunpack.c.l.b16 %v4355
        %v5067 = vunpack.c.h.b16 %v4355
        %v5068 = vunpack.c.l.b16 %v4356
        %v5069 = vunpack.c.h.b16 %v4356
        %v5070 = vunpack.c.l.b16 %v4357
        %v5071 = vunpack.c.h.b16 %v4357
        %v5072 = vunpack.c.l.b16 %v4358
        %v5073 = vunpack.c.h.b16 %v4358
        %v5074 = vunpack.c.l.b16 %v4359
        %v5075 = vunpack.c.h.b16 %v4359
        %v5076 = vunpack.c.l.b16 %v4360
        %v5077 = vunpack.c.h.b16 %v4360
        %v5078 = vunpack.c.l.b16 %v4361
        %v5079 = vunpack.c.h.b16 %v4361
        %v5080 = vunpack.c.l.b16 %v4362
        %v5081 = vunpack.c.h.b16 %v4362
        %v5082 = vunpack.c.l.b16 %v4363
        %v5083 = vunpack.c.h.b16 %v4363
        %v5084 = vunpack.c.l.b16 %v4364
        %v5085 = vunpack.c.h.b16 %v4364
        %v5086 = vunpack.c.l.b16 %v4365
        %v5087 = vunpack.c.h.b16 %v4365
        %v5088 = vunpack.c.l.b16 %v4366
        %v5089 = vunpack.c.h.b16 %v4366
        %v5090 = vunpack.c.l.b16 %v4367
        %v5091 = vunpack.c.h.b16 %v4367
        %v5092 = vunpack.c.l.b16 %v4368
        %v5093 = vunpack.c.h.b16 %v4368
        %v5094 = vunpack.c.l.b16 %v4369
        %v5095 = vunpack.c.h.b16 %v4369
        %v5096 = vunpack.c.l.b16 %v4370
        %v5097 = vunpack.c.h.b16 %v4370
        %v5098 = vunpack.c.l.b16 %v4371
        %v5099 = vunpack.c.h.b16 %v4371
        %v5100 = vunpack.c.l.b16 %v4372
        %v5101 = vunpack.c.h.b16 %v4372
        %v5102 = vunpack.c.l.b16 %v4373
        %v5103 = vunpack.c.h.b16 %v4373
        %v5104 = vunpack.c.l.b16 %v4374
        %v5105 = vunpack.c.h.b16 %v4374
        %v5106 = vunpack.c.l.b16 %v4375
        %v5107 = vunpack.c.h.b16 %v4375
        %v5108 = vunpack.c.l.b16 %v4376
        %v5109 = vunpack.c.h.b16 %v4376
        %v5110 = vunpack.c.l.b16 %v4377
        %v5111 = vunpack.c.h.b16 %v4377
        %v5112 = vunpack.c.l.b16 %v4378
        %v5113 = vunpack.c.h.b16 %v4378
        %v5114 = vunpack.c.l.b16 %v4379
        %v5115 = vunpack.c.h.b16 %v4379
        %v5116 = vunpack.c.l.b16 %v4380
        %v5117 = vunpack.c.h.b16 %v4380
        %v5118 = vunpack.c.l.b16 %v4381
        %v5119 = vunpack.c.h.b16 %v4381
        %v5120 = vunpack.c.l.b16 %v4382
        %v5121 = vunpack.c.h.b16 %v4382
        %v5122 = vunpack.c.l.b16 %v4383
        %v5123 = vunpack.c.h.b16 %v4383
        %v5124 = vunpack.c.l.b16 %v4384
        %v5125 = vunpack.c.h.b16 %v4384
        %v5126 = vunpack.c.l.b16 %v4385
        %v5127 = vunpack.c.h.b16 %v4385
        %v5128 = vunpack.c.l.b16 %v4386
        %v5129 = vunpack.c.h.b16 %v4386
        %v5130 = vunpack.c.l.b16 %v4387
        %v5131 = vunpack.c.h.b16 %v4387
        %v5132 = vunpack.c.l.b16 %v4388
        %v5133 = vunpack.c.h.b16 %v4388
        %v5134 = vunpack.c.l.b16 %v4389
        %v5135 = vunpack.c.h.b16 %v4389
        %v5136 = vunpack.c.l.b16 %v4390
        %v5137 = vunpack.c.h.b16 %v4390
        %v5138 = vunpack.c.l.b16 %v4391
        %v5139 = vunpack.c.h.b16 %v4391
        %v5140 = vunpack.c.l.b16 %v4392
        %v5141 = vunpack.c.h.b16 %v4392
        %v5142 = vunpack.c.l.b16 %v4393
        %v5143 = vunpack.c.h.b16 %v4393
        %v5144 = vunpack.c.l.b16 %v4394
        %v5145 = vunpack.c.h.b16 %v4394
        %v5146 = vunpack.c.l.b16 %v4395
        %v5147 = vunpack.c.h.b16 %v4395
        %v5148 = vunpack.c.l.b16 %v4396
        %v5149 = vunpack.c.h.b16 %v4396
        %v5150 = vunpack.c.l.b16 %v4397
        %v5151 = vunpack.c.h.b16 %v4397
        %v5152 = vunpack.c.l.b16 %v4398
        %v5153 = vunpack.c.h.b16 %v4398
        %v5154 = vunpack.c.l.b16 %v4399
        %v5155 = vunpack.c.h.b16 %v4399
        %v5156 = vunpack.c.l.b16 %v4400
        %v5157 = vunpack.c.h.b16 %v4400
        %v5158 = vunpack.c.l.b16 %v4401
        %v5159 = vunpack.c.h.b16 %v4401
        %v5160 = vunpack.c.l.b16 %v4402
        %v5161 = vunpack.c.h.b16 %v4402
        %v5162 = vunpack.c.l.b16 %v4403
        %v5163 = vunpack.c.h.b16 %v4403
        %v5164 = vunpack.c.l.b16 %v4404
        %v5165 = vunpack.c.h.b16 %v4404
        %v5166 = vunpack.c.l.b16 %v4405
        %v5167 = vunpack.c.h.b16 %v4405
        %v5168 = vunpack.c.l.b16 %v4406
        %v5169 = vunpack.c.h.b16 %v4406
        %v5170 = vunpack.c.l.b16 %v4407
        %v5171 = vunpack.c.h.b16 %v4407
        %v5172 = vunpack.c.l.b16 %v4408
        %v5173 = vunpack.c.h.b16 %v4408
        %v5174 = vunpack.c.l.b16 %v4409
        %v5175 = vunpack.c.h.b16 %v4409
        %v5176 = vunpack.c.l.b16 %v4410
        %v5177 = vunpack.c.h.b16 %v4410
        %v5178 = vunpack.c.l.b16 %v4411
        %v5179 = vunpack.c.h.b16 %v4411
        %v5180 = vpack.c.b16 %v4672, %v4668
        %v5181 = vpack.c.b16 %v4673, %v4669
        %v5182 = vpack.c.b16 %v4674, %v4670
        %v5183 = vpack.c.b16 %v4675, %v4671
        %v5184 = vpack.c.b16 %v4680, %v4676
        %v5185 = vpack.c.b16 %v4681, %v4677
        %v5186 = vpack.c.b16 %v4682, %v4678
        %v5187 = vpack.c.b16 %v4683, %v4679
        %v5188 = vpack.c.b16 %v4688, %v4684
        %v5189 = vpack.c.b16 %v4689, %v4685
        %v5190 = vpack.c.b16 %v4690, %v4686
        %v5191 = vpack.c.b16 %v4691, %v4687
        %v5192 = vpack.c.b16 %v4696, %v4692
        %v5193 = vpack.c.b16 %v4697, %v4693
        %v5194 = vpack.c.b16 %v4698, %v4694
        %v5195 = vpack.c.b16 %v4699, %v4695
        %v5196 = vpack.c.b16 %v4704, %v4700
        %v5197 = vpack.c.b16 %v4705, %v4701
        %v5198 = vpack.c.b16 %v4706, %v4702
        %v5199 = vpack.c.b16 %v4707, %v4703
        %v5200 = vpack.c.b16 %v4712, %v4708
        %v5201 = vpack.c.b16 %v4713, %v4709
        %v5202 = vpack.c.b16 %v4714, %v4710
        %v5203 = vpack.c.b16 %v4715, %v4711
        %v5204 = vpack.c.b16 %v4720, %v4716
        %v5205 = vpack.c.b16 %v4721, %v4717
        %v5206 = vpack.c.b16 %v4722, %v4718
        %v5207 = vpack.c.b16 %v4723, %v4719
        %v5208 = vpack.c.b16 %v4728, %v4724
        %v5209 = vpack.c.b16 %v4729, %v4725
        %v5210 = vpack.c.b16 %v4730, %v4726
        %v5211 = vpack.c.b16 %v4731, %v4727
        %v5212 = vpack.c.b16 %v4736, %v4732
        %v5213 = vpack.c.b16 %v4737, %v4733
        %v5214 = vpack.c.b16 %v4738, %v4734
        %v5215 = vpack.c.b16 %v4739, %v4735
        %v5216 = vpack.c.b16 %v4744, %v4740
        %v5217 = vpack.c.b16 %v4745, %v4741
        %v5218 = vpack.c.b16 %v4746, %v4742
        %v5219 = vpack.c.b16 %v4747, %v4743
        %v5220 = vpack.c.b16 %v4752, %v4748
        %v5221 = vpack.c.b16 %v4753, %v4749
        %v5222 = vpack.c.b16 %v4754, %v4750
        %v5223 = vpack.c.b16 %v4755, %v4751
        %v5224 = vpack.c.b16 %v4760, %v4756
        %v5225 = vpack.c.b16 %v4761, %v4757
        %v5226 = vpack.c.b16 %v4762, %v4758
        %v5227 = vpack.c.b16 %v4763, %v4759
        %v5228 = vpack.c.b16 %v4768, %v4764
        %v5229 = vpack.c.b16 %v4769, %v4765
        %v5230 = vpack.c.b16 %v4770, %v4766
        %v5231 = vpack.c.b16 %v4771, %v4767
        %v5232 = vpack.c.b16 %v4776, %v4772
        %v5233 = vpack.c.b16 %v4777, %v4773
        %v5234 = vpack.c.b16 %v4778, %v4774
        %v5235 = vpack.c.b16 %v4779, %v4775
        %v5236 = vpack.c.b16 %v4784, %v4780
        %v5237 = vpack.c.b16 %v4785, %v4781
        %v5238 = vpack.c.b16 %v4786, %v4782
        %v5239 = vpack.c.b16 %v4787, %v4783
        %v5240 = vpack.c.b16 %v4792, %v4788
        %v5241 = vpack.c.b16 %v4793, %v4789
        %v5242 = vpack.c.b16 %v4794, %v4790
        %v5243 = vpack.c.b16 %v4795, %v4791
        %v5244 = vpack.c.b16 %v4800, %v4796
        %v5245 = vpack.c.b16 %v4801, %v4797
        %v5246 = vpack.c.b16 %v4802, %v4798
        %v5247 = vpack.c.b16 %v4803, %v4799
        %v5248 = vpack.c.b16 %v4808, %v4804
        %v5249 = vpack.c.b16 %v4809, %v4805
        %v5250 = vpack.c.b16 %v4810, %v4806
        %v5251 = vpack.c.b16 %v4811, %v4807
        %v5252 = vpack.c.b16 %v4816, %v4812
        %v5253 = vpack.c.b16 %v4817, %v4813
        %v5254 = vpack.c.b16 %v4818, %v4814
        %v5255 = vpack.c.b16 %v4819, %v4815
        %v5256 = vpack.c.b16 %v4824, %v4820
        %v5257 = vpack.c.b16 %v4825, %v4821
        %v5258 = vpack.c.b16 %v4826, %v4822
        %v5259 = vpack.c.b16 %v4827, %v4823
        %v5260 = vpack.c.b16 %v4832, %v4828
        %v5261 = vpack.c.b16 %v4833, %v4829
        %v5262 = vpack.c.b16 %v4834, %v4830
        %v5263 = vpack.c.b16 %v4835, %v4831
        %v5264 = vpack.c.b16 %v4840, %v4836
        %v5265 = vpack.c.b16 %v4841, %v4837
        %v5266 = vpack.c.b16 %v4842, %v4838
        %v5267 = vpack.c.b16 %v4843, %v4839
        %v5268 = vpack.c.b16 %v4848, %v4844
        %v5269 = vpack.c.b16 %v4849, %v4845
        %v5270 = vpack.c.b16 %v4850, %v4846
        %v5271 = vpack.c.b16 %v4851, %v4847
        %v5272 = vpack.c.b16 %v4856, %v4852
        %v5273 = vpack.c.b16 %v4857, %v4853
        %v5274 = vpack.c.b16 %v4858, %v4854
        %v5275 = vpack.c.b16 %v4859, %v4855
        %v5276 = vpack.c.b16 %v4864, %v4860
        %v5277 = vpack.c.b16 %v4865, %v4861
        %v5278 = vpack.c.b16 %v4866, %v4862
        %v5279 = vpack.c.b16 %v4867, %v4863
        %v5280 = vpack.c.b16 %v4872, %v4868
        %v5281 = vpack.c.b16 %v4873, %v4869
        %v5282 = vpack.c.b16 %v4874, %v4870
        %v5283 = vpack.c.b16 %v4875, %v4871
        %v5284 = vpack.c.b16 %v4880, %v4876
        %v5285 = vpack.c.b16 %v4881, %v4877
        %v5286 = vpack.c.b16 %v4882, %v4878
        %v5287 = vpack.c.b16 %v4883, %v4879
        %v5288 = vpack.c.b16 %v4888, %v4884
        %v5289 = vpack.c.b16 %v4889, %v4885
        %v5290 = vpack.c.b16 %v4890, %v4886
        %v5291 = vpack.c.b16 %v4891, %v4887
        %v5292 = vpack.c.b16 %v4896, %v4892
        %v5293 = vpack.c.b16 %v4897, %v4893
        %v5294 = vpack.c.b16 %v4898, %v4894
        %v5295 = vpack.c.b16 %v4899, %v4895
        %v5296 = vpack.c.b16 %v4904, %v4900
        %v5297 = vpack.c.b16 %v4905, %v4901
        %v5298 = vpack.c.b16 %v4906, %v4902
        %v5299 = vpack.c.b16 %v4907, %v4903
        %v5300 = vpack.c.b16 %v4912, %v4908
        %v5301 = vpack.c.b16 %v4913, %v4909
        %v5302 = vpack.c.b16 %v4914, %v4910
        %v5303 = vpack.c.b16 %v4915, %v4911
        %v5304 = vpack.c.b16 %v4920, %v4916
        %v5305 = vpack.c.b16 %v4921, %v4917
        %v5306 = vpack.c.b16 %v4922, %v4918
        %v5307 = vpack.c.b16 %v4923, %v4919
        %v5308 = vpack.c.b16 %v4928, %v4924
        %v5309 = vpack.c.b16 %v4929, %v4925
        %v5310 = vpack.c.b16 %v4930, %v4926
        %v5311 = vpack.c.b16 %v4931, %v4927
        %v5312 = vpack.c.b16 %v4936, %v4932
        %v5313 = vpack.c.b16 %v4937, %v4933
        %v5314 = vpack.c.b16 %v4938, %v4934
        %v5315 = vpack.c.b16 %v4939, %v4935
        %v5316 = vpack.c.b16 %v4944, %v4940
        %v5317 = vpack.c.b16 %v4945, %v4941
        %v5318 = vpack.c.b16 %v4946, %v4942
        %v5319 = vpack.c.b16 %v4947, %v4943
        %v5320 = vpack.c.b16 %v4952, %v4948
        %v5321 = vpack.c.b16 %v4953, %v4949
        %v5322 = vpack.c.b16 %v4954, %v4950
        %v5323 = vpack.c.b16 %v4955, %v4951
        %v5324 = vpack.c.b16 %v4960, %v4956
        %v5325 = vpack.c.b16 %v4961, %v4957
        %v5326 = vpack.c.b16 %v4962, %v4958
        %v5327 = vpack.c.b16 %v4963, %v4959
        %v5328 = vpack.c.b16 %v4968, %v4964
        %v5329 = vpack.c.b16 %v4969, %v4965
        %v5330 = vpack.c.b16 %v4970, %v4966
        %v5331 = vpack.c.b16 %v4971, %v4967
        %v5332 = vpack.c.b16 %v4976, %v4972
        %v5333 = vpack.c.b16 %v4977, %v4973
        %v5334 = vpack.c.b16 %v4978, %v4974
        %v5335 = vpack.c.b16 %v4979, %v4975
        %v5336 = vpack.c.b16 %v4984, %v4980
        %v5337 = vpack.c.b16 %v4985, %v4981
        %v5338 = vpack.c.b16 %v4986, %v4982
        %v5339 = vpack.c.b16 %v4987, %v4983
        %v5340 = vpack.c.b16 %v4992, %v4988
        %v5341 = vpack.c.b16 %v4993, %v4989
        %v5342 = vpack.c.b16 %v4994, %v4990
        %v5343 = vpack.c.b16 %v4995, %v4991
        %v5344 = vpack.c.b16 %v5000, %v4996
        %v5345 = vpack.c.b16 %v5001, %v4997
        %v5346 = vpack.c.b16 %v5002, %v4998
        %v5347 = vpack.c.b16 %v5003, %v4999
        %v5348 = vpack.c.b16 %v5008, %v5004
        %v5349 = vpack.c.b16 %v5009, %v5005
        %v5350 = vpack.c.b16 %v5010, %v5006
        %v5351 = vpack.c.b16 %v5011, %v5007
        %v5352 = vpack.c.b16 %v5016, %v5012
        %v5353 = vpack.c.b16 %v5017, %v5013
        %v5354 = vpack.c.b16 %v5018, %v5014
        %v5355 = vpack.c.b16 %v5019, %v5015
        %v5356 = vpack.c.b16 %v5024, %v5020
        %v5357 = vpack.c.b16 %v5025, %v5021
        %v5358 = vpack.c.b16 %v5026, %v5022
        %v5359 = vpack.c.b16 %v5027, %v5023
        %v5360 = vpack.c.b16 %v5032, %v5028
        %v5361 = vpack.c.b16 %v5033, %v5029
        %v5362 = vpack.c.b16 %v5034, %v5030
        %v5363 = vpack.c.b16 %v5035, %v5031
        %v5364 = vpack.c.b16 %v5040, %v5036
        %v5365 = vpack.c.b16 %v5041, %v5037
        %v5366 = vpack.c.b16 %v5042, %v5038
        %v5367 = vpack.c.b16 %v5043, %v5039
        %v5368 = vpack.c.b16 %v5048, %v5044
        %v5369 = vpack.c.b16 %v5049, %v5045
        %v5370 = vpack.c.b16 %v5050, %v5046
        %v5371 = vpack.c.b16 %v5051, %v5047
        %v5372 = vpack.c.b16 %v5056, %v5052
        %v5373 = vpack.c.b16 %v5057, %v5053
        %v5374 = vpack.c.b16 %v5058, %v5054
        %v5375 = vpack.c.b16 %v5059, %v5055
        %v5376 = vpack.c.b16 %v5064, %v5060
        %v5377 = vpack.c.b16 %v5065, %v5061
        %v5378 = vpack.c.b16 %v5066, %v5062
        %v5379 = vpack.c.b16 %v5067, %v5063
        %v5380 = vpack.c.b16 %v5072, %v5068
        %v5381 = vpack.c.b16 %v5073, %v5069
        %v5382 = vpack.c.b16 %v5074, %v5070
        %v5383 = vpack.c.b16 %v5075, %v5071
        %v5384 = vpack.c.b16 %v5080, %v5076
        %v5385 = vpack.c.b16 %v5081, %v5077
        %v5386 = vpack.c.b16 %v5082, %v5078
        %v5387 = vpack.c.b16 %v5083, %v5079
        %v5388 = vpack.c.b16 %v5088, %v5084
        %v5389 = vpack.c.b16 %v5089, %v5085
        %v5390 = vpack.c.b16 %v5090, %v5086
        %v5391 = vpack.c.b16 %v5091, %v5087
        %v5392 = vpack.c.b16 %v5096, %v5092
        %v5393 = vpack.c.b16 %v5097, %v5093
        %v5394 = vpack.c.b16 %v5098, %v5094
        %v5395 = vpack.c.b16 %v5099, %v5095
        %v5396 = vpack.c.b16 %v5104, %v5100
        %v5397 = vpack.c.b16 %v5105, %v5101
        %v5398 = vpack.c.b16 %v5106, %v5102
        %v5399 = vpack.c.b16 %v5107, %v5103
        %v5400 = vpack.c.b16 %v5112, %v5108
        %v5401 = vpack.c.b16 %v5113, %v5109
        %v5402 = vpack.c.b16 %v5114, %v5110
        %v5403 = vpack.c.b16 %v5115, %v5111
        %v5404 = vpack.c.b16 %v5120, %v5116
        %v5405 = vpack.c.b16 %v5121, %v5117
        %v5406 = vpack.c.b16 %v5122, %v5118
        %v5407 = vpack.c.b16 %v5123, %v5119
        %v5408 = vpack.c.b16 %v5128, %v5124
        %v5409 = vpack.c.b16 %v5129, %v5125
        %v5410 = vpack.c.b16 %v5130, %v5126
        %v5411 = vpack.c.b16 %v5131, %v5127
        %v5412 = vpack.c.b16 %v5136, %v5132
        %v5413 = vpack.c.b16 %v5137, %v5133
        %v5414 = vpack.c.b16 %v5138, %v5134
        %v5415 = vpack.c.b16 %v5139, %v5135
        %v5416 = vpack.c.b16 %v5144, %v5140
        %v5417 = vpack.c.b16 %v5145, %v5141
        %v5418 = vpack.c.b16 %v5146, %v5142
        %v5419 = vpack.c.b16 %v5147, %v5143
        %v5420 = vpack.c.b16 %v5152, %v5148
        %v5421 = vpack.c.b16 %v5153, %v5149
        %v5422 = vpack.c.b16 %v5154, %v5150
        %v5423 = vpack.c.b16 %v5155, %v5151
        %v5424 = vpack.c.b16 %v5160, %v5156
        %v5425 = vpack.c.b16 %v5161, %v5157
        %v5426 = vpack.c.b16 %v5162, %v5158
        %v5427 = vpack.c.b16 %v5163, %v5159
        %v5428 = vpack.c.b16 %v5168, %v5164
        %v5429 = vpack.c.b16 %v5169, %v5165
        %v5430 = vpack.c.b16 %v5170, %v5166
        %v5431 = vpack.c.b16 %v5171, %v5167
        %v5432 = vpack.c.b16 %v5176, %v5172
        %v5433 = vpack.c.b16 %v5177, %v5173
        %v5434 = vpack.c.b16 %v5178, %v5174
        %v5435 = vpack.c.b16 %v5179, %v5175
        %5692 = vmatprep.subr.bf16.mxu0 %v5209
        %5693 = vmatpush1.bf16.msra.mxu0 %v5208
        %5694 = vmatprep.subr.bf16.mxu0 %v5205
        %5695 = vmatpush1.bf16.msra.mxu0 %v5204
        %5696 = vmatprep.subr.bf16.mxu0 %v5201
        %5697 = vmatpush1.bf16.msra.mxu0 %v5200
        %5698 = vmatprep.subr.bf16.mxu0 %v5197
        %5699 = vmatpush1.bf16.msra.mxu0 %v5196
        %5700 = vmatprep.subr.bf16.mxu0 %v5193
        %5701 = vmatpush1.bf16.msra.mxu0 %v5192
        %5702 = vmatprep.subr.bf16.mxu0 %v5189
        %5703 = vmatpush1.bf16.msra.mxu0 %v5188
        %5704 = vmatprep.subr.bf16.mxu0 %v5185
        %5705 = vmatpush1.bf16.msra.mxu0 %v5184
        %5706 = vmatprep.subr.bf16.mxu0 %v5181
        %5707 = vmatpush1.bf16.msra.mxu0 %v5180
        %5708 = vmatprep.subr.bf16.mxu0 %v5241
        %5709 = vmatpush2.bf16.msra.mxu0 %v5240
        %5710 = vmatprep.subr.bf16.mxu0 %v5237
        %5711 = vmatpush2.bf16.msra.mxu0 %v5236
        %5712 = vmatprep.subr.bf16.mxu0 %v5233
        %5713 = vmatpush2.bf16.msra.mxu0 %v5232
        %5714 = vmatprep.subr.bf16.mxu0 %v5229
        %5715 = vmatpush2.bf16.msra.mxu0 %v5228
        %5716 = vmatprep.subr.bf16.mxu0 %v5225
        %5717 = vmatpush2.bf16.msra.mxu0 %v5224
        %5718 = vmatprep.subr.bf16.mxu0 %v5221
        %5719 = vmatpush2.bf16.msra.mxu0 %v5220
        %5720 = vmatprep.subr.bf16.mxu0 %v5217
        %5721 = vmatpush2.bf16.msra.mxu0 %v5216
        %5722 = vmatprep.subr.bf16.mxu0 %v5213
        %5723 = vmatpush2.bf16.msra.mxu0 %v5212
        %5724 = vmatprep.mubr.bf16.mxu0 %v863
        %5725 = vmatmul.mubr.bf16.gmra.mxu0 %v862
        %v5726 = vpop.f32.mrf.mxu0
        %v5727 = vadd.f32 0.0, %v5726
        %v5728 = vpop.f32.mrf.mxu0
        %v5729 = vadd.f32 0.0, %v5728
        %v5730 = vpop.f32.mrf.mxu0
        %v5731 = vadd.f32 0.0, %v5730
        %v5732 = vpop.f32.mrf.mxu0
        %v5733 = vadd.f32 0.0, %v5732
        %5734 = vdwg.mxu0
        %5735 = vmatprep.subr.bf16.mxu0 %v5273
        %5736 = vmatpush1.bf16.msra.mxu0 %v5272
        %5737 = vmatprep.subr.bf16.mxu0 %v5269
        %5738 = vmatpush1.bf16.msra.mxu0 %v5268
        %5739 = vmatprep.subr.bf16.mxu0 %v5265
        %5740 = vmatpush1.bf16.msra.mxu0 %v5264
        %5741 = vmatprep.subr.bf16.mxu0 %v5261
        %5742 = vmatpush1.bf16.msra.mxu0 %v5260
        %5743 = vmatprep.subr.bf16.mxu0 %v5257
        %5744 = vmatpush1.bf16.msra.mxu0 %v5256
        %5745 = vmatprep.subr.bf16.mxu0 %v5253
        %5746 = vmatpush1.bf16.msra.mxu0 %v5252
        %5747 = vmatprep.subr.bf16.mxu0 %v5249
        %5748 = vmatpush1.bf16.msra.mxu0 %v5248
        %5749 = vmatprep.subr.bf16.mxu0 %v5245
        %5750 = vmatpush1.bf16.msra.mxu0 %v5244
        %5751 = vmatprep.subr.bf16.mxu0 %v5305
        %5752 = vmatpush2.bf16.msra.mxu0 %v5304
        %5753 = vmatprep.subr.bf16.mxu0 %v5301
        %5754 = vmatpush2.bf16.msra.mxu0 %v5300
        %5755 = vmatprep.subr.bf16.mxu0 %v5297
        %5756 = vmatpush2.bf16.msra.mxu0 %v5296
        %5757 = vmatprep.subr.bf16.mxu0 %v5293
        %5758 = vmatpush2.bf16.msra.mxu0 %v5292
        %5759 = vmatprep.subr.bf16.mxu0 %v5289
        %5760 = vmatpush2.bf16.msra.mxu0 %v5288
        %5761 = vmatprep.subr.bf16.mxu0 %v5285
        %5762 = vmatpush2.bf16.msra.mxu0 %v5284
        %5763 = vmatprep.subr.bf16.mxu0 %v5281
        %5764 = vmatpush2.bf16.msra.mxu0 %v5280
        %5765 = vmatprep.subr.bf16.mxu0 %v5277
        %5766 = vmatpush2.bf16.msra.mxu0 %v5276
        %5767 = vmatprep.mubr.bf16.mxu0 %v865
        %5768 = vmatmul.mubr.bf16.gmra.mxu0 %v864
        %v5769 = vpop.f32.mrf.mxu0
        %v5770 = vadd.f32 %v5727, %v5769
        %v5771 = vpop.f32.mrf.mxu0
        %v5772 = vadd.f32 %v5729, %v5771
        %v5773 = vpop.f32.mrf.mxu0
        %v5774 = vadd.f32 %v5731, %v5773
        %v5775 = vpop.f32.mrf.mxu0
        %v5776 = vadd.f32 %v5733, %v5775
        %5777 = vdwg.mxu0
        %5778 = vmatprep.subr.bf16.mxu0 %v5337
        %5779 = vmatpush1.bf16.msra.mxu0 %v5336
        %5780 = vmatprep.subr.bf16.mxu0 %v5333
        %5781 = vmatpush1.bf16.msra.mxu0 %v5332
        %5782 = vmatprep.subr.bf16.mxu0 %v5329
        %5783 = vmatpush1.bf16.msra.mxu0 %v5328
        %5784 = vmatprep.subr.bf16.mxu0 %v5325
        %5785 = vmatpush1.bf16.msra.mxu0 %v5324
        %5786 = vmatprep.subr.bf16.mxu0 %v5321
        %5787 = vmatpush1.bf16.msra.mxu0 %v5320
        %5788 = vmatprep.subr.bf16.mxu0 %v5317
        %5789 = vmatpush1.bf16.msra.mxu0 %v5316
        %5790 = vmatprep.subr.bf16.mxu0 %v5313
        %5791 = vmatpush1.bf16.msra.mxu0 %v5312
        %5792 = vmatprep.subr.bf16.mxu0 %v5309
        %5793 = vmatpush1.bf16.msra.mxu0 %v5308
        %5794 = vmatprep.subr.bf16.mxu0 %v5369
        %5795 = vmatpush2.bf16.msra.mxu0 %v5368
        %5796 = vmatprep.subr.bf16.mxu0 %v5365
        %5797 = vmatpush2.bf16.msra.mxu0 %v5364
        %5798 = vmatprep.subr.bf16.mxu0 %v5361
        %5799 = vmatpush2.bf16.msra.mxu0 %v5360
        %5800 = vmatprep.subr.bf16.mxu0 %v5357
        %5801 = vmatpush2.bf16.msra.mxu0 %v5356
        %5802 = vmatprep.subr.bf16.mxu0 %v5353
        %5803 = vmatpush2.bf16.msra.mxu0 %v5352
        %5804 = vmatprep.subr.bf16.mxu0 %v5349
        %5805 = vmatpush2.bf16.msra.mxu0 %v5348
        %5806 = vmatprep.subr.bf16.mxu0 %v5345
        %5807 = vmatpush2.bf16.msra.mxu0 %v5344
        %5808 = vmatprep.subr.bf16.mxu0 %v5341
        %5809 = vmatpush2.bf16.msra.mxu0 %v5340
        %5810 = vmatprep.mubr.bf16.mxu0 %v867
        %5811 = vmatmul.mubr.bf16.gmra.mxu0 %v866
        %v5812 = vpop.f32.mrf.mxu0
        %v5813 = vadd.f32 %v5770, %v5812
        %v5814 = vpop.f32.mrf.mxu0
        %v5815 = vadd.f32 %v5772, %v5814
        %v5816 = vpop.f32.mrf.mxu0
        %v5817 = vadd.f32 %v5774, %v5816
        %v5818 = vpop.f32.mrf.mxu0
        %v5819 = vadd.f32 %v5776, %v5818
        %5820 = vdwg.mxu0
        %5821 = vmatprep.subr.bf16.mxu0 %v5401
        %5822 = vmatpush1.bf16.msra.mxu0 %v5400
        %5823 = vmatprep.subr.bf16.mxu0 %v5397
        %5824 = vmatpush1.bf16.msra.mxu0 %v5396
        %5825 = vmatprep.subr.bf16.mxu0 %v5393
        %5826 = vmatpush1.bf16.msra.mxu0 %v5392
        %5827 = vmatprep.subr.bf16.mxu0 %v5389
        %5828 = vmatpush1.bf16.msra.mxu0 %v5388
        %5829 = vmatprep.subr.bf16.mxu0 %v5385
        %5830 = vmatpush1.bf16.msra.mxu0 %v5384
        %5831 = vmatprep.subr.bf16.mxu0 %v5381
        %5832 = vmatpush1.bf16.msra.mxu0 %v5380
        %5833 = vmatprep.subr.bf16.mxu0 %v5377
        %5834 = vmatpush1.bf16.msra.mxu0 %v5376
        %5835 = vmatprep.subr.bf16.mxu0 %v5373
        %5836 = vmatpush1.bf16.msra.mxu0 %v5372
        %5837 = vmatprep.subr.bf16.mxu0 %v5433
        %5838 = vmatpush2.bf16.msra.mxu0 %v5432
        %5839 = vmatprep.subr.bf16.mxu0 %v5429
        %5840 = vmatpush2.bf16.msra.mxu0 %v5428
        %5841 = vmatprep.subr.bf16.mxu0 %v5425
        %5842 = vmatpush2.bf16.msra.mxu0 %v5424
        %5843 = vmatprep.subr.bf16.mxu0 %v5421
        %5844 = vmatpush2.bf16.msra.mxu0 %v5420
        %5845 = vmatprep.subr.bf16.mxu0 %v5417
        %5846 = vmatpush2.bf16.msra.mxu0 %v5416
        %5847 = vmatprep.subr.bf16.mxu0 %v5413
        %5848 = vmatpush2.bf16.msra.mxu0 %v5412
        %5849 = vmatprep.subr.bf16.mxu0 %v5409
        %5850 = vmatpush2.bf16.msra.mxu0 %v5408
        %5851 = vmatprep.subr.bf16.mxu0 %v5405
        %5852 = vmatpush2.bf16.msra.mxu0 %v5404
        %5853 = vmatprep.mubr.bf16.mxu0 %v869
        %5854 = vmatmul.mubr.bf16.gmra.mxu0 %v868
        %v5855 = vpop.f32.mrf.mxu0
        %v5856 = vadd.f32 %v5813, %v5855
        %v5857 = vpop.f32.mrf.mxu0
        %v5858 = vadd.f32 %v5815, %v5857
        %v5859 = vpop.f32.mrf.mxu0
        %v5860 = vadd.f32 %v5817, %v5859
        %v5861 = vpop.f32.mrf.mxu0
        %v5862 = vadd.f32 %v5819, %v5861
        %5863 = vdwg.mxu0
        %5864 = vmatprep.subr.bf16.mxu0 %v5211
        %5865 = vmatpush1.bf16.msra.mxu0 %v5210
        %5866 = vmatprep.subr.bf16.mxu0 %v5207
        %5867 = vmatpush1.bf16.msra.mxu0 %v5206
        %5868 = vmatprep.subr.bf16.mxu0 %v5203
        %5869 = vmatpush1.bf16.msra.mxu0 %v5202
        %5870 = vmatprep.subr.bf16.mxu0 %v5199
        %5871 = vmatpush1.bf16.msra.mxu0 %v5198
        %5872 = vmatprep.subr.bf16.mxu0 %v5195
        %5873 = vmatpush1.bf16.msra.mxu0 %v5194
        %5874 = vmatprep.subr.bf16.mxu0 %v5191
        %5875 = vmatpush1.bf16.msra.mxu0 %v5190
        %5876 = vmatprep.subr.bf16.mxu0 %v5187
        %5877 = vmatpush1.bf16.msra.mxu0 %v5186
        %5878 = vmatprep.subr.bf16.mxu0 %v5183
        %5879 = vmatpush1.bf16.msra.mxu0 %v5182
        %5880 = vmatprep.subr.bf16.mxu0 %v5243
        %5881 = vmatpush2.bf16.msra.mxu0 %v5242
        %5882 = vmatprep.subr.bf16.mxu0 %v5239
        %5883 = vmatpush2.bf16.msra.mxu0 %v5238
        %5884 = vmatprep.subr.bf16.mxu0 %v5235
        %5885 = vmatpush2.bf16.msra.mxu0 %v5234
        %5886 = vmatprep.subr.bf16.mxu0 %v5231
        %5887 = vmatpush2.bf16.msra.mxu0 %v5230
        %5888 = vmatprep.subr.bf16.mxu0 %v5227
        %5889 = vmatpush2.bf16.msra.mxu0 %v5226
        %5890 = vmatprep.subr.bf16.mxu0 %v5223
        %5891 = vmatpush2.bf16.msra.mxu0 %v5222
        %5892 = vmatprep.subr.bf16.mxu0 %v5219
        %5893 = vmatpush2.bf16.msra.mxu0 %v5218
        %5894 = vmatprep.subr.bf16.mxu0 %v5215
        %5895 = vmatpush2.bf16.msra.mxu0 %v5214
        %5896 = vmatprep.mubr.bf16.mxu0 %v863
        %5897 = vmatmul.mubr.bf16.gmra.mxu0 %v862
        %v5898 = vpop.f32.mrf.mxu0
        %v5899 = vadd.f32 0.0, %v5898
        %v5900 = vpop.f32.mrf.mxu0
        %v5901 = vadd.f32 0.0, %v5900
        %v5902 = vpop.f32.mrf.mxu0
        %v5903 = vadd.f32 0.0, %v5902
        %v5904 = vpop.f32.mrf.mxu0
        %v5905 = vadd.f32 0.0, %v5904
        %5906 = vdwg.mxu0
        %5907 = vmatprep.subr.bf16.mxu0 %v5275
        %5908 = vmatpush1.bf16.msra.mxu0 %v5274
        %5909 = vmatprep.subr.bf16.mxu0 %v5271
        %5910 = vmatpush1.bf16.msra.mxu0 %v5270
        %5911 = vmatprep.subr.bf16.mxu0 %v5267
        %5912 = vmatpush1.bf16.msra.mxu0 %v5266
        %5913 = vmatprep.subr.bf16.mxu0 %v5263
        %5914 = vmatpush1.bf16.msra.mxu0 %v5262
        %5915 = vmatprep.subr.bf16.mxu0 %v5259
        %5916 = vmatpush1.bf16.msra.mxu0 %v5258
        %5917 = vmatprep.subr.bf16.mxu0 %v5255
        %5918 = vmatpush1.bf16.msra.mxu0 %v5254
        %5919 = vmatprep.subr.bf16.mxu0 %v5251
        %5920 = vmatpush1.bf16.msra.mxu0 %v5250
        %5921 = vmatprep.subr.bf16.mxu0 %v5247
        %5922 = vmatpush1.bf16.msra.mxu0 %v5246
        %5923 = vmatprep.subr.bf16.mxu0 %v5307
        %5924 = vmatpush2.bf16.msra.mxu0 %v5306
        %5925 = vmatprep.subr.bf16.mxu0 %v5303
        %5926 = vmatpush2.bf16.msra.mxu0 %v5302
        %5927 = vmatprep.subr.bf16.mxu0 %v5299
        %5928 = vmatpush2.bf16.msra.mxu0 %v5298
        %5929 = vmatprep.subr.bf16.mxu0 %v5295
        %5930 = vmatpush2.bf16.msra.mxu0 %v5294
        %5931 = vmatprep.subr.bf16.mxu0 %v5291
        %5932 = vmatpush2.bf16.msra.mxu0 %v5290
        %5933 = vmatprep.subr.bf16.mxu0 %v5287
        %5934 = vmatpush2.bf16.msra.mxu0 %v5286
        %5935 = vmatprep.subr.bf16.mxu0 %v5283
        %5936 = vmatpush2.bf16.msra.mxu0 %v5282
        %5937 = vmatprep.subr.bf16.mxu0 %v5279
        %5938 = vmatpush2.bf16.msra.mxu0 %v5278
        %5939 = vmatprep.mubr.bf16.mxu0 %v865
        %5940 = vmatmul.mubr.bf16.gmra.mxu0 %v864
        %v5941 = vpop.f32.mrf.mxu0
        %v5942 = vadd.f32 %v5899, %v5941
        %v5943 = vpop.f32.mrf.mxu0
        %v5944 = vadd.f32 %v5901, %v5943
        %v5945 = vpop.f32.mrf.mxu0
        %v5946 = vadd.f32 %v5903, %v5945
        %v5947 = vpop.f32.mrf.mxu0
        %v5948 = vadd.f32 %v5905, %v5947
        %5949 = vdwg.mxu0
        %5950 = vmatprep.subr.bf16.mxu0 %v5339
        %5951 = vmatpush1.bf16.msra.mxu0 %v5338
        %5952 = vmatprep.subr.bf16.mxu0 %v5335
        %5953 = vmatpush1.bf16.msra.mxu0 %v5334
        %5954 = vmatprep.subr.bf16.mxu0 %v5331
        %5955 = vmatpush1.bf16.msra.mxu0 %v5330
        %5956 = vmatprep.subr.bf16.mxu0 %v5327
        %5957 = vmatpush1.bf16.msra.mxu0 %v5326
        %5958 = vmatprep.subr.bf16.mxu0 %v5323
        %5959 = vmatpush1.bf16.msra.mxu0 %v5322
        %5960 = vmatprep.subr.bf16.mxu0 %v5319
        %5961 = vmatpush1.bf16.msra.mxu0 %v5318
        %5962 = vmatprep.subr.bf16.mxu0 %v5315
        %5963 = vmatpush1.bf16.msra.mxu0 %v5314
        %5964 = vmatprep.subr.bf16.mxu0 %v5311
        %5965 = vmatpush1.bf16.msra.mxu0 %v5310
        %5966 = vmatprep.subr.bf16.mxu0 %v5371
        %5967 = vmatpush2.bf16.msra.mxu0 %v5370
        %5968 = vmatprep.subr.bf16.mxu0 %v5367
        %5969 = vmatpush2.bf16.msra.mxu0 %v5366
        %5970 = vmatprep.subr.bf16.mxu0 %v5363
        %5971 = vmatpush2.bf16.msra.mxu0 %v5362
        %5972 = vmatprep.subr.bf16.mxu0 %v5359
        %5973 = vmatpush2.bf16.msra.mxu0 %v5358
        %5974 = vmatprep.subr.bf16.mxu0 %v5355
        %5975 = vmatpush2.bf16.msra.mxu0 %v5354
        %5976 = vmatprep.subr.bf16.mxu0 %v5351
        %5977 = vmatpush2.bf16.msra.mxu0 %v5350
        %5978 = vmatprep.subr.bf16.mxu0 %v5347
        %5979 = vmatpush2.bf16.msra.mxu0 %v5346
        %5980 = vmatprep.subr.bf16.mxu0 %v5343
        %5981 = vmatpush2.bf16.msra.mxu0 %v5342
        %5982 = vmatprep.mubr.bf16.mxu0 %v867
        %5983 = vmatmul.mubr.bf16.gmra.mxu0 %v866
        %v5984 = vpop.f32.mrf.mxu0
        %v5985 = vadd.f32 %v5942, %v5984
        %v5986 = vpop.f32.mrf.mxu0
        %v5987 = vadd.f32 %v5944, %v5986
        %v5988 = vpop.f32.mrf.mxu0
        %v5989 = vadd.f32 %v5946, %v5988
        %v5990 = vpop.f32.mrf.mxu0
        %v5991 = vadd.f32 %v5948, %v5990
        %5992 = vdwg.mxu0
        %5993 = vmatprep.subr.bf16.mxu0 %v5403
        %5994 = vmatpush1.bf16.msra.mxu0 %v5402
        %5995 = vmatprep.subr.bf16.mxu0 %v5399
        %5996 = vmatpush1.bf16.msra.mxu0 %v5398
        %5997 = vmatprep.subr.bf16.mxu0 %v5395
        %5998 = vmatpush1.bf16.msra.mxu0 %v5394
        %5999 = vmatprep.subr.bf16.mxu0 %v5391
        %6000 = vmatpush1.bf16.msra.mxu0 %v5390
        %6001 = vmatprep.subr.bf16.mxu0 %v5387
        %6002 = vmatpush1.bf16.msra.mxu0 %v5386
        %6003 = vmatprep.subr.bf16.mxu0 %v5383
        %6004 = vmatpush1.bf16.msra.mxu0 %v5382
        %6005 = vmatprep.subr.bf16.mxu0 %v5379
        %6006 = vmatpush1.bf16.msra.mxu0 %v5378
        %6007 = vmatprep.subr.bf16.mxu0 %v5375
        %6008 = vmatpush1.bf16.msra.mxu0 %v5374
        %6009 = vmatprep.subr.bf16.mxu0 %v5435
        %6010 = vmatpush2.bf16.msra.mxu0 %v5434
        %6011 = vmatprep.subr.bf16.mxu0 %v5431
        %6012 = vmatpush2.bf16.msra.mxu0 %v5430
        %6013 = vmatprep.subr.bf16.mxu0 %v5427
        %6014 = vmatpush2.bf16.msra.mxu0 %v5426
        %6015 = vmatprep.subr.bf16.mxu0 %v5423
        %6016 = vmatpush2.bf16.msra.mxu0 %v5422
        %6017 = vmatprep.subr.bf16.mxu0 %v5419
        %6018 = vmatpush2.bf16.msra.mxu0 %v5418
        %6019 = vmatprep.subr.bf16.mxu0 %v5415
        %6020 = vmatpush2.bf16.msra.mxu0 %v5414
        %6021 = vmatprep.subr.bf16.mxu0 %v5411
        %6022 = vmatpush2.bf16.msra.mxu0 %v5410
        %6023 = vmatprep.subr.bf16.mxu0 %v5407
        %6024 = vmatpush2.bf16.msra.mxu0 %v5406
        %6025 = vmatprep.mubr.bf16.mxu0 %v869
        %6026 = vmatmul.mubr.bf16.gmra.mxu0 %v868
        %v6027 = vpop.f32.mrf.mxu0
        %v6028 = vadd.f32 %v5985, %v6027
        %v6029 = vpop.f32.mrf.mxu0
        %v6030 = vadd.f32 %v5987, %v6029
        %v6031 = vpop.f32.mrf.mxu0
        %v6032 = vadd.f32 %v5989, %v6031
        %v6033 = vpop.f32.mrf.mxu0
        %v6034 = vadd.f32 %v5991, %v6033
        %6035 = vdwg.mxu0
        %v6036 = vrot.slane %v5856, 1
        %v6037 = vrot.slane %v5858, 1
        %v6038 = vrot.slane %v6028, 1
        %v6039 = vrot.slane %v6030, 1
        %v6040 = vrot.slane %v5860, 1
        %v6041 = vrot.slane %v5862, 1
        %v6042 = vrot.slane %v6032, 1
        %v6043 = vrot.slane %v6034, 1
        %vm6044 = vcmp.lt.s32.totalorder %v295, 7
        %v6045 = vsel %vm6044, %v6036, %v6040
        %v6046 = vsel %vm6044, %v6037, %v6041
        %v6047 = vsel %vm6044, %v6038, %v6042
        %v6048 = vsel %vm6044, %v6039, %v6043
        %v6049 = vsel %vm6044, %v6040, %v6036
        %v6050 = vsel %vm6044, %v6041, %v6037
        %v6051 = vsel %vm6044, %v6042, %v6038
        %v6052 = vsel %vm6044, %v6043, %v6039
        %v6053 = vsel %vm323, 1, 0
        %v6054 = vsel %vm324, 1, 0
        %vm6055 = vcmp.eq.s32.totalorder %v6053, 1
        %vm6056 = vcmp.eq.s32.totalorder %v6054, 1
        %v6057 = vsel %vm6055, 0.0, %v6045
        %v6058 = vsel %vm6055, 0.0, %v6046
        %v6059 = vsel %vm6055, 0.0, %v6047
        %v6060 = vsel %vm6055, 0.0, %v6048
        %v6061 = vsel %vm6056, 0.0, %v6049
        %v6062 = vsel %vm6056, 0.0, %v6050
        %v6063 = vsel %vm6056, 0.0, %v6051
        %v6064 = vsel %vm6056, 0.0, %v6052
        %v6065 = vadd.f32 %v3975, %v6057
        %v6066 = vadd.f32 %v3977, %v6058
        %v6067 = vadd.f32 %v4147, %v6059
        %v6068 = vadd.f32 %v4149, %v6060
        %v6069 = vadd.f32 %v3979, %v6061
        %v6070 = vadd.f32 %v3981, %v6062
        %v6071 = vadd.f32 %v4151, %v6063
        %v6072 = vadd.f32 %v4153, %v6064
        %v6073 = vld [vmem:[#allocation6] sm:$0xf]
        %v6075 = vlaneseq
        %v6076 = vshrl.u32 %v6075, 7
        %v6077 = vsub.s32 0, %v6076
        %v6078 = vrot.slane %v6073, %v6077
        %v6079 = vlaneseq
        %v6080 = vshrl.u32 %v6079, 7
        %v6081 = vsub.s32 1, %v6080
        %v6082 = vrot.slane %v6073, %v6081
        %v6083 = vlaneseq
        %v6084 = vshrl.u32 %v6083, 7
        %v6085 = vsub.s32 2, %v6084
        %v6086 = vrot.slane %v6073, %v6085
        %v6087 = vlaneseq
        %v6088 = vshrl.u32 %v6087, 7
        %v6089 = vsub.s32 3, %v6088
        %v6090 = vrot.slane %v6073, %v6089
        %v6095 = vadd.f32 %v6065, %v6078
        %v6096 = vadd.f32 %v6066, %v6082
        %v6097 = vadd.f32 %v6067, %v6086
        %v6098 = vadd.f32 %v6068, %v6090
        %v6099 = vadd.f32 %v6069, %v6078
        %v6100 = vadd.f32 %v6070, %v6082
        %v6101 = vadd.f32 %v6071, %v6086
        %v6102 = vadd.f32 %v6072, %v6090
        %v6103 = vmul.f32 %v6095, 0.01
        %v6104 = vmul.f32 %v6096, 0.01
        %v6105 = vmul.f32 %v6097, 0.01
        %v6106 = vmul.f32 %v6098, 0.01
        %v6107 = vmul.f32 %v6099, 0.01
        %v6108 = vmul.f32 %v6100, 0.01
        %v6109 = vmul.f32 %v6101, 0.01
        %v6110 = vmul.f32 %v6102, 0.01
        %v6111 = vmax.f32 %v6095, %v6103
        %v6112 = vmax.f32 %v6096, %v6104
        %v6113 = vmax.f32 %v6097, %v6105
        %v6114 = vmax.f32 %v6098, %v6106
        %v6115 = vmax.f32 %v6099, %v6107
        %v6116 = vmax.f32 %v6100, %v6108
        %v6117 = vmax.f32 %v6101, %v6109
        %v6118 = vmax.f32 %v6102, %v6110
        %v6119 = vpack.c.bf16 %v6115, %v6111
        %v6120 = vpack.c.bf16 %v6116, %v6112
        %v6121 = vpack.c.bf16 %v6117, %v6113
        %v6122 = vpack.c.bf16 %v6118, %v6114
        %s6123 = scalar_lea.vmem %s3, 256
        %v6124 = vld [vmem:[%s6123] sm:$0xf]
        %v6125 = vld [vmem:[%s6123 + $0x4] sm:$0xf]
        %v6126 = vld [vmem:[%s6123 + $0x8] sm:$0xf]
        %v6127 = vld [vmem:[%s6123 + $0xc] sm:$0xf]
        %v6128 = vld [vmem:[%s6123 + $0x10] sm:$0xf]
        %v6129 = vld [vmem:[%s6123 + $0x14] sm:$0xf]
        %v6130 = vld [vmem:[%s6123 + $0x18] sm:$0xf]
        %v6131 = vld [vmem:[%s6123 + $0x1c] sm:$0xf]
        %v6132 = vld [vmem:[%s6123 + $0x20] sm:$0xf]
        %v6133 = vld [vmem:[%s6123 + $0x24] sm:$0xf]
        %v6134 = vld [vmem:[%s6123 + $0x28] sm:$0xf]
        %v6135 = vld [vmem:[%s6123 + $0x2c] sm:$0xf]
        %v6136 = vld [vmem:[%s6123 + $0x30] sm:$0xf]
        %v6137 = vld [vmem:[%s6123 + $0x34] sm:$0xf]
        %v6138 = vld [vmem:[%s6123 + $0x38] sm:$0xf]
        %v6139 = vld [vmem:[%s6123 + $0x3c] sm:$0xf]
        %v6140 = vld [vmem:[%s6123 + $0x40] sm:$0xf]
        %v6141 = vld [vmem:[%s6123 + $0x44] sm:$0xf]
        %v6142 = vld [vmem:[%s6123 + $0x48] sm:$0xf]
        %v6143 = vld [vmem:[%s6123 + $0x4c] sm:$0xf]
        %v6144 = vld [vmem:[%s6123 + $0x50] sm:$0xf]
        %v6145 = vld [vmem:[%s6123 + $0x54] sm:$0xf]
        %v6146 = vld [vmem:[%s6123 + $0x58] sm:$0xf]
        %v6147 = vld [vmem:[%s6123 + $0x5c] sm:$0xf]
        %v6148 = vld [vmem:[%s6123 + $0x60] sm:$0xf]
        %v6149 = vld [vmem:[%s6123 + $0x64] sm:$0xf]
        %v6150 = vld [vmem:[%s6123 + $0x68] sm:$0xf]
        %v6151 = vld [vmem:[%s6123 + $0x6c] sm:$0xf]
        %v6152 = vld [vmem:[%s6123 + $0x70] sm:$0xf]
        %v6153 = vld [vmem:[%s6123 + $0x74] sm:$0xf]
        %v6154 = vld [vmem:[%s6123 + $0x78] sm:$0xf]
        %v6155 = vld [vmem:[%s6123 + $0x7c] sm:$0xf]
        %v6156 = vld [vmem:[%s6123 + $0x80] sm:$0xf]
        %v6157 = vld [vmem:[%s6123 + $0x84] sm:$0xf]
        %v6158 = vld [vmem:[%s6123 + $0x88] sm:$0xf]
        %v6159 = vld [vmem:[%s6123 + $0x8c] sm:$0xf]
        %v6160 = vld [vmem:[%s6123 + $0x90] sm:$0xf]
        %v6161 = vld [vmem:[%s6123 + $0x94] sm:$0xf]
        %v6162 = vld [vmem:[%s6123 + $0x98] sm:$0xf]
        %v6163 = vld [vmem:[%s6123 + $0x9c] sm:$0xf]
        %v6164 = vld [vmem:[%s6123 + $0xa0] sm:$0xf]
        %v6165 = vld [vmem:[%s6123 + $0xa4] sm:$0xf]
        %v6166 = vld [vmem:[%s6123 + $0xa8] sm:$0xf]
        %v6167 = vld [vmem:[%s6123 + $0xac] sm:$0xf]
        %v6168 = vld [vmem:[%s6123 + $0xb0] sm:$0xf]
        %v6169 = vld [vmem:[%s6123 + $0xb4] sm:$0xf]
        %v6170 = vld [vmem:[%s6123 + $0xb8] sm:$0xf]
        %v6171 = vld [vmem:[%s6123 + $0xbc] sm:$0xf]
        %v6172 = vld [vmem:[%s6123 + $0xc0] sm:$0xf]
        %v6173 = vld [vmem:[%s6123 + $0xc4] sm:$0xf]
        %v6174 = vld [vmem:[%s6123 + $0xc8] sm:$0xf]
        %v6175 = vld [vmem:[%s6123 + $0xcc] sm:$0xf]
        %v6176 = vld [vmem:[%s6123 + $0xd0] sm:$0xf]
        %v6177 = vld [vmem:[%s6123 + $0xd4] sm:$0xf]
        %v6178 = vld [vmem:[%s6123 + $0xd8] sm:$0xf]
        %v6179 = vld [vmem:[%s6123 + $0xdc] sm:$0xf]
        %v6180 = vld [vmem:[%s6123 + $0xe0] sm:$0xf]
        %v6181 = vld [vmem:[%s6123 + $0xe4] sm:$0xf]
        %v6182 = vld [vmem:[%s6123 + $0xe8] sm:$0xf]
        %v6183 = vld [vmem:[%s6123 + $0xec] sm:$0xf]
        %v6184 = vld [vmem:[%s6123 + $0xf0] sm:$0xf]
        %v6185 = vld [vmem:[%s6123 + $0xf4] sm:$0xf]
        %v6186 = vld [vmem:[%s6123 + $0xf8] sm:$0xf]
        %v6187 = vld [vmem:[%s6123 + $0xfc] sm:$0xf]
        %v6188 = vld [vmem:[%s3] sm:$0xf]
        %v6189 = vld [vmem:[%s3 + $0x4] sm:$0xf]
        %v6190 = vld [vmem:[%s3 + $0x8] sm:$0xf]
        %v6191 = vld [vmem:[%s3 + $0xc] sm:$0xf]
        %v6192 = vld [vmem:[%s3 + $0x10] sm:$0xf]
        %v6193 = vld [vmem:[%s3 + $0x14] sm:$0xf]
        %v6194 = vld [vmem:[%s3 + $0x18] sm:$0xf]
        %v6195 = vld [vmem:[%s3 + $0x1c] sm:$0xf]
        %v6196 = vld [vmem:[%s3 + $0x20] sm:$0xf]
        %v6197 = vld [vmem:[%s3 + $0x24] sm:$0xf]
        %v6198 = vld [vmem:[%s3 + $0x28] sm:$0xf]
        %v6199 = vld [vmem:[%s3 + $0x2c] sm:$0xf]
        %v6200 = vld [vmem:[%s3 + $0x30] sm:$0xf]
        %v6201 = vld [vmem:[%s3 + $0x34] sm:$0xf]
        %v6202 = vld [vmem:[%s3 + $0x38] sm:$0xf]
        %v6203 = vld [vmem:[%s3 + $0x3c] sm:$0xf]
        %v6204 = vld [vmem:[%s3 + $0x40] sm:$0xf]
        %v6205 = vld [vmem:[%s3 + $0x44] sm:$0xf]
        %v6206 = vld [vmem:[%s3 + $0x48] sm:$0xf]
        %v6207 = vld [vmem:[%s3 + $0x4c] sm:$0xf]
        %v6208 = vld [vmem:[%s3 + $0x50] sm:$0xf]
        %v6209 = vld [vmem:[%s3 + $0x54] sm:$0xf]
        %v6210 = vld [vmem:[%s3 + $0x58] sm:$0xf]
        %v6211 = vld [vmem:[%s3 + $0x5c] sm:$0xf]
        %v6212 = vld [vmem:[%s3 + $0x60] sm:$0xf]
        %v6213 = vld [vmem:[%s3 + $0x64] sm:$0xf]
        %v6214 = vld [vmem:[%s3 + $0x68] sm:$0xf]
        %v6215 = vld [vmem:[%s3 + $0x6c] sm:$0xf]
        %v6216 = vld [vmem:[%s3 + $0x70] sm:$0xf]
        %v6217 = vld [vmem:[%s3 + $0x74] sm:$0xf]
        %v6218 = vld [vmem:[%s3 + $0x78] sm:$0xf]
        %v6219 = vld [vmem:[%s3 + $0x7c] sm:$0xf]
        %v6220 = vld [vmem:[%s3 + $0x80] sm:$0xf]
        %v6221 = vld [vmem:[%s3 + $0x84] sm:$0xf]
        %v6222 = vld [vmem:[%s3 + $0x88] sm:$0xf]
        %v6223 = vld [vmem:[%s3 + $0x8c] sm:$0xf]
        %v6224 = vld [vmem:[%s3 + $0x90] sm:$0xf]
        %v6225 = vld [vmem:[%s3 + $0x94] sm:$0xf]
        %v6226 = vld [vmem:[%s3 + $0x98] sm:$0xf]
        %v6227 = vld [vmem:[%s3 + $0x9c] sm:$0xf]
        %v6228 = vld [vmem:[%s3 + $0xa0] sm:$0xf]
        %v6229 = vld [vmem:[%s3 + $0xa4] sm:$0xf]
        %v6230 = vld [vmem:[%s3 + $0xa8] sm:$0xf]
        %v6231 = vld [vmem:[%s3 + $0xac] sm:$0xf]
        %v6232 = vld [vmem:[%s3 + $0xb0] sm:$0xf]
        %v6233 = vld [vmem:[%s3 + $0xb4] sm:$0xf]
        %v6234 = vld [vmem:[%s3 + $0xb8] sm:$0xf]
        %v6235 = vld [vmem:[%s3 + $0xbc] sm:$0xf]
        %v6236 = vld [vmem:[%s3 + $0xc0] sm:$0xf]
        %v6237 = vld [vmem:[%s3 + $0xc4] sm:$0xf]
        %v6238 = vld [vmem:[%s3 + $0xc8] sm:$0xf]
        %v6239 = vld [vmem:[%s3 + $0xcc] sm:$0xf]
        %v6240 = vld [vmem:[%s3 + $0xd0] sm:$0xf]
        %v6241 = vld [vmem:[%s3 + $0xd4] sm:$0xf]
        %v6242 = vld [vmem:[%s3 + $0xd8] sm:$0xf]
        %v6243 = vld [vmem:[%s3 + $0xdc] sm:$0xf]
        %v6244 = vld [vmem:[%s3 + $0xe0] sm:$0xf]
        %v6245 = vld [vmem:[%s3 + $0xe4] sm:$0xf]
        %v6246 = vld [vmem:[%s3 + $0xe8] sm:$0xf]
        %v6247 = vld [vmem:[%s3 + $0xec] sm:$0xf]
        %v6248 = vld [vmem:[%s3 + $0xf0] sm:$0xf]
        %v6249 = vld [vmem:[%s3 + $0xf4] sm:$0xf]
        %v6250 = vld [vmem:[%s3 + $0xf8] sm:$0xf]
        %v6251 = vld [vmem:[%s3 + $0xfc] sm:$0xf]
        %v6316 = vunpack.c.l.b16 %v6188
        %v6317 = vunpack.c.l.b16 %v6189
        %v6318 = vunpack.c.l.b16 %v6190
        %v6319 = vunpack.c.l.b16 %v6191
        %v6320 = vunpack.c.l.b16 %v6192
        %v6321 = vunpack.c.l.b16 %v6193
        %v6322 = vunpack.c.l.b16 %v6194
        %v6323 = vunpack.c.l.b16 %v6195
        %v6324 = vunpack.c.l.b16 %v6196
        %v6325 = vunpack.c.l.b16 %v6197
        %v6326 = vunpack.c.l.b16 %v6198
        %v6327 = vunpack.c.l.b16 %v6199
        %v6328 = vunpack.c.l.b16 %v6200
        %v6329 = vunpack.c.l.b16 %v6201
        %v6330 = vunpack.c.l.b16 %v6202
        %v6331 = vunpack.c.l.b16 %v6203
        %v6332 = vunpack.c.l.b16 %v6204
        %v6333 = vunpack.c.l.b16 %v6205
        %v6334 = vunpack.c.l.b16 %v6206
        %v6335 = vunpack.c.l.b16 %v6207
        %v6336 = vunpack.c.l.b16 %v6208
        %v6337 = vunpack.c.l.b16 %v6209
        %v6338 = vunpack.c.l.b16 %v6210
        %v6339 = vunpack.c.l.b16 %v6211
        %v6340 = vunpack.c.l.b16 %v6212
        %v6341 = vunpack.c.l.b16 %v6213
        %v6342 = vunpack.c.l.b16 %v6214
        %v6343 = vunpack.c.l.b16 %v6215
        %v6344 = vunpack.c.l.b16 %v6216
        %v6345 = vunpack.c.l.b16 %v6217
        %v6346 = vunpack.c.l.b16 %v6218
        %v6347 = vunpack.c.l.b16 %v6219
        %v6348 = vunpack.c.l.b16 %v6220
        %v6349 = vunpack.c.l.b16 %v6221
        %v6350 = vunpack.c.l.b16 %v6222
        %v6351 = vunpack.c.l.b16 %v6223
        %v6352 = vunpack.c.l.b16 %v6224
        %v6353 = vunpack.c.l.b16 %v6225
        %v6354 = vunpack.c.l.b16 %v6226
        %v6355 = vunpack.c.l.b16 %v6227
        %v6356 = vunpack.c.l.b16 %v6228
        %v6357 = vunpack.c.l.b16 %v6229
        %v6358 = vunpack.c.l.b16 %v6230
        %v6359 = vunpack.c.l.b16 %v6231
        %v6360 = vunpack.c.l.b16 %v6232
        %v6361 = vunpack.c.l.b16 %v6233
        %v6362 = vunpack.c.l.b16 %v6234
        %v6363 = vunpack.c.l.b16 %v6235
        %v6364 = vunpack.c.l.b16 %v6236
        %v6365 = vunpack.c.l.b16 %v6237
        %v6366 = vunpack.c.l.b16 %v6238
        %v6367 = vunpack.c.l.b16 %v6239
        %v6368 = vunpack.c.l.b16 %v6240
        %v6369 = vunpack.c.l.b16 %v6241
        %v6370 = vunpack.c.l.b16 %v6242
        %v6371 = vunpack.c.l.b16 %v6243
        %v6372 = vunpack.c.l.b16 %v6244
        %v6373 = vunpack.c.l.b16 %v6245
        %v6374 = vunpack.c.l.b16 %v6246
        %v6375 = vunpack.c.l.b16 %v6247
        %v6376 = vunpack.c.l.b16 %v6248
        %v6377 = vunpack.c.l.b16 %v6249
        %v6378 = vunpack.c.l.b16 %v6250
        %v6379 = vunpack.c.l.b16 %v6251
        %v6380 = vpack.c.b16 %v6317, %v6316
        %v6381 = vpack.c.b16 %v6319, %v6318
        %v6382 = vpack.c.b16 %v6321, %v6320
        %v6383 = vpack.c.b16 %v6323, %v6322
        %v6384 = vpack.c.b16 %v6325, %v6324
        %v6385 = vpack.c.b16 %v6327, %v6326
        %v6386 = vpack.c.b16 %v6329, %v6328
        %v6387 = vpack.c.b16 %v6331, %v6330
        %v6388 = vpack.c.b16 %v6333, %v6332
        %v6389 = vpack.c.b16 %v6335, %v6334
        %v6390 = vpack.c.b16 %v6337, %v6336
        %v6391 = vpack.c.b16 %v6339, %v6338
        %v6392 = vpack.c.b16 %v6341, %v6340
        %v6393 = vpack.c.b16 %v6343, %v6342
        %v6394 = vpack.c.b16 %v6345, %v6344
        %v6395 = vpack.c.b16 %v6347, %v6346
        %v6396 = vpack.c.b16 %v6349, %v6348
        %v6397 = vpack.c.b16 %v6351, %v6350
        %v6398 = vpack.c.b16 %v6353, %v6352
        %v6399 = vpack.c.b16 %v6355, %v6354
        %v6400 = vpack.c.b16 %v6357, %v6356
        %v6401 = vpack.c.b16 %v6359, %v6358
        %v6402 = vpack.c.b16 %v6361, %v6360
        %v6403 = vpack.c.b16 %v6363, %v6362
        %v6404 = vpack.c.b16 %v6365, %v6364
        %v6405 = vpack.c.b16 %v6367, %v6366
        %v6406 = vpack.c.b16 %v6369, %v6368
        %v6407 = vpack.c.b16 %v6371, %v6370
        %v6408 = vpack.c.b16 %v6373, %v6372
        %v6409 = vpack.c.b16 %v6375, %v6374
        %v6410 = vpack.c.b16 %v6377, %v6376
        %v6411 = vpack.c.b16 %v6379, %v6378
        %6444 = vmatprep.subr.bf16.mxu0 0
        %6445 = vmatpush1.bf16.msra.mxu0 %v6387
        %6446 = vmatprep.subr.bf16.mxu0 0
        %6447 = vmatpush1.bf16.msra.mxu0 %v6386
        %6448 = vmatprep.subr.bf16.mxu0 0
        %6449 = vmatpush1.bf16.msra.mxu0 %v6385
        %6450 = vmatprep.subr.bf16.mxu0 0
        %6451 = vmatpush1.bf16.msra.mxu0 %v6384
        %6452 = vmatprep.subr.bf16.mxu0 0
        %6453 = vmatpush1.bf16.msra.mxu0 %v6383
        %6454 = vmatprep.subr.bf16.mxu0 0
        %6455 = vmatpush1.bf16.msra.mxu0 %v6382
        %6456 = vmatprep.subr.bf16.mxu0 0
        %6457 = vmatpush1.bf16.msra.mxu0 %v6381
        %6458 = vmatprep.subr.bf16.mxu0 0
        %6459 = vmatpush1.bf16.msra.mxu0 %v6380
        %6460 = vmatprep.subr.bf16.mxu0 0
        %6461 = vmatpush2.bf16.msra.mxu0 %v6395
        %6462 = vmatprep.subr.bf16.mxu0 0
        %6463 = vmatpush2.bf16.msra.mxu0 %v6394
        %6464 = vmatprep.subr.bf16.mxu0 0
        %6465 = vmatpush2.bf16.msra.mxu0 %v6393
        %6466 = vmatprep.subr.bf16.mxu0 0
        %6467 = vmatpush2.bf16.msra.mxu0 %v6392
        %6468 = vmatprep.subr.bf16.mxu0 0
        %6469 = vmatpush2.bf16.msra.mxu0 %v6391
        %6470 = vmatprep.subr.bf16.mxu0 0
        %6471 = vmatpush2.bf16.msra.mxu0 %v6390
        %6472 = vmatprep.subr.bf16.mxu0 0
        %6473 = vmatpush2.bf16.msra.mxu0 %v6389
        %6474 = vmatprep.subr.bf16.mxu0 0
        %6475 = vmatpush2.bf16.msra.mxu0 %v6388
        %6476 = vmatprep.mubr.bf16.mxu0 %v6120
        %6477 = vmatmul.mubr.bf16.gmra.mxu0 %v6119
        %v6478 = vpop.f32.mrf.mxu0
        %v6479 = vadd.f32 0.0, %v6478
        %v6480 = vpop.f32.mrf.mxu0
        %v6481 = vpop.f32.mrf.mxu0
        %v6482 = vadd.f32 0.0, %v6481
        %v6483 = vpop.f32.mrf.mxu0
        %6484 = vdwg.mxu0
        %6485 = vmatprep.subr.bf16.mxu0 0
        %6486 = vmatpush1.bf16.msra.mxu0 %v6403
        %6487 = vmatprep.subr.bf16.mxu0 0
        %6488 = vmatpush1.bf16.msra.mxu0 %v6402
        %6489 = vmatprep.subr.bf16.mxu0 0
        %6490 = vmatpush1.bf16.msra.mxu0 %v6401
        %6491 = vmatprep.subr.bf16.mxu0 0
        %6492 = vmatpush1.bf16.msra.mxu0 %v6400
        %6493 = vmatprep.subr.bf16.mxu0 0
        %6494 = vmatpush1.bf16.msra.mxu0 %v6399
        %6495 = vmatprep.subr.bf16.mxu0 0
        %6496 = vmatpush1.bf16.msra.mxu0 %v6398
        %6497 = vmatprep.subr.bf16.mxu0 0
        %6498 = vmatpush1.bf16.msra.mxu0 %v6397
        %6499 = vmatprep.subr.bf16.mxu0 0
        %6500 = vmatpush1.bf16.msra.mxu0 %v6396
        %6501 = vmatprep.subr.bf16.mxu0 0
        %6502 = vmatpush2.bf16.msra.mxu0 %v6411
        %6503 = vmatprep.subr.bf16.mxu0 0
        %6504 = vmatpush2.bf16.msra.mxu0 %v6410
        %6505 = vmatprep.subr.bf16.mxu0 0
        %6506 = vmatpush2.bf16.msra.mxu0 %v6409
        %6507 = vmatprep.subr.bf16.mxu0 0
        %6508 = vmatpush2.bf16.msra.mxu0 %v6408
        %6509 = vmatprep.subr.bf16.mxu0 0
        %6510 = vmatpush2.bf16.msra.mxu0 %v6407
        %6511 = vmatprep.subr.bf16.mxu0 0
        %6512 = vmatpush2.bf16.msra.mxu0 %v6406
        %6513 = vmatprep.subr.bf16.mxu0 0
        %6514 = vmatpush2.bf16.msra.mxu0 %v6405
        %6515 = vmatprep.subr.bf16.mxu0 0
        %6516 = vmatpush2.bf16.msra.mxu0 %v6404
        %6517 = vmatprep.mubr.bf16.mxu0 %v6122
        %6518 = vmatmul.mubr.bf16.gmra.mxu0 %v6121
        %v6519 = vpop.f32.mrf.mxu0
        %v6520 = vadd.f32 %v6479, %v6519
        %v6521 = vpop.f32.mrf.mxu0
        %v6522 = vpop.f32.mrf.mxu0
        %v6523 = vadd.f32 %v6482, %v6522
        %v6524 = vpop.f32.mrf.mxu0
        %6525 = vdwg.mxu0
        %v6526 = vrot.slane %v6520, 7
        %v6527 = vrot.slane %v6523, 7
        %v6528 = vsel %vm2510, %v6526, %v6527
        %v6529 = vsel %vm2510, %v6527, %v6526
        %v6530 = vsel %vm2521, 0.0, %v6529
        %v6531 = vsel %vm2522, 0.0, %v6528
        %v6596 = vunpack.c.l.b16 %v6124
        %v6597 = vunpack.c.l.b16 %v6125
        %v6598 = vunpack.c.l.b16 %v6126
        %v6599 = vunpack.c.l.b16 %v6127
        %v6600 = vunpack.c.l.b16 %v6128
        %v6601 = vunpack.c.l.b16 %v6129
        %v6602 = vunpack.c.l.b16 %v6130
        %v6603 = vunpack.c.l.b16 %v6131
        %v6604 = vunpack.c.l.b16 %v6132
        %v6605 = vunpack.c.l.b16 %v6133
        %v6606 = vunpack.c.l.b16 %v6134
        %v6607 = vunpack.c.l.b16 %v6135
        %v6608 = vunpack.c.l.b16 %v6136
        %v6609 = vunpack.c.l.b16 %v6137
        %v6610 = vunpack.c.l.b16 %v6138
        %v6611 = vunpack.c.l.b16 %v6139
        %v6612 = vunpack.c.l.b16 %v6140
        %v6613 = vunpack.c.l.b16 %v6141
        %v6614 = vunpack.c.l.b16 %v6142
        %v6615 = vunpack.c.l.b16 %v6143
        %v6616 = vunpack.c.l.b16 %v6144
        %v6617 = vunpack.c.l.b16 %v6145
        %v6618 = vunpack.c.l.b16 %v6146
        %v6619 = vunpack.c.l.b16 %v6147
        %v6620 = vunpack.c.l.b16 %v6148
        %v6621 = vunpack.c.l.b16 %v6149
        %v6622 = vunpack.c.l.b16 %v6150
        %v6623 = vunpack.c.l.b16 %v6151
        %v6624 = vunpack.c.l.b16 %v6152
        %v6625 = vunpack.c.l.b16 %v6153
        %v6626 = vunpack.c.l.b16 %v6154
        %v6627 = vunpack.c.l.b16 %v6155
        %v6628 = vunpack.c.l.b16 %v6156
        %v6629 = vunpack.c.l.b16 %v6157
        %v6630 = vunpack.c.l.b16 %v6158
        %v6631 = vunpack.c.l.b16 %v6159
        %v6632 = vunpack.c.l.b16 %v6160
        %v6633 = vunpack.c.l.b16 %v6161
        %v6634 = vunpack.c.l.b16 %v6162
        %v6635 = vunpack.c.l.b16 %v6163
        %v6636 = vunpack.c.l.b16 %v6164
        %v6637 = vunpack.c.l.b16 %v6165
        %v6638 = vunpack.c.l.b16 %v6166
        %v6639 = vunpack.c.l.b16 %v6167
        %v6640 = vunpack.c.l.b16 %v6168
        %v6641 = vunpack.c.l.b16 %v6169
        %v6642 = vunpack.c.l.b16 %v6170
        %v6643 = vunpack.c.l.b16 %v6171
        %v6644 = vunpack.c.l.b16 %v6172
        %v6645 = vunpack.c.l.b16 %v6173
        %v6646 = vunpack.c.l.b16 %v6174
        %v6647 = vunpack.c.l.b16 %v6175
        %v6648 = vunpack.c.l.b16 %v6176
        %v6649 = vunpack.c.l.b16 %v6177
        %v6650 = vunpack.c.l.b16 %v6178
        %v6651 = vunpack.c.l.b16 %v6179
        %v6652 = vunpack.c.l.b16 %v6180
        %v6653 = vunpack.c.l.b16 %v6181
        %v6654 = vunpack.c.l.b16 %v6182
        %v6655 = vunpack.c.l.b16 %v6183
        %v6656 = vunpack.c.l.b16 %v6184
        %v6657 = vunpack.c.l.b16 %v6185
        %v6658 = vunpack.c.l.b16 %v6186
        %v6659 = vunpack.c.l.b16 %v6187
        %v6660 = vpack.c.b16 %v6597, %v6596
        %v6661 = vpack.c.b16 %v6599, %v6598
        %v6662 = vpack.c.b16 %v6601, %v6600
        %v6663 = vpack.c.b16 %v6603, %v6602
        %v6664 = vpack.c.b16 %v6605, %v6604
        %v6665 = vpack.c.b16 %v6607, %v6606
        %v6666 = vpack.c.b16 %v6609, %v6608
        %v6667 = vpack.c.b16 %v6611, %v6610
        %v6668 = vpack.c.b16 %v6613, %v6612
        %v6669 = vpack.c.b16 %v6615, %v6614
        %v6670 = vpack.c.b16 %v6617, %v6616
        %v6671 = vpack.c.b16 %v6619, %v6618
        %v6672 = vpack.c.b16 %v6621, %v6620
        %v6673 = vpack.c.b16 %v6623, %v6622
        %v6674 = vpack.c.b16 %v6625, %v6624
        %v6675 = vpack.c.b16 %v6627, %v6626
        %v6676 = vpack.c.b16 %v6629, %v6628
        %v6677 = vpack.c.b16 %v6631, %v6630
        %v6678 = vpack.c.b16 %v6633, %v6632
        %v6679 = vpack.c.b16 %v6635, %v6634
        %v6680 = vpack.c.b16 %v6637, %v6636
        %v6681 = vpack.c.b16 %v6639, %v6638
        %v6682 = vpack.c.b16 %v6641, %v6640
        %v6683 = vpack.c.b16 %v6643, %v6642
        %v6684 = vpack.c.b16 %v6645, %v6644
        %v6685 = vpack.c.b16 %v6647, %v6646
        %v6686 = vpack.c.b16 %v6649, %v6648
        %v6687 = vpack.c.b16 %v6651, %v6650
        %v6688 = vpack.c.b16 %v6653, %v6652
        %v6689 = vpack.c.b16 %v6655, %v6654
        %v6690 = vpack.c.b16 %v6657, %v6656
        %v6691 = vpack.c.b16 %v6659, %v6658
        %6724 = vmatprep.subr.bf16.mxu0 0
        %6725 = vmatpush1.bf16.msra.mxu0 %v6667
        %6726 = vmatprep.subr.bf16.mxu0 0
        %6727 = vmatpush1.bf16.msra.mxu0 %v6666
        %6728 = vmatprep.subr.bf16.mxu0 0
        %6729 = vmatpush1.bf16.msra.mxu0 %v6665
        %6730 = vmatprep.subr.bf16.mxu0 0
        %6731 = vmatpush1.bf16.msra.mxu0 %v6664
        %6732 = vmatprep.subr.bf16.mxu0 0
        %6733 = vmatpush1.bf16.msra.mxu0 %v6663
        %6734 = vmatprep.subr.bf16.mxu0 0
        %6735 = vmatpush1.bf16.msra.mxu0 %v6662
        %6736 = vmatprep.subr.bf16.mxu0 0
        %6737 = vmatpush1.bf16.msra.mxu0 %v6661
        %6738 = vmatprep.subr.bf16.mxu0 0
        %6739 = vmatpush1.bf16.msra.mxu0 %v6660
        %6740 = vmatprep.subr.bf16.mxu0 0
        %6741 = vmatpush2.bf16.msra.mxu0 %v6675
        %6742 = vmatprep.subr.bf16.mxu0 0
        %6743 = vmatpush2.bf16.msra.mxu0 %v6674
        %6744 = vmatprep.subr.bf16.mxu0 0
        %6745 = vmatpush2.bf16.msra.mxu0 %v6673
        %6746 = vmatprep.subr.bf16.mxu0 0
        %6747 = vmatpush2.bf16.msra.mxu0 %v6672
        %6748 = vmatprep.subr.bf16.mxu0 0
        %6749 = vmatpush2.bf16.msra.mxu0 %v6671
        %6750 = vmatprep.subr.bf16.mxu0 0
        %6751 = vmatpush2.bf16.msra.mxu0 %v6670
        %6752 = vmatprep.subr.bf16.mxu0 0
        %6753 = vmatpush2.bf16.msra.mxu0 %v6669
        %6754 = vmatprep.subr.bf16.mxu0 0
        %6755 = vmatpush2.bf16.msra.mxu0 %v6668
        %6756 = vmatprep.mubr.bf16.mxu0 %v6120
        %6757 = vmatmul.mubr.bf16.gmra.mxu0 %v6119
        %v6758 = vpop.f32.mrf.mxu0
        %v6759 = vadd.f32 %v6530, %v6758
        %v6760 = vpop.f32.mrf.mxu0
        %v6761 = vpop.f32.mrf.mxu0
        %v6762 = vadd.f32 %v6531, %v6761
        %v6763 = vpop.f32.mrf.mxu0
        %6764 = vdwg.mxu0
        %6765 = vmatprep.subr.bf16.mxu0 0
        %6766 = vmatpush1.bf16.msra.mxu0 %v6683
        %6767 = vmatprep.subr.bf16.mxu0 0
        %6768 = vmatpush1.bf16.msra.mxu0 %v6682
        %6769 = vmatprep.subr.bf16.mxu0 0
        %6770 = vmatpush1.bf16.msra.mxu0 %v6681
        %6771 = vmatprep.subr.bf16.mxu0 0
        %6772 = vmatpush1.bf16.msra.mxu0 %v6680
        %6773 = vmatprep.subr.bf16.mxu0 0
        %6774 = vmatpush1.bf16.msra.mxu0 %v6679
        %6775 = vmatprep.subr.bf16.mxu0 0
        %6776 = vmatpush1.bf16.msra.mxu0 %v6678
        %6777 = vmatprep.subr.bf16.mxu0 0
        %6778 = vmatpush1.bf16.msra.mxu0 %v6677
        %6779 = vmatprep.subr.bf16.mxu0 0
        %6780 = vmatpush1.bf16.msra.mxu0 %v6676
        %6781 = vmatprep.subr.bf16.mxu0 0
        %6782 = vmatpush2.bf16.msra.mxu0 %v6691
        %6783 = vmatprep.subr.bf16.mxu0 0
        %6784 = vmatpush2.bf16.msra.mxu0 %v6690
        %6785 = vmatprep.subr.bf16.mxu0 0
        %6786 = vmatpush2.bf16.msra.mxu0 %v6689
        %6787 = vmatprep.subr.bf16.mxu0 0
        %6788 = vmatpush2.bf16.msra.mxu0 %v6688
        %6789 = vmatprep.subr.bf16.mxu0 0
        %6790 = vmatpush2.bf16.msra.mxu0 %v6687
        %6791 = vmatprep.subr.bf16.mxu0 0
        %6792 = vmatpush2.bf16.msra.mxu0 %v6686
        %6793 = vmatprep.subr.bf16.mxu0 0
        %6794 = vmatpush2.bf16.msra.mxu0 %v6685
        %6795 = vmatprep.subr.bf16.mxu0 0
        %6796 = vmatpush2.bf16.msra.mxu0 %v6684
        %6797 = vmatprep.mubr.bf16.mxu0 %v6122
        %6798 = vmatmul.mubr.bf16.gmra.mxu0 %v6121
        %v6799 = vpop.f32.mrf.mxu0
        %v6800 = vadd.f32 %v6759, %v6799
        %v6801 = vpop.f32.mrf.mxu0
        %v6802 = vpop.f32.mrf.mxu0
        %v6803 = vadd.f32 %v6762, %v6802
        %v6804 = vpop.f32.mrf.mxu0
        %6805 = vdwg.mxu0
        %s6806 = scalar_lea.vmem %s3, 512
        %v6807 = vld [vmem:[%s6806] sm:$0xf]
        %v6808 = vld [vmem:[%s6806 + $0x4] sm:$0xf]
        %v6809 = vld [vmem:[%s6806 + $0x8] sm:$0xf]
        %v6810 = vld [vmem:[%s6806 + $0xc] sm:$0xf]
        %v6811 = vld [vmem:[%s6806 + $0x10] sm:$0xf]
        %v6812 = vld [vmem:[%s6806 + $0x14] sm:$0xf]
        %v6813 = vld [vmem:[%s6806 + $0x18] sm:$0xf]
        %v6814 = vld [vmem:[%s6806 + $0x1c] sm:$0xf]
        %v6815 = vld [vmem:[%s6806 + $0x20] sm:$0xf]
        %v6816 = vld [vmem:[%s6806 + $0x24] sm:$0xf]
        %v6817 = vld [vmem:[%s6806 + $0x28] sm:$0xf]
        %v6818 = vld [vmem:[%s6806 + $0x2c] sm:$0xf]
        %v6819 = vld [vmem:[%s6806 + $0x30] sm:$0xf]
        %v6820 = vld [vmem:[%s6806 + $0x34] sm:$0xf]
        %v6821 = vld [vmem:[%s6806 + $0x38] sm:$0xf]
        %v6822 = vld [vmem:[%s6806 + $0x3c] sm:$0xf]
        %v6823 = vld [vmem:[%s6806 + $0x40] sm:$0xf]
        %v6824 = vld [vmem:[%s6806 + $0x44] sm:$0xf]
        %v6825 = vld [vmem:[%s6806 + $0x48] sm:$0xf]
        %v6826 = vld [vmem:[%s6806 + $0x4c] sm:$0xf]
        %v6827 = vld [vmem:[%s6806 + $0x50] sm:$0xf]
        %v6828 = vld [vmem:[%s6806 + $0x54] sm:$0xf]
        %v6829 = vld [vmem:[%s6806 + $0x58] sm:$0xf]
        %v6830 = vld [vmem:[%s6806 + $0x5c] sm:$0xf]
        %v6831 = vld [vmem:[%s6806 + $0x60] sm:$0xf]
        %v6832 = vld [vmem:[%s6806 + $0x64] sm:$0xf]
        %v6833 = vld [vmem:[%s6806 + $0x68] sm:$0xf]
        %v6834 = vld [vmem:[%s6806 + $0x6c] sm:$0xf]
        %v6835 = vld [vmem:[%s6806 + $0x70] sm:$0xf]
        %v6836 = vld [vmem:[%s6806 + $0x74] sm:$0xf]
        %v6837 = vld [vmem:[%s6806 + $0x78] sm:$0xf]
        %v6838 = vld [vmem:[%s6806 + $0x7c] sm:$0xf]
        %v6839 = vld [vmem:[%s6806 + $0x80] sm:$0xf]
        %v6840 = vld [vmem:[%s6806 + $0x84] sm:$0xf]
        %v6841 = vld [vmem:[%s6806 + $0x88] sm:$0xf]
        %v6842 = vld [vmem:[%s6806 + $0x8c] sm:$0xf]
        %v6843 = vld [vmem:[%s6806 + $0x90] sm:$0xf]
        %v6844 = vld [vmem:[%s6806 + $0x94] sm:$0xf]
        %v6845 = vld [vmem:[%s6806 + $0x98] sm:$0xf]
        %v6846 = vld [vmem:[%s6806 + $0x9c] sm:$0xf]
        %v6847 = vld [vmem:[%s6806 + $0xa0] sm:$0xf]
        %v6848 = vld [vmem:[%s6806 + $0xa4] sm:$0xf]
        %v6849 = vld [vmem:[%s6806 + $0xa8] sm:$0xf]
        %v6850 = vld [vmem:[%s6806 + $0xac] sm:$0xf]
        %v6851 = vld [vmem:[%s6806 + $0xb0] sm:$0xf]
        %v6852 = vld [vmem:[%s6806 + $0xb4] sm:$0xf]
        %v6853 = vld [vmem:[%s6806 + $0xb8] sm:$0xf]
        %v6854 = vld [vmem:[%s6806 + $0xbc] sm:$0xf]
        %v6855 = vld [vmem:[%s6806 + $0xc0] sm:$0xf]
        %v6856 = vld [vmem:[%s6806 + $0xc4] sm:$0xf]
        %v6857 = vld [vmem:[%s6806 + $0xc8] sm:$0xf]
        %v6858 = vld [vmem:[%s6806 + $0xcc] sm:$0xf]
        %v6859 = vld [vmem:[%s6806 + $0xd0] sm:$0xf]
        %v6860 = vld [vmem:[%s6806 + $0xd4] sm:$0xf]
        %v6861 = vld [vmem:[%s6806 + $0xd8] sm:$0xf]
        %v6862 = vld [vmem:[%s6806 + $0xdc] sm:$0xf]
        %v6863 = vld [vmem:[%s6806 + $0xe0] sm:$0xf]
        %v6864 = vld [vmem:[%s6806 + $0xe4] sm:$0xf]
        %v6865 = vld [vmem:[%s6806 + $0xe8] sm:$0xf]
        %v6866 = vld [vmem:[%s6806 + $0xec] sm:$0xf]
        %v6867 = vld [vmem:[%s6806 + $0xf0] sm:$0xf]
        %v6868 = vld [vmem:[%s6806 + $0xf4] sm:$0xf]
        %v6869 = vld [vmem:[%s6806 + $0xf8] sm:$0xf]
        %v6870 = vld [vmem:[%s6806 + $0xfc] sm:$0xf]
        %v6935 = vunpack.c.l.b16 %v6807
        %v6936 = vunpack.c.l.b16 %v6808
        %v6937 = vunpack.c.l.b16 %v6809
        %v6938 = vunpack.c.l.b16 %v6810
        %v6939 = vunpack.c.l.b16 %v6811
        %v6940 = vunpack.c.l.b16 %v6812
        %v6941 = vunpack.c.l.b16 %v6813
        %v6942 = vunpack.c.l.b16 %v6814
        %v6943 = vunpack.c.l.b16 %v6815
        %v6944 = vunpack.c.l.b16 %v6816
        %v6945 = vunpack.c.l.b16 %v6817
        %v6946 = vunpack.c.l.b16 %v6818
        %v6947 = vunpack.c.l.b16 %v6819
        %v6948 = vunpack.c.l.b16 %v6820
        %v6949 = vunpack.c.l.b16 %v6821
        %v6950 = vunpack.c.l.b16 %v6822
        %v6951 = vunpack.c.l.b16 %v6823
        %v6952 = vunpack.c.l.b16 %v6824
        %v6953 = vunpack.c.l.b16 %v6825
        %v6954 = vunpack.c.l.b16 %v6826
        %v6955 = vunpack.c.l.b16 %v6827
        %v6956 = vunpack.c.l.b16 %v6828
        %v6957 = vunpack.c.l.b16 %v6829
        %v6958 = vunpack.c.l.b16 %v6830
        %v6959 = vunpack.c.l.b16 %v6831
        %v6960 = vunpack.c.l.b16 %v6832
        %v6961 = vunpack.c.l.b16 %v6833
        %v6962 = vunpack.c.l.b16 %v6834
        %v6963 = vunpack.c.l.b16 %v6835
        %v6964 = vunpack.c.l.b16 %v6836
        %v6965 = vunpack.c.l.b16 %v6837
        %v6966 = vunpack.c.l.b16 %v6838
        %v6967 = vunpack.c.l.b16 %v6839
        %v6968 = vunpack.c.l.b16 %v6840
        %v6969 = vunpack.c.l.b16 %v6841
        %v6970 = vunpack.c.l.b16 %v6842
        %v6971 = vunpack.c.l.b16 %v6843
        %v6972 = vunpack.c.l.b16 %v6844
        %v6973 = vunpack.c.l.b16 %v6845
        %v6974 = vunpack.c.l.b16 %v6846
        %v6975 = vunpack.c.l.b16 %v6847
        %v6976 = vunpack.c.l.b16 %v6848
        %v6977 = vunpack.c.l.b16 %v6849
        %v6978 = vunpack.c.l.b16 %v6850
        %v6979 = vunpack.c.l.b16 %v6851
        %v6980 = vunpack.c.l.b16 %v6852
        %v6981 = vunpack.c.l.b16 %v6853
        %v6982 = vunpack.c.l.b16 %v6854
        %v6983 = vunpack.c.l.b16 %v6855
        %v6984 = vunpack.c.l.b16 %v6856
        %v6985 = vunpack.c.l.b16 %v6857
        %v6986 = vunpack.c.l.b16 %v6858
        %v6987 = vunpack.c.l.b16 %v6859
        %v6988 = vunpack.c.l.b16 %v6860
        %v6989 = vunpack.c.l.b16 %v6861
        %v6990 = vunpack.c.l.b16 %v6862
        %v6991 = vunpack.c.l.b16 %v6863
        %v6992 = vunpack.c.l.b16 %v6864
        %v6993 = vunpack.c.l.b16 %v6865
        %v6994 = vunpack.c.l.b16 %v6866
        %v6995 = vunpack.c.l.b16 %v6867
        %v6996 = vunpack.c.l.b16 %v6868
        %v6997 = vunpack.c.l.b16 %v6869
        %v6998 = vunpack.c.l.b16 %v6870
        %v6999 = vpack.c.b16 %v6936, %v6935
        %v7000 = vpack.c.b16 %v6938, %v6937
        %v7001 = vpack.c.b16 %v6940, %v6939
        %v7002 = vpack.c.b16 %v6942, %v6941
        %v7003 = vpack.c.b16 %v6944, %v6943
        %v7004 = vpack.c.b16 %v6946, %v6945
        %v7005 = vpack.c.b16 %v6948, %v6947
        %v7006 = vpack.c.b16 %v6950, %v6949
        %v7007 = vpack.c.b16 %v6952, %v6951
        %v7008 = vpack.c.b16 %v6954, %v6953
        %v7009 = vpack.c.b16 %v6956, %v6955
        %v7010 = vpack.c.b16 %v6958, %v6957
        %v7011 = vpack.c.b16 %v6960, %v6959
        %v7012 = vpack.c.b16 %v6962, %v6961
        %v7013 = vpack.c.b16 %v6964, %v6963
        %v7014 = vpack.c.b16 %v6966, %v6965
        %v7015 = vpack.c.b16 %v6968, %v6967
        %v7016 = vpack.c.b16 %v6970, %v6969
        %v7017 = vpack.c.b16 %v6972, %v6971
        %v7018 = vpack.c.b16 %v6974, %v6973
        %v7019 = vpack.c.b16 %v6976, %v6975
        %v7020 = vpack.c.b16 %v6978, %v6977
        %v7021 = vpack.c.b16 %v6980, %v6979
        %v7022 = vpack.c.b16 %v6982, %v6981
        %v7023 = vpack.c.b16 %v6984, %v6983
        %v7024 = vpack.c.b16 %v6986, %v6985
        %v7025 = vpack.c.b16 %v6988, %v6987
        %v7026 = vpack.c.b16 %v6990, %v6989
        %v7027 = vpack.c.b16 %v6992, %v6991
        %v7028 = vpack.c.b16 %v6994, %v6993
        %v7029 = vpack.c.b16 %v6996, %v6995
        %v7030 = vpack.c.b16 %v6998, %v6997
        %7063 = vmatprep.subr.bf16.mxu0 0
        %7064 = vmatpush1.bf16.msra.mxu0 %v7006
        %7065 = vmatprep.subr.bf16.mxu0 0
        %7066 = vmatpush1.bf16.msra.mxu0 %v7005
        %7067 = vmatprep.subr.bf16.mxu0 0
        %7068 = vmatpush1.bf16.msra.mxu0 %v7004
        %7069 = vmatprep.subr.bf16.mxu0 0
        %7070 = vmatpush1.bf16.msra.mxu0 %v7003
        %7071 = vmatprep.subr.bf16.mxu0 0
        %7072 = vmatpush1.bf16.msra.mxu0 %v7002
        %7073 = vmatprep.subr.bf16.mxu0 0
        %7074 = vmatpush1.bf16.msra.mxu0 %v7001
        %7075 = vmatprep.subr.bf16.mxu0 0
        %7076 = vmatpush1.bf16.msra.mxu0 %v7000
        %7077 = vmatprep.subr.bf16.mxu0 0
        %7078 = vmatpush1.bf16.msra.mxu0 %v6999
        %7079 = vmatprep.subr.bf16.mxu0 0
        %7080 = vmatpush2.bf16.msra.mxu0 %v7014
        %7081 = vmatprep.subr.bf16.mxu0 0
        %7082 = vmatpush2.bf16.msra.mxu0 %v7013
        %7083 = vmatprep.subr.bf16.mxu0 0
        %7084 = vmatpush2.bf16.msra.mxu0 %v7012
        %7085 = vmatprep.subr.bf16.mxu0 0
        %7086 = vmatpush2.bf16.msra.mxu0 %v7011
        %7087 = vmatprep.subr.bf16.mxu0 0
        %7088 = vmatpush2.bf16.msra.mxu0 %v7010
        %7089 = vmatprep.subr.bf16.mxu0 0
        %7090 = vmatpush2.bf16.msra.mxu0 %v7009
        %7091 = vmatprep.subr.bf16.mxu0 0
        %7092 = vmatpush2.bf16.msra.mxu0 %v7008
        %7093 = vmatprep.subr.bf16.mxu0 0
        %7094 = vmatpush2.bf16.msra.mxu0 %v7007
        %7095 = vmatprep.mubr.bf16.mxu0 %v6120
        %7096 = vmatmul.mubr.bf16.gmra.mxu0 %v6119
        %v7097 = vpop.f32.mrf.mxu0
        %v7098 = vadd.f32 0.0, %v7097
        %v7099 = vpop.f32.mrf.mxu0
        %v7100 = vpop.f32.mrf.mxu0
        %v7101 = vadd.f32 0.0, %v7100
        %v7102 = vpop.f32.mrf.mxu0
        %7103 = vdwg.mxu0
        %7104 = vmatprep.subr.bf16.mxu0 0
        %7105 = vmatpush1.bf16.msra.mxu0 %v7022
        %7106 = vmatprep.subr.bf16.mxu0 0
        %7107 = vmatpush1.bf16.msra.mxu0 %v7021
        %7108 = vmatprep.subr.bf16.mxu0 0
        %7109 = vmatpush1.bf16.msra.mxu0 %v7020
        %7110 = vmatprep.subr.bf16.mxu0 0
        %7111 = vmatpush1.bf16.msra.mxu0 %v7019
        %7112 = vmatprep.subr.bf16.mxu0 0
        %7113 = vmatpush1.bf16.msra.mxu0 %v7018
        %7114 = vmatprep.subr.bf16.mxu0 0
        %7115 = vmatpush1.bf16.msra.mxu0 %v7017
        %7116 = vmatprep.subr.bf16.mxu0 0
        %7117 = vmatpush1.bf16.msra.mxu0 %v7016
        %7118 = vmatprep.subr.bf16.mxu0 0
        %7119 = vmatpush1.bf16.msra.mxu0 %v7015
        %7120 = vmatprep.subr.bf16.mxu0 0
        %7121 = vmatpush2.bf16.msra.mxu0 %v7030
        %7122 = vmatprep.subr.bf16.mxu0 0
        %7123 = vmatpush2.bf16.msra.mxu0 %v7029
        %7124 = vmatprep.subr.bf16.mxu0 0
        %7125 = vmatpush2.bf16.msra.mxu0 %v7028
        %7126 = vmatprep.subr.bf16.mxu0 0
        %7127 = vmatpush2.bf16.msra.mxu0 %v7027
        %7128 = vmatprep.subr.bf16.mxu0 0
        %7129 = vmatpush2.bf16.msra.mxu0 %v7026
        %7130 = vmatprep.subr.bf16.mxu0 0
        %7131 = vmatpush2.bf16.msra.mxu0 %v7025
        %7132 = vmatprep.subr.bf16.mxu0 0
        %7133 = vmatpush2.bf16.msra.mxu0 %v7024
        %7134 = vmatprep.subr.bf16.mxu0 0
        %7135 = vmatpush2.bf16.msra.mxu0 %v7023
        %7136 = vmatprep.mubr.bf16.mxu0 %v6122
        %7137 = vmatmul.mubr.bf16.gmra.mxu0 %v6121
        %v7138 = vpop.f32.mrf.mxu0
        %v7139 = vadd.f32 %v7098, %v7138
        %v7140 = vpop.f32.mrf.mxu0
        %v7141 = vpop.f32.mrf.mxu0
        %v7142 = vadd.f32 %v7101, %v7141
        %v7143 = vpop.f32.mrf.mxu0
        %7144 = vdwg.mxu0
        %v7145 = vrot.slane %v7139, 1
        %v7146 = vrot.slane %v7142, 1
        %v7147 = vsel %vm6044, %v7145, %v7146
        %v7148 = vsel %vm6044, %v7146, %v7145
        %v7149 = vsel %vm6055, 0.0, %v7147
        %v7150 = vsel %vm6056, 0.0, %v7148
        %v7151 = vadd.f32 %v6800, %v7149
        %v7152 = vadd.f32 %v6803, %v7150
        %v7153 = vld [vmem:[#allocation7] sm:$0x1]
        %v7155 = vlaneseq
        %v7156 = vshrl.u32 %v7155, 7
        %v7157 = vsub.s32 0, %v7156
        %v7158 = vrot.slane %v7153, %v7157
        %v7160 = vadd.f32 %v7151, %v7158
        %v7161 = vadd.f32 %v7152, %v7158
        %v7162 = vmul.f32 %v7160, %v7160
        %v7163 = vmul.f32 %v7161, %v7161
        %vm7164 = vcmask 261120
        %v7165 = vsel %vm7164, %v7162, 0.0
        %7166 = vadd.xlane.f32.xlu0 %v7165
        %v7167 = vpop.xlane.xlu0 %7166
        %v7168 = vsel %vm7164, %v7163, 0.0
        %7169 = vadd.xlane.f32.xlu0 %v7168
        %v7170 = vpop.xlane.xlu0 %7169
        %v7171 = vmax.f32 %v7167, 1e-24
        %v7172 = vmax.f32 %v7170, 1e-24
        %v7173 = vrsqrt.pop %v7171
        %v7174 = vrsqrt.pop %v7172
        %v7175 = vmul.f32 %v7160, %v7173
        %v7176 = vmul.f32 %v7161, %v7174
        %7177 = vxpose.xlu0.b32.start [1/16] %v7175, 128
        %7178 = vxpose.xlu0.b32.cont [2/16] %v7176, 128
        %7179 = vxpose.xlu0.b32.cont [3/16] 0.0, 128
        %7180 = vxpose.xlu0.b32.cont [4/16] 0.0, 128
        %7181 = vxpose.xlu0.b32.cont [5/16] 0.0, 128
        %7182 = vxpose.xlu0.b32.cont [6/16] 0.0, 128
        %7183 = vxpose.xlu0.b32.cont [7/16] 0.0, 128
        %7184 = vxpose.xlu0.b32.cont [8/16] 0.0, 128
        %7185 = vxpose.xlu0.b32.cont [9/16] 0.0, 128
        %7186 = vxpose.xlu0.b32.cont [10/16] 0.0, 128
        %7187 = vxpose.xlu0.b32.cont [11/16] 0.0, 128
        %7188 = vxpose.xlu0.b32.cont [12/16] 0.0, 128
        %7189 = vxpose.xlu0.b32.cont [13/16] 0.0, 128
        %7190 = vxpose.xlu0.b32.cont [14/16] 0.0, 128
        %7191 = vxpose.xlu0.b32.cont [15/16] 0.0, 128
        %7192 = vxpose.xlu0.b32.end [16/16] 0.0, 128
        %v7193 = vpop.trf.xlu0
        %v7194 = vpop.trf.xlu0
        %v7195 = vpop.trf.xlu0
        %v7196 = vpop.trf.xlu0
        %v7197 = vpop.trf.xlu0
        %v7198 = vpop.trf.xlu0
        %v7199 = vpop.trf.xlu0
        %v7200 = vpop.trf.xlu0
        %v7201 = vpop.trf.xlu0
        %v7202 = vpop.trf.xlu0
        %v7203 = vpop.trf.xlu0
        %v7204 = vpop.trf.xlu0
        %v7205 = vpop.trf.xlu0
        %v7206 = vpop.trf.xlu0
        %v7207 = vpop.trf.xlu0
        %v7208 = vpop.trf.xlu0
        %vm7209 = vcmask 130048
        %7210 = vst.msk [vmem:[%s284] sm:$0xff] %vm7209, %v7193
        %7211 = vst.msk [vmem:[%s284 + $0x8] sm:$0xff] %vm7209, %v7194
        %7212 = vst.msk [vmem:[%s284 + $0x10] sm:$0xff] %vm7209, %v7195
        %7213 = vst.msk [vmem:[%s284 + $0x18] sm:$0xff] %vm7209, %v7196
        %p7214 = scmp.lt.s32.totalorder %s21, 1
        %s7215 = scalar_select %p7214, %s21, 1
        %s7216 = smul.addr %s7215, 4
        %s7217 = smul.addr %s7216, 8
        %s7218 = scalar_lea.vmem %s5, %s7217
        // Predicated region
        $region57: #{tpu_custom_call.1} parent=39 // pred_check
          %p7219 = pneg %p149
        $region58: #{tpu_custom_call.1} parent=39 // pred_check_branch
          %7221 = sbr.rel (%p7219) target = $region60
        $region59: #{tpu_custom_call.1} parent=39 // pred_region
          _
        $region60: #{tpu_custom_call.1} parent=39 // pred_fallthru
          _
      $region40: #{tpu_custom_call.1} parent=5 // pred_fallthru
        _
      %p7222 = scmp.le.s32.totalorder 2, %s16
      // Predicated region
      $region61: #{tpu_custom_call.1} parent=5 // pred_check
        %p7223 = pneg %p7222
      $region62: #{tpu_custom_call.1} parent=5 // pred_check_branch
        %7225 = sbr.rel (%p7223) target = $region64
      $region63: #{tpu_custom_call.1} parent=5 // pred_region
        %s7226 = ssub.s32 %s16, 2
        // Predicated region
        $region65: #{tpu_custom_call.1} parent=63 // pred_check
          %p7227 = pneg %p155
        $region66: #{tpu_custom_call.1} parent=63 // pred_check_branch
          %7229 = sbr.rel (%p7227) target = $region68
        $region67: #{tpu_custom_call.1} parent=63 // pred_region
          %p7230 = scmp.lt.s32.totalorder %s22, 1
          %s7231 = scalar_select %p7230, %s22, 1
          %s7232 = smul.addr %s7231, 4
          %s7233 = smul.addr %s7232, 8
          %s7234 = scalar_lea.vmem %s5, %s7233
        $region68: #{tpu_custom_call.1} parent=63 // pred_fallthru
          _
      $region64: #{tpu_custom_call.1} parent=5 // pred_fallthru
        _
    $region6: #{tpu_custom_call.1} parent=1 // loop_footer
      %s20 = sadd.s32 1, %s16
    $region7: #{tpu_custom_call.1} parent=1 // loop_footer_branch
      %15 = sbr.rel target = $region3
    $region8: #{tpu_custom_call.1} parent=1 // loop_exit
      _
    %7235 = vsyncpa [#allocation3], 1
    %s7236 = scalar_lea.sflag [#allocation3], 1
    %7237 = vsyncpa %s7236, 1
    %7238 = vsyncpa [#allocation5], 1
    %7239 = vsyncpa [#allocation8], 1

</llo_original>
